<compile_context>
chip_gen: v5e
topology: v5e:2x2
jax: 0.10.0
libtpu: 0.0.40
codegen_flags: <defaults>
</compile_context>

<pallas_src>
import jax
import jax.numpy as jnp
import numpy as np
from jax import lax
from jax.experimental import pallas as pl
from jax.experimental.pallas import tpu as pltpu

LOOKBACK_SIZE = 8     # fixed by nn.Linear(128, 40): 64 * (L // 4) == 128
DIMENSION = 4
BATCH = 1024
BLOCK_N = 512         # samples per grid step

C1, C2, HID = 32, 64, 40
L1 = LOOKBACK_SIZE    # length after conv1
L2 = L1 // 2          # length after pool1 / conv2
L4 = L2 // 2          # length after pool2


def _pool_pairs(h):
    """MaxPool1d(2) in lane space: max of adjacent lanes, valid at even offsets.

    h[:, 2k] , h[:, 2k+1] -> pooled value at lane 2k.  Odd lanes hold finite
    garbage that the next weight matrix ignores via zero rows.  Pure lane
    shift (slice+concat) + VPU max; no reshape-then-reduce, no XLU reduction.
    """
    shifted = jnp.concatenate([h[:, 1:], h[:, :1]], axis=1)
    return jnp.maximum(h, shifted)


def deepant_kernel(x_ref, w1_ref, b1_ref, w2_ref, b2_ref, w3_ref, b3_ref,
                   w4_ref, b4_ref, out_ref):
    # conv1(k=3, pad=1) + ReLU as one (BN, D*L1) x (D*L1, C1*L1) matmul.
    h1 = jnp.dot(x_ref[...], w1_ref[...], preferred_element_type=jnp.float32)
    h1 = jnp.maximum(h1 + b1_ref[...], 0.0)
    # maxpool1d(2): pooled values land on even lane offsets of m1.
    m1 = _pool_pairs(h1)
    # conv2(k=3, pad=1) + ReLU; W2 has zero rows at odd (unpooled) lanes, and
    # the length padding is encoded as zeros in W2 (no concat / scratch).
    h2 = jnp.dot(m1, w2_ref[...], preferred_element_type=jnp.float32)
    h2 = jnp.maximum(h2 + b2_ref[...], 0.0)
    m2 = _pool_pairs(h2)
    # flatten + Linear(128 -> 40) + ReLU; W3 has zero rows at odd lanes and its
    # row order matches PyTorch's NCL flatten (c*L4 + l).
    h3 = jnp.dot(m2, w3_ref[...], preferred_element_type=jnp.float32)
    h3 = jnp.maximum(h3 + b3_ref[...], 0.0)
    # TODO(synk): Dropout(p=0.25) is eval-mode identity (no train-mode mask/scale).
    # Linear(40 -> D), computed transposed so the store is lane-dense (D, BN).
    out = lax.dot_general(w4_ref[...], h3, (((1,), (1,)), ((), ())),
                          preferred_element_type=jnp.float32)
    out_ref[...] = (out + b4_ref[...]).astype(out_ref.dtype)


def build_kernel_params(params, dimension):
    """Fold conv taps, pooling lane-selection and flatten order into dense weights.

    Hoist this out of the per-call path: it only depends on the model weights.
    """
    w1, b1, w2, b2, Wd1, bd1, Wd2, bd2 = params
    D = dimension

    # conv1: input lane ci*L1 + p  ->  output lane co*L1 + l ; out[l] uses in[l+k-1]
    W1 = jnp.zeros((D * L1, C1 * L1), jnp.float32)
    for k in range(3):
        for l in range(L1):
            p = l + k - 1
            if 0 <= p < L1:
                rows = np.arange(D) * L1 + p
                cols = np.arange(C1) * L1 + l
                W1 = W1.at[rows[:, None], cols[None, :]].set(w1[:, :, k].T)
    b1_big = jnp.repeat(b1, L1)[None, :]                       # (1, C1*L1)

    # conv2: reads pooled values at even lanes ci*L1 + 2*t ; odd rows stay zero.
    W2 = jnp.zeros((C1 * L1, C2 * L2), jnp.float32)
    for k in range(3):
        for l in range(L2):
            t = l + k - 1
            if 0 <= t < L2:
                rows = np.arange(C1) * L1 + 2 * t
                cols = np.arange(C2) * L2 + l
                W2 = W2.at[rows[:, None], cols[None, :]].set(w2[:, :, k].T)
    b2_big = jnp.repeat(b2, L2)[None, :]                       # (1, C2*L2)

    # dense1: reads pooled values at lanes c*L2 + 2*u ; PyTorch flatten col = c*L4 + u.
    W3 = jnp.zeros((C2 * L2, HID), jnp.float32)
    for u in range(L4):
        rows = np.arange(C2) * L2 + 2 * u
        cols = np.arange(C2) * L4 + u
        W3 = W3.at[rows, :].set(Wd1[:, cols].T)
    b3 = bd1[None, :]                                          # (1, HID)

    W4 = Wd2                                                   # (D, HID), used as W4 @ h3^T
    b4 = bd2[:, None]                                          # (D, 1)
    return W1, b1_big, W2, b2_big, W3, b3, W4, b4


def deepant_forward(x_ncl, kernel_params, *, block_n=BLOCK_N):
    """x_ncl: (N, DIMENSION, LOOKBACK_SIZE) in PyTorch Conv1d (NCL) layout."""
    W1, b1, W2, b2, W3, b3, W4, b4 = kernel_params
    N, D, L = x_ncl.shape
    assert L == LOOKBACK_SIZE and block_n % 128 == 0

    x2d = x_ncl.reshape(N, D * L)                # lane index = ci*L + p (pure view)
    n_pad = ((N + block_n - 1) // block_n) * block_n
    if n_pad != N:
        x2d = jnp.pad(x2d, ((0, n_pad - N), (0, 0)))
    n_tiles = n_pad // block_n

    def rep(shape):                              # whole-array, fetched once
        return pl.BlockSpec(shape, lambda i, _s=len(shape): (0,) * _s)

    flops = 2 * n_pad * (D * L * C1 * L1 + C1 * L1 * C2 * L2 + C2 * L2 * HID + HID * D)
    bytes_accessed = 4 * (x2d.size + n_pad * D +
                          sum(int(np.prod(w.shape)) for w in kernel_params))

    out_t = pl.pallas_call(
        deepant_kernel,
        out_shape=jax.ShapeDtypeStruct((D, n_pad), jnp.float32),
        grid=(n_tiles,),
        in_specs=[
            pl.BlockSpec((block_n, D * L), lambda i: (i, 0)),
            rep(W1.shape), rep(b1.shape), rep(W2.shape), rep(b2.shape),
            rep(W3.shape), rep(b3.shape), rep(W4.shape), rep(b4.shape),
        ],
        out_specs=pl.BlockSpec((D, block_n), lambda i: (0, i)),
        compiler_params=pltpu.CompilerParams(dimension_semantics=("parallel",)),
        cost_estimate=pl.CostEstimate(flops=flops, transcendentals=0,
                                      bytes_accessed=bytes_accessed),
    )(x2d, W1, b1, W2, b2, W3, b3, W4, b4)

    return out_t[:, :N].T                        # back to (N, D)


def ref_forward(x, params):
    """Pure-JAX reference with exact PyTorch (NCL) semantics, eval mode."""
    w1, b1, w2, b2, Wd1, bd1, Wd2, bd2 = params

    def conv1d(x, w, b):
        N, Cin, L = x.shape
        Cout, _, K = w.shape
        xp = jnp.pad(x, ((0, 0), (0, 0), (1, 1)))
        out = jnp.zeros((N, Cout, L), jnp.float32)
        for k in range(K):
            out = out + jnp.einsum('ncl,oc->nol', xp[:, :, k:k + L], w[:, :, k],
                                   precision='highest')
        return out + b[None, :, None]

    def maxpool(x):
        N, C, L = x.shape
        return jnp.max(x.reshape(N, C, L // 2, 2), axis=-1)

    h = jax.nn.relu(conv1d(x, w1, b1))
    h = maxpool(h)
    h = jax.nn.relu(conv1d(h, w2, b2))
    h = maxpool(h)
    h = h.reshape(x.shape[0], -1)                # flatten: index = c*L4 + l
    h = jax.nn.relu(jnp.dot(h, Wd1.T, precision='highest') + bd1)
    # dropout: identity in eval mode
    return jnp.dot(h, Wd2.T, precision='highest') + bd2


def make_params(key, dimension):
    ks = jax.random.split(key, 8)
    s = 0.1
    w1 = s * jax.random.normal(ks[0], (32, dimension, 3), jnp.float32)
    b1 = s * jax.random.normal(ks[1], (32,), jnp.float32)
    w2 = s * jax.random.normal(ks[2], (64, 32, 3), jnp.float32)
    b2 = s * jax.random.normal(ks[3], (64,), jnp.float32)
    Wd1 = s * jax.random.normal(ks[4], (40, 128), jnp.float32)
    bd1 = s * jax.random.normal(ks[5], (40,), jnp.float32)
    Wd2 = s * jax.random.normal(ks[6], (dimension, 40), jnp.float32)
    bd2 = s * jax.random.normal(ks[7], (dimension,), jnp.float32)
    return (w1, b1, w2, b2, Wd1, bd1, Wd2, bd2)


if __name__ == "__main__":
    key = jax.random.PRNGKey(0)
    kx, kp = jax.random.split(key)
    x = jax.random.normal(kx, (BATCH, DIMENSION, LOOKBACK_SIZE), jnp.float32)
    params = make_params(kp, DIMENSION)

    kernel_params = build_kernel_params(params, DIMENSION)   # hoisted weight reorg
    fwd = jax.jit(deepant_forward)
    out = jax.block_until_ready(fwd(x, kernel_params))

    ref = jax.block_until_ready(ref_forward(x, params))
    np.testing.assert_allclose(np.asarray(out), np.asarray(ref), rtol=2e-3, atol=2e-3)

    print("KERNEL_OK")
</pallas_src>

<mosaic_0001>
module attributes {stable_mosaic.version = 11 : i64} {
  func.func @deepant_kernel(%arg0: i32, %arg1: memref<512x32xf32, #tpu.memory_space<vmem>>, %arg2: memref<32x256xf32, #tpu.memory_space<vmem>>, %arg3: memref<1x256xf32, #tpu.memory_space<vmem>>, %arg4: memref<256x256xf32, #tpu.memory_space<vmem>>, %arg5: memref<1x256xf32, #tpu.memory_space<vmem>>, %arg6: memref<256x40xf32, #tpu.memory_space<vmem>>, %arg7: memref<1x40xf32, #tpu.memory_space<vmem>>, %arg8: memref<4x40xf32, #tpu.memory_space<vmem>>, %arg9: memref<4x1xf32, #tpu.memory_space<vmem>>, %arg10: memref<4x512xf32, #tpu.memory_space<vmem>>) attributes {dimension_semantics = [#tpu.dimension_semantics<parallel>], iteration_bounds = array<i64: 2>, scalar_prefetch = 0 : i64, scratch_operands = 0 : i64, tpu.core_type = #tpu.core_type<tc>, window_params = [{transform_indices = @transform_0, window_bounds = array<i64: 512, 32>}, {pipeline_mode = #tpu.pipeline_mode<synchronous>, transform_indices = @transform_1, window_bounds = array<i64: 32, 256>}, {pipeline_mode = #tpu.pipeline_mode<synchronous>, transform_indices = @transform_2, window_bounds = array<i64: 1, 256>}, {pipeline_mode = #tpu.pipeline_mode<synchronous>, transform_indices = @transform_3, window_bounds = array<i64: 256, 256>}, {pipeline_mode = #tpu.pipeline_mode<synchronous>, transform_indices = @transform_4, window_bounds = array<i64: 1, 256>}, {pipeline_mode = #tpu.pipeline_mode<synchronous>, transform_indices = @transform_5, window_bounds = array<i64: 256, 40>}, {pipeline_mode = #tpu.pipeline_mode<synchronous>, transform_indices = @transform_6, window_bounds = array<i64: 1, 40>}, {pipeline_mode = #tpu.pipeline_mode<synchronous>, transform_indices = @transform_7, window_bounds = array<i64: 4, 40>}, {pipeline_mode = #tpu.pipeline_mode<synchronous>, transform_indices = @transform_8, window_bounds = array<i64: 4, 1>}, {transform_indices = @transform_9, window_bounds = array<i64: 4, 512>}]} {
    %c0 = arith.constant 0 : index
    %c0_0 = arith.constant 0 : index
    %0 = vector.load %arg1[%c0, %c0_0] : memref<512x32xf32, #tpu.memory_space<vmem>>, vector<512x32xf32>
    %c0_1 = arith.constant 0 : index
    %c0_2 = arith.constant 0 : index
    %1 = vector.load %arg2[%c0_1, %c0_2] : memref<32x256xf32, #tpu.memory_space<vmem>>, vector<32x256xf32>
    %cst = arith.constant dense<0.000000e+00> : vector<512x256xf32>
    %2 = tpu.matmul %0, %1, %cst {dimension_numbers = #tpu.dot_dimension_numbers<[1], [0], [0], [1], [0, 0, 1, 1], [], []>} : vector<512x32xf32>, vector<32x256xf32>, vector<512x256xf32> -> vector<512x256xf32>
    %c0_3 = arith.constant 0 : index
    %c0_4 = arith.constant 0 : index
    %3 = vector.load %arg3[%c0_3, %c0_4] : memref<1x256xf32, #tpu.memory_space<vmem>>, vector<1x256xf32>
    %4 = vector.broadcast %3 : vector<1x256xf32> to vector<512x256xf32>
    %5 = arith.addf %2, %4 : vector<512x256xf32>
    %cst_5 = arith.constant 0.000000e+00 : f32
    %6 = vector.broadcast %cst_5 : f32 to vector<512x256xf32>
    %7 = arith.maximumf %5, %6 : vector<512x256xf32>
    %8 = vector.extract_strided_slice %7 {offsets = [0, 1], sizes = [512, 255], strides = [1, 1]} : vector<512x256xf32> to vector<512x255xf32>
    %9 = vector.extract_strided_slice %7 {offsets = [0, 0], sizes = [512, 1], strides = [1, 1]} : vector<512x256xf32> to vector<512x1xf32>
    %10 = tpu.concatenate %8, %9 in 1 : vector<512x255xf32>, vector<512x1xf32> -> vector<512x256xf32>
    %11 = arith.maximumf %7, %10 : vector<512x256xf32>
    %c0_6 = arith.constant 0 : index
    %c0_7 = arith.constant 0 : index
    %12 = vector.load %arg4[%c0_6, %c0_7] : memref<256x256xf32, #tpu.memory_space<vmem>>, vector<256x256xf32>
    %cst_8 = arith.constant dense<0.000000e+00> : vector<512x256xf32>
    %13 = tpu.matmul %11, %12, %cst_8 {dimension_numbers = #tpu.dot_dimension_numbers<[1], [0], [0], [1], [0, 0, 1, 1], [], []>} : vector<512x256xf32>, vector<256x256xf32>, vector<512x256xf32> -> vector<512x256xf32>
    %c0_9 = arith.constant 0 : index
    %c0_10 = arith.constant 0 : index
    %14 = vector.load %arg5[%c0_9, %c0_10] : memref<1x256xf32, #tpu.memory_space<vmem>>, vector<1x256xf32>
    %15 = vector.broadcast %14 : vector<1x256xf32> to vector<512x256xf32>
    %16 = arith.addf %13, %15 : vector<512x256xf32>
    %cst_11 = arith.constant 0.000000e+00 : f32
    %17 = vector.broadcast %cst_11 : f32 to vector<512x256xf32>
    %18 = arith.maximumf %16, %17 : vector<512x256xf32>
    %19 = vector.extract_strided_slice %18 {offsets = [0, 1], sizes = [512, 255], strides = [1, 1]} : vector<512x256xf32> to vector<512x255xf32>
    %20 = vector.extract_strided_slice %18 {offsets = [0, 0], sizes = [512, 1], strides = [1, 1]} : vector<512x256xf32> to vector<512x1xf32>
    %21 = tpu.concatenate %19, %20 in 1 : vector<512x255xf32>, vector<512x1xf32> -> vector<512x256xf32>
    %22 = arith.maximumf %18, %21 : vector<512x256xf32>
    %c0_12 = arith.constant 0 : index
    %c0_13 = arith.constant 0 : index
    %23 = vector.load %arg6[%c0_12, %c0_13] : memref<256x40xf32, #tpu.memory_space<vmem>>, vector<256x40xf32>
    %cst_14 = arith.constant dense<0.000000e+00> : vector<512x40xf32>
    %24 = tpu.matmul %22, %23, %cst_14 {dimension_numbers = #tpu.dot_dimension_numbers<[1], [0], [0], [1], [0, 0, 1, 1], [], []>} : vector<512x256xf32>, vector<256x40xf32>, vector<512x40xf32> -> vector<512x40xf32>
    %c0_15 = arith.constant 0 : index
    %c0_16 = arith.constant 0 : index
    %25 = vector.load %arg7[%c0_15, %c0_16] : memref<1x40xf32, #tpu.memory_space<vmem>>, vector<1x40xf32>
    %26 = vector.broadcast %25 : vector<1x40xf32> to vector<512x40xf32>
    %27 = arith.addf %24, %26 : vector<512x40xf32>
    %cst_17 = arith.constant 0.000000e+00 : f32
    %28 = vector.broadcast %cst_17 : f32 to vector<512x40xf32>
    %29 = arith.maximumf %27, %28 : vector<512x40xf32>
    %c0_18 = arith.constant 0 : index
    %c0_19 = arith.constant 0 : index
    %30 = vector.load %arg8[%c0_18, %c0_19] : memref<4x40xf32, #tpu.memory_space<vmem>>, vector<4x40xf32>
    %cst_20 = arith.constant dense<0.000000e+00> : vector<4x512xf32>
    %31 = tpu.matmul %30, %29, %cst_20 {dimension_numbers = #tpu.dot_dimension_numbers<[1], [1], [0], [0], [0, 0, 1, 0], [], []>} : vector<4x40xf32>, vector<512x40xf32>, vector<4x512xf32> -> vector<4x512xf32>
    %c0_21 = arith.constant 0 : index
    %c0_22 = arith.constant 0 : index
    %32 = vector.load %arg9[%c0_21, %c0_22] : memref<4x1xf32, #tpu.memory_space<vmem>>, vector<4x1xf32>
    %33 = vector.broadcast %32 : vector<4x1xf32> to vector<4x512xf32>
    %34 = arith.addf %31, %33 : vector<4x512xf32>
    %c0_23 = arith.constant 0 : index
    %c0_24 = arith.constant 0 : index
    %35 = vector.load %arg10[%c0_23, %c0_24] : memref<4x512xf32, #tpu.memory_space<vmem>>, vector<4x512xf32>
    tpu.vector_store %arg10[%c0_23, %c0_24], %34 {strides = array<i32>} : memref<4x512xf32, #tpu.memory_space<vmem>>, vector<4x512xf32>,
    return
  }
  func.func @transform_0(%arg0: i32) -> (i32, i32) {
    %c0_i32 = arith.constant 0 : i32
    %c0_i32_0 = arith.constant 0 : i32
    return %arg0, %c0_i32 : i32, i32
  }
  func.func @transform_1(%arg0: i32) -> (i32, i32) {
    %c0_i32 = arith.constant 0 : i32
    %c0_i32_0 = arith.constant 0 : i32
    %c0_i32_1 = arith.constant 0 : i32
    return %c0_i32, %c0_i32_0 : i32, i32
  }
  func.func @transform_2(%arg0: i32) -> (i32, i32) {
    %c0_i32 = arith.constant 0 : i32
    %c0_i32_0 = arith.constant 0 : i32
    %c0_i32_1 = arith.constant 0 : i32
    return %c0_i32, %c0_i32_0 : i32, i32
  }
  func.func @transform_3(%arg0: i32) -> (i32, i32) {
    %c0_i32 = arith.constant 0 : i32
    %c0_i32_0 = arith.constant 0 : i32
    %c0_i32_1 = arith.constant 0 : i32
    return %c0_i32, %c0_i32_0 : i32, i32
  }
  func.func @transform_4(%arg0: i32) -> (i32, i32) {
    %c0_i32 = arith.constant 0 : i32
    %c0_i32_0 = arith.constant 0 : i32
    %c0_i32_1 = arith.constant 0 : i32
    return %c0_i32, %c0_i32_0 : i32, i32
  }
  func.func @transform_5(%arg0: i32) -> (i32, i32) {
    %c0_i32 = arith.constant 0 : i32
    %c0_i32_0 = arith.constant 0 : i32
    %c0_i32_1 = arith.constant 0 : i32
    return %c0_i32, %c0_i32_0 : i32, i32
  }
  func.func @transform_6(%arg0: i32) -> (i32, i32) {
    %c0_i32 = arith.constant 0 : i32
    %c0_i32_0 = arith.constant 0 : i32
    %c0_i32_1 = arith.constant 0 : i32
    return %c0_i32, %c0_i32_0 : i32, i32
  }
  func.func @transform_7(%arg0: i32) -> (i32, i32) {
    %c0_i32 = arith.constant 0 : i32
    %c0_i32_0 = arith.constant 0 : i32
    %c0_i32_1 = arith.constant 0 : i32
    return %c0_i32, %c0_i32_0 : i32, i32
  }
  func.func @transform_8(%arg0: i32) -> (i32, i32) {
    %c0_i32 = arith.constant 0 : i32
    %c0_i32_0 = arith.constant 0 : i32
    %c0_i32_1 = arith.constant 0 : i32
    return %c0_i32, %c0_i32_0 : i32, i32
  }
  func.func @transform_9(%arg0: i32) -> (i32, i32) {
    %c0_i32 = arith.constant 0 : i32
    %c0_i32_0 = arith.constant 0 : i32
    return %c0_i32, %arg0 : i32, i32
  }
}

</mosaic_0001>

<llo_original>
// kernel: deepant_forward.1
$region0: #{deepant_forward.1}
  #allocation0 [shape = 'u32[]', space=smem, size = 0x4, offset = 0x4, fixed_abs, tag = 'smem constant byte address 0x4 - core index']
  #allocation1 [shape = 'u32[72,128]{1,0:T(1,128)}', space=vmem, size = 0x9000, scoped, tag = 'internal scratch']
  %s0 = inlined_call_operand.vmem [shape: f32[1024,32], index: 0, kind: input, shape index: {}]
  %s1 = inlined_call_operand.vmem [shape: f32[32,256], index: 1, kind: input, shape index: {}]
  %s2 = inlined_call_operand.vmem [shape: f32[1,256], index: 2, kind: input, shape index: {}]
  %s3 = inlined_call_operand.vmem [shape: f32[256,256], index: 3, kind: input, shape index: {}]
  %s4 = inlined_call_operand.vmem [shape: f32[1,256], index: 4, kind: input, shape index: {}]
  %s5 = inlined_call_operand.vmem [shape: f32[256,40], index: 5, kind: input, shape index: {}]
  %s6 = inlined_call_operand.vmem [shape: f32[1,40], index: 6, kind: input, shape index: {}]
  %s7 = inlined_call_operand.vmem [shape: f32[4,40], index: 7, kind: input, shape index: {}]
  %s8 = inlined_call_operand.vmem [shape: f32[4,1], index: 8, kind: input, shape index: {}]
  %s9 = inlined_call_operand.hbm [shape: f32[4,1024], index: 9, kind: output, shape index: {}]
  %s10 = sld [smem:[#allocation0]]
  $region69: #{deepant_forward.1} parent=0
    _
  %s12 = ssub.s32 1, %s10
  %s13 = scalar_select 0, %s12, %s10
  $region1: #{deepant_forward.1} parent=0
    #allocation2 [shape = 'u8[16384]{0}', space=vmem, size = 0x4000, scoped, tag = 'output window, operand 0']
    #allocation3 [shape = 's32[2]{0}', space=sflag, size = 0x8, scoped, tag = 'scoped memory for deepant_forward.1']
    %14 = vsyncpa [#allocation3], 0
    %s15 = scalar_lea.sflag [#allocation3], 1
    %16 = vsyncpa %s15, 0
    loop: start=0, step=1, limit=4
    $region2: #{deepant_forward.1} parent=1 // loop_pre_header
      _
    $region3: #{deepant_forward.1} parent=1 // loop_header
      %s18 = sphi 0, %s22
      %p19 = scmp.ge.s32.totalorder %s18, 4
      %s28 = sphi 0, %s30
      %s31 = sphi 0, %s28
      %s32 = sphi 0, %s31
      %s48 = sphi 0, %s32
      %s52 = sphi 0, %s52
      %s54 = sphi 0, %s52
      %s55 = sphi 0, %s54
      %s69 = sphi 0, %s55
      %s73 = sphi 0, %s73
      %s75 = sphi 0, %s73
      %s76 = sphi 0, %s75
      %s90 = sphi 0, %s76
      %s94 = sphi 0, %s94
      %s96 = sphi 0, %s94
      %s97 = sphi 0, %s96
      %s111 = sphi 0, %s97
      %s115 = sphi 0, %s115
      %s117 = sphi 0, %s115
      %s118 = sphi 0, %s117
      %s132 = sphi 0, %s118
      %s136 = sphi 0, %s136
      %s138 = sphi 0, %s136
      %s139 = sphi 0, %s138
      %s153 = sphi 0, %s139
      %s157 = sphi 0, %s157
      %s159 = sphi 0, %s157
      %s160 = sphi 0, %s159
      %s174 = sphi 0, %s160
      %s178 = sphi 0, %s178
      %s180 = sphi 0, %s178
      %s181 = sphi 0, %s180
      %s195 = sphi 0, %s181
      %s199 = sphi 0, %s199
      %s201 = sphi 0, %s199
      %s202 = sphi 0, %s201
      %s216 = sphi 0, %s202
      %s222 = sphi 0, %s224
      %s225 = sphi 0, %s222
      %s226 = sphi 0, %s225
      %s242 = sphi 0, %s226
    $region4: #{deepant_forward.1} parent=1 // loop_header_branch
      %21 = sbr.rel (%p19) target = $region8
    $region5: #{deepant_forward.1} parent=1 // loop_body
      %s23 = ssub.s32 %s18, 1
      %s24 = ssub.s32 %s18, 2
      %s25 = sadd.s32 %s18, 1
      %s26 = ssub.s32 %s18, %s25
      %p27 = scmp.eq.s32.totalorder %s26, 0
      %s29 = sadd.s32 %s28, 1
      %s30 = scalar_select %p27, %s28, %s29
      %p33 = pneg %p27
      %p34 = scmp.eq.s32.totalorder %s18, 1
      %p35 = por %p33, %p34
      %p36 = scmp.ne.s32.totalorder %s28, %s31
      %p37 = scmp.eq.s32.totalorder %s18, 0
      %p38 = por %p36, %p37
      %p39 = scmp.ne.s32.totalorder %s28, %s31
      %p40 = scmp.eq.s32.totalorder %s23, 1
      %p41 = por %p39, %p40
      %p42 = scmp.ne.s32.totalorder %s31, %s32
      %p43 = scmp.eq.s32.totalorder %s23, 0
      %p44 = por %p42, %p43
      %p45 = scmp.ne.s32.totalorder %s31, %s32
      %p46 = scmp.eq.s32.totalorder %s24, 1
      %p47 = por %p45, %p46
      %p49 = scmp.ne.s32.totalorder %s32, %s48
      %p50 = scmp.eq.s32.totalorder %s24, 0
      %p51 = por %p49, %p50
      %s53 = sadd.s32 %s52, 1
      %p56 = scmp.eq.s32.totalorder %s18, 1
      %p57 = scmp.ne.s32.totalorder %s52, %s54
      %p58 = scmp.eq.s32.totalorder %s18, 0
      %p59 = por %p57, %p58
      %p60 = scmp.ne.s32.totalorder %s52, %s54
      %p61 = scmp.eq.s32.totalorder %s23, 1
      %p62 = por %p60, %p61
      %p63 = scmp.ne.s32.totalorder %s54, %s55
      %p64 = scmp.eq.s32.totalorder %s23, 0
      %p65 = por %p63, %p64
      %p66 = scmp.ne.s32.totalorder %s54, %s55
      %p67 = scmp.eq.s32.totalorder %s24, 1
      %p68 = por %p66, %p67
      %p70 = scmp.ne.s32.totalorder %s55, %s69
      %p71 = scmp.eq.s32.totalorder %s24, 0
      %p72 = por %p70, %p71
      %s74 = sadd.s32 %s73, 1
      %p77 = scmp.eq.s32.totalorder %s18, 1
      %p78 = scmp.ne.s32.totalorder %s73, %s75
      %p79 = scmp.eq.s32.totalorder %s18, 0
      %p80 = por %p78, %p79
      %p81 = scmp.ne.s32.totalorder %s73, %s75
      %p82 = scmp.eq.s32.totalorder %s23, 1
      %p83 = por %p81, %p82
      %p84 = scmp.ne.s32.totalorder %s75, %s76
      %p85 = scmp.eq.s32.totalorder %s23, 0
      %p86 = por %p84, %p85
      %p87 = scmp.ne.s32.totalorder %s75, %s76
      %p88 = scmp.eq.s32.totalorder %s24, 1
      %p89 = por %p87, %p88
      %p91 = scmp.ne.s32.totalorder %s76, %s90
      %p92 = scmp.eq.s32.totalorder %s24, 0
      %p93 = por %p91, %p92
      %s95 = sadd.s32 %s94, 1
      %p98 = scmp.eq.s32.totalorder %s18, 1
      %p99 = scmp.ne.s32.totalorder %s94, %s96
      %p100 = scmp.eq.s32.totalorder %s18, 0
      %p101 = por %p99, %p100
      %p102 = scmp.ne.s32.totalorder %s94, %s96
      %p103 = scmp.eq.s32.totalorder %s23, 1
      %p104 = por %p102, %p103
      %p105 = scmp.ne.s32.totalorder %s96, %s97
      %p106 = scmp.eq.s32.totalorder %s23, 0
      %p107 = por %p105, %p106
      %p108 = scmp.ne.s32.totalorder %s96, %s97
      %p109 = scmp.eq.s32.totalorder %s24, 1
      %p110 = por %p108, %p109
      %p112 = scmp.ne.s32.totalorder %s97, %s111
      %p113 = scmp.eq.s32.totalorder %s24, 0
      %p114 = por %p112, %p113
      %s116 = sadd.s32 %s115, 1
      %p119 = scmp.eq.s32.totalorder %s18, 1
      %p120 = scmp.ne.s32.totalorder %s115, %s117
      %p121 = scmp.eq.s32.totalorder %s18, 0
      %p122 = por %p120, %p121
      %p123 = scmp.ne.s32.totalorder %s115, %s117
      %p124 = scmp.eq.s32.totalorder %s23, 1
      %p125 = por %p123, %p124
      %p126 = scmp.ne.s32.totalorder %s117, %s118
      %p127 = scmp.eq.s32.totalorder %s23, 0
      %p128 = por %p126, %p127
      %p129 = scmp.ne.s32.totalorder %s117, %s118
      %p130 = scmp.eq.s32.totalorder %s24, 1
      %p131 = por %p129, %p130
      %p133 = scmp.ne.s32.totalorder %s118, %s132
      %p134 = scmp.eq.s32.totalorder %s24, 0
      %p135 = por %p133, %p134
      %s137 = sadd.s32 %s136, 1
      %p140 = scmp.eq.s32.totalorder %s18, 1
      %p141 = scmp.ne.s32.totalorder %s136, %s138
      %p142 = scmp.eq.s32.totalorder %s18, 0
      %p143 = por %p141, %p142
      %p144 = scmp.ne.s32.totalorder %s136, %s138
      %p145 = scmp.eq.s32.totalorder %s23, 1
      %p146 = por %p144, %p145
      %p147 = scmp.ne.s32.totalorder %s138, %s139
      %p148 = scmp.eq.s32.totalorder %s23, 0
      %p149 = por %p147, %p148
      %p150 = scmp.ne.s32.totalorder %s138, %s139
      %p151 = scmp.eq.s32.totalorder %s24, 1
      %p152 = por %p150, %p151
      %p154 = scmp.ne.s32.totalorder %s139, %s153
      %p155 = scmp.eq.s32.totalorder %s24, 0
      %p156 = por %p154, %p155
      %s158 = sadd.s32 %s157, 1
      %p161 = scmp.eq.s32.totalorder %s18, 1
      %p162 = scmp.ne.s32.totalorder %s157, %s159
      %p163 = scmp.eq.s32.totalorder %s18, 0
      %p164 = por %p162, %p163
      %p165 = scmp.ne.s32.totalorder %s157, %s159
      %p166 = scmp.eq.s32.totalorder %s23, 1
      %p167 = por %p165, %p166
      %p168 = scmp.ne.s32.totalorder %s159, %s160
      %p169 = scmp.eq.s32.totalorder %s23, 0
      %p170 = por %p168, %p169
      %p171 = scmp.ne.s32.totalorder %s159, %s160
      %p172 = scmp.eq.s32.totalorder %s24, 1
      %p173 = por %p171, %p172
      %p175 = scmp.ne.s32.totalorder %s160, %s174
      %p176 = scmp.eq.s32.totalorder %s24, 0
      %p177 = por %p175, %p176
      %s179 = sadd.s32 %s178, 1
      %p182 = scmp.eq.s32.totalorder %s18, 1
      %p183 = scmp.ne.s32.totalorder %s178, %s180
      %p184 = scmp.eq.s32.totalorder %s18, 0
      %p185 = por %p183, %p184
      %p186 = scmp.ne.s32.totalorder %s178, %s180
      %p187 = scmp.eq.s32.totalorder %s23, 1
      %p188 = por %p186, %p187
      %p189 = scmp.ne.s32.totalorder %s180, %s181
      %p190 = scmp.eq.s32.totalorder %s23, 0
      %p191 = por %p189, %p190
      %p192 = scmp.ne.s32.totalorder %s180, %s181
      %p193 = scmp.eq.s32.totalorder %s24, 1
      %p194 = por %p192, %p193
      %p196 = scmp.ne.s32.totalorder %s181, %s195
      %p197 = scmp.eq.s32.totalorder %s24, 0
      %p198 = por %p196, %p197
      %s200 = sadd.s32 %s199, 1
      %p203 = scmp.eq.s32.totalorder %s18, 1
      %p204 = scmp.ne.s32.totalorder %s199, %s201
      %p205 = scmp.eq.s32.totalorder %s18, 0
      %p206 = por %p204, %p205
      %p207 = scmp.ne.s32.totalorder %s199, %s201
      %p208 = scmp.eq.s32.totalorder %s23, 1
      %p209 = por %p207, %p208
      %p210 = scmp.ne.s32.totalorder %s201, %s202
      %p211 = scmp.eq.s32.totalorder %s23, 0
      %p212 = por %p210, %p211
      %p213 = scmp.ne.s32.totalorder %s201, %s202
      %p214 = scmp.eq.s32.totalorder %s24, 1
      %p215 = por %p213, %p214
      %p217 = scmp.ne.s32.totalorder %s202, %s216
      %p218 = scmp.eq.s32.totalorder %s24, 0
      %p219 = por %p217, %p218
      %s220 = ssub.s32 %s18, %s25
      %p221 = scmp.eq.s32.totalorder %s220, 0
      %s223 = sadd.s32 %s222, 1
      %s224 = scalar_select %p221, %s222, %s223
      %p227 = pneg %p221
      %p228 = scmp.eq.s32.totalorder %s18, 1
      %p229 = por %p227, %p228
      %p230 = scmp.ne.s32.totalorder %s222, %s225
      %p231 = scmp.eq.s32.totalorder %s18, 0
      %p232 = por %p230, %p231
      %p233 = scmp.ne.s32.totalorder %s222, %s225
      %p234 = scmp.eq.s32.totalorder %s23, 1
      %p235 = por %p233, %p234
      %p236 = scmp.ne.s32.totalorder %s225, %s226
      %p237 = scmp.eq.s32.totalorder %s23, 0
      %p238 = por %p236, %p237
      %p239 = scmp.ne.s32.totalorder %s225, %s226
      %p240 = scmp.eq.s32.totalorder %s24, 1
      %p241 = por %p239, %p240
      %p243 = scmp.ne.s32.totalorder %s226, %s242
      %p244 = scmp.eq.s32.totalorder %s24, 0
      %p245 = por %p243, %p244
      %p246 = scmp.le.s32.totalorder 1, %s18
      %p247 = scmp.lt.s32.totalorder %s18, 3
      %p248 = pnand %p246, %p247
      %p249 = pneg %p248
      // Predicated region
      $region9: #{deepant_forward.1} parent=5 // pred_check
        _
      $region10: #{deepant_forward.1} parent=5 // pred_check_branch
        %251 = sbr.rel (%p248) target = $region12
      $region11: #{deepant_forward.1} parent=5 // pred_region
        %s252 = ssub.s32 %s18, 1
        // Predicated region
        $region13: #{deepant_forward.1} parent=11 // pred_check
          %p253 = pneg %p65
        $region14: #{deepant_forward.1} parent=11 // pred_check_branch
          %255 = sbr.rel (%p253) target = $region16
        $region15: #{deepant_forward.1} parent=11 // pred_region
          _
        $region16: #{deepant_forward.1} parent=11 // pred_fallthru
          _
        // Predicated region
        $region17: #{deepant_forward.1} parent=11 // pred_check
          %p256 = pneg %p86
        $region18: #{deepant_forward.1} parent=11 // pred_check_branch
          %258 = sbr.rel (%p256) target = $region20
        $region19: #{deepant_forward.1} parent=11 // pred_region
          _
        $region20: #{deepant_forward.1} parent=11 // pred_fallthru
          _
        // Predicated region
        $region21: #{deepant_forward.1} parent=11 // pred_check
          %p259 = pneg %p107
        $region22: #{deepant_forward.1} parent=11 // pred_check_branch
          %261 = sbr.rel (%p259) target = $region24
        $region23: #{deepant_forward.1} parent=11 // pred_region
          _
        $region24: #{deepant_forward.1} parent=11 // pred_fallthru
          _
        // Predicated region
        $region25: #{deepant_forward.1} parent=11 // pred_check
          %p262 = pneg %p128
        $region26: #{deepant_forward.1} parent=11 // pred_check_branch
          %264 = sbr.rel (%p262) target = $region28
        $region27: #{deepant_forward.1} parent=11 // pred_region
          _
        $region28: #{deepant_forward.1} parent=11 // pred_fallthru
          _
        // Predicated region
        $region29: #{deepant_forward.1} parent=11 // pred_check
          %p265 = pneg %p149
        $region30: #{deepant_forward.1} parent=11 // pred_check_branch
          %267 = sbr.rel (%p265) target = $region32
        $region31: #{deepant_forward.1} parent=11 // pred_region
          _
        $region32: #{deepant_forward.1} parent=11 // pred_fallthru
          _
        // Predicated region
        $region33: #{deepant_forward.1} parent=11 // pred_check
          %p268 = pneg %p170
        $region34: #{deepant_forward.1} parent=11 // pred_check_branch
          %270 = sbr.rel (%p268) target = $region36
        $region35: #{deepant_forward.1} parent=11 // pred_region
          _
        $region36: #{deepant_forward.1} parent=11 // pred_fallthru
          _
        // Predicated region
        $region37: #{deepant_forward.1} parent=11 // pred_check
          %p271 = pneg %p191
        $region38: #{deepant_forward.1} parent=11 // pred_check_branch
          %273 = sbr.rel (%p271) target = $region40
        $region39: #{deepant_forward.1} parent=11 // pred_region
          _
        $region40: #{deepant_forward.1} parent=11 // pred_fallthru
          _
        // Predicated region
        $region41: #{deepant_forward.1} parent=11 // pred_check
          %p274 = pneg %p212
        $region42: #{deepant_forward.1} parent=11 // pred_check_branch
          %276 = sbr.rel (%p274) target = $region44
        $region43: #{deepant_forward.1} parent=11 // pred_region
          _
        $region44: #{deepant_forward.1} parent=11 // pred_fallthru
          _
      $region12: #{deepant_forward.1} parent=5 // pred_fallthru
        _
      %p277 = scmp.lt.s32.totalorder %s18, 2
      // Predicated region
      $region45: #{deepant_forward.1} parent=5 // pred_check
        %p278 = pneg %p277
      $region46: #{deepant_forward.1} parent=5 // pred_check_branch
        %280 = sbr.rel (%p278) target = $region48
      $region47: #{deepant_forward.1} parent=5 // pred_region
        // Predicated region
        $region49: #{deepant_forward.1} parent=47 // pred_check
          %p281 = pneg %p38
        $region50: #{deepant_forward.1} parent=47 // pred_check_branch
          %283 = sbr.rel (%p281) target = $region52
        $region51: #{deepant_forward.1} parent=47 // pred_region
          %s284 = smul.u32 64, %s18
          %p285 = scmp.lt.s32.totalorder %s284, 127
          %s286 = scalar_select %p285, %s284, 127
          %s287 = smul.addr %s286, 8
          %s288 = scalar_lea.vmem %s0, %s287
          %s289 = smul.u32 64, %s18
        $region52: #{deepant_forward.1} parent=47 // pred_fallthru
          _
      $region48: #{deepant_forward.1} parent=5 // pred_fallthru
        _
      %p290 = scmp.le.s32.totalorder 1, %s18
      %p291 = scmp.lt.s32.totalorder %s18, 3
      %p292 = pnand %p290, %p291
      %p293 = pneg %p292
      // Predicated region
      $region53: #{deepant_forward.1} parent=5 // pred_check
        _
      $region54: #{deepant_forward.1} parent=5 // pred_check_branch
        %295 = sbr.rel (%p292) target = $region56
      $region55: #{deepant_forward.1} parent=5 // pred_region
        %s296 = ssub.s32 %s18, 1
        %s297 = smul.u32 64, %s23
        %p298 = scmp.lt.s32.totalorder %s297, 127
        %s299 = scalar_select %p298, %s297, 127
        %s300 = smul.addr %s299, 8
        %s301 = scalar_lea.vmem %s0, %s300
        %p302 = pneg %p44
        %p303 = pneg %p41
        %p304 = pneg %p65
        %p305 = pneg %p62
        %p306 = pneg %p86
        %p307 = pneg %p83
        %p308 = pneg %p107
        %p309 = pneg %p104
        %p310 = pneg %p128
        %p311 = pneg %p125
        %p312 = pneg %p149
        %p313 = pneg %p146
        %p314 = pneg %p170
        %p315 = pneg %p167
        %p316 = pneg %p191
        %p317 = pneg %p188
        %p318 = pneg %p212
        %p319 = pneg %p209
        %p320 = pneg %p238
        %p321 = pneg %p235
        %s322 = sand.u32 %s225, 1
        %s323 = scalar_lea.sflag [#allocation3], %s322
        %s324 = sand.u32 %s225, 1
        %s325 = smul.addr %s324, 16
        %s326 = scalar_lea.vmem [#allocation2], %s325
        %s327 = smul.u32 64, %s23
        %p328 = scmp.lt.s32.totalorder %s327, 127
        %s329 = scalar_select %p328, %s327, 127
        %s330 = smul.addr %s329, 8
        %s331 = scalar_lea.vmem %s0, %s330
        %s332 = smul.u32 64, %s23
        %s333 = smul.u32 4, %s23
        %v334 = vld [vmem:[%s331] sm:$0xff]
        %v335 = vld [vmem:[%s331 + $0x8] sm:$0xff]
        %v336 = vld [vmem:[%s331 + $0x10] sm:$0xff]
        %v337 = vld [vmem:[%s331 + $0x18] sm:$0xff]
        %v338 = vld [vmem:[%s331 + $0x20] sm:$0xff]
        %v339 = vld [vmem:[%s331 + $0x28] sm:$0xff]
        %v340 = vld [vmem:[%s331 + $0x30] sm:$0xff]
        %v341 = vld [vmem:[%s331 + $0x38] sm:$0xff]
        %v342 = vld [vmem:[%s331 + $0x40] sm:$0xff]
        %v343 = vld [vmem:[%s331 + $0x48] sm:$0xff]
        %v344 = vld [vmem:[%s331 + $0x50] sm:$0xff]
        %v345 = vld [vmem:[%s331 + $0x58] sm:$0xff]
        %v346 = vld [vmem:[%s331 + $0x60] sm:$0xff]
        %v347 = vld [vmem:[%s331 + $0x68] sm:$0xff]
        %v348 = vld [vmem:[%s331 + $0x70] sm:$0xff]
        %v349 = vld [vmem:[%s331 + $0x78] sm:$0xff]
        %v350 = vld [vmem:[%s331 + $0x80] sm:$0xff]
        %v351 = vld [vmem:[%s331 + $0x88] sm:$0xff]
        %v352 = vld [vmem:[%s331 + $0x90] sm:$0xff]
        %v353 = vld [vmem:[%s331 + $0x98] sm:$0xff]
        %v354 = vld [vmem:[%s331 + $0xa0] sm:$0xff]
        %v355 = vld [vmem:[%s331 + $0xa8] sm:$0xff]
        %v356 = vld [vmem:[%s331 + $0xb0] sm:$0xff]
        %v357 = vld [vmem:[%s331 + $0xb8] sm:$0xff]
        %v358 = vld [vmem:[%s331 + $0xc0] sm:$0xff]
        %v359 = vld [vmem:[%s331 + $0xc8] sm:$0xff]
        %v360 = vld [vmem:[%s331 + $0xd0] sm:$0xff]
        %v361 = vld [vmem:[%s331 + $0xd8] sm:$0xff]
        %v362 = vld [vmem:[%s331 + $0xe0] sm:$0xff]
        %v363 = vld [vmem:[%s331 + $0xe8] sm:$0xff]
        %v364 = vld [vmem:[%s331 + $0xf0] sm:$0xff]
        %v365 = vld [vmem:[%s331 + $0xf8] sm:$0xff]
        %v366 = vld [vmem:[%s331 + $0x100] sm:$0xff]
        %v367 = vld [vmem:[%s331 + $0x108] sm:$0xff]
        %v368 = vld [vmem:[%s331 + $0x110] sm:$0xff]
        %v369 = vld [vmem:[%s331 + $0x118] sm:$0xff]
        %v370 = vld [vmem:[%s331 + $0x120] sm:$0xff]
        %v371 = vld [vmem:[%s331 + $0x128] sm:$0xff]
        %v372 = vld [vmem:[%s331 + $0x130] sm:$0xff]
        %v373 = vld [vmem:[%s331 + $0x138] sm:$0xff]
        %v374 = vld [vmem:[%s331 + $0x140] sm:$0xff]
        %v375 = vld [vmem:[%s331 + $0x148] sm:$0xff]
        %v376 = vld [vmem:[%s331 + $0x150] sm:$0xff]
        %v377 = vld [vmem:[%s331 + $0x158] sm:$0xff]
        %v378 = vld [vmem:[%s331 + $0x160] sm:$0xff]
        %v379 = vld [vmem:[%s331 + $0x168] sm:$0xff]
        %v380 = vld [vmem:[%s331 + $0x170] sm:$0xff]
        %v381 = vld [vmem:[%s331 + $0x178] sm:$0xff]
        %v382 = vld [vmem:[%s331 + $0x180] sm:$0xff]
        %v383 = vld [vmem:[%s331 + $0x188] sm:$0xff]
        %v384 = vld [vmem:[%s331 + $0x190] sm:$0xff]
        %v385 = vld [vmem:[%s331 + $0x198] sm:$0xff]
        %v386 = vld [vmem:[%s331 + $0x1a0] sm:$0xff]
        %v387 = vld [vmem:[%s331 + $0x1a8] sm:$0xff]
        %v388 = vld [vmem:[%s331 + $0x1b0] sm:$0xff]
        %v389 = vld [vmem:[%s331 + $0x1b8] sm:$0xff]
        %v390 = vld [vmem:[%s331 + $0x1c0] sm:$0xff]
        %v391 = vld [vmem:[%s331 + $0x1c8] sm:$0xff]
        %v392 = vld [vmem:[%s331 + $0x1d0] sm:$0xff]
        %v393 = vld [vmem:[%s331 + $0x1d8] sm:$0xff]
        %v394 = vld [vmem:[%s331 + $0x1e0] sm:$0xff]
        %v395 = vld [vmem:[%s331 + $0x1e8] sm:$0xff]
        %v396 = vld [vmem:[%s331 + $0x1f0] sm:$0xff]
        %v397 = vld [vmem:[%s331 + $0x1f8] sm:$0xff]
        %v398 = vld [vmem:[%s1] sm:$0xff]
        %v399 = vld [vmem:[%s1 + $0x8] sm:$0xff]
        %v400 = vld [vmem:[%s1 + $0x10] sm:$0xff]
        %v401 = vld [vmem:[%s1 + $0x18] sm:$0xff]
        %v402 = vld [vmem:[%s1 + $0x20] sm:$0xff]
        %v403 = vld [vmem:[%s1 + $0x28] sm:$0xff]
        %v404 = vld [vmem:[%s1 + $0x30] sm:$0xff]
        %v405 = vld [vmem:[%s1 + $0x38] sm:$0xff]
        %v406 = vld [vmem:[%s2] sm:$0x3]
        %v408 = vperm.slane %v406, 0
        %v409 = vperm.slane %v406, 1
        %vm412 = vcmask 261120
        %v414 = vsel %vm412, %v334, 0
        %v417 = vsel %vm412, %v335, 0
        %v420 = vsel %vm412, %v336, 0
        %v423 = vsel %vm412, %v337, 0
        %v426 = vsel %vm412, %v338, 0
        %v429 = vsel %vm412, %v339, 0
        %v432 = vsel %vm412, %v340, 0
        %v435 = vsel %vm412, %v341, 0
        %v438 = vsel %vm412, %v342, 0
        %v441 = vsel %vm412, %v343, 0
        %v444 = vsel %vm412, %v344, 0
        %v447 = vsel %vm412, %v345, 0
        %v450 = vsel %vm412, %v346, 0
        %v453 = vsel %vm412, %v347, 0
        %v456 = vsel %vm412, %v348, 0
        %v459 = vsel %vm412, %v349, 0
        %v462 = vsel %vm412, %v350, 0
        %v465 = vsel %vm412, %v351, 0
        %v468 = vsel %vm412, %v352, 0
        %v471 = vsel %vm412, %v353, 0
        %v474 = vsel %vm412, %v354, 0
        %v477 = vsel %vm412, %v355, 0
        %v480 = vsel %vm412, %v356, 0
        %v483 = vsel %vm412, %v357, 0
        %v486 = vsel %vm412, %v358, 0
        %v489 = vsel %vm412, %v359, 0
        %v492 = vsel %vm412, %v360, 0
        %v495 = vsel %vm412, %v361, 0
        %v498 = vsel %vm412, %v362, 0
        %v501 = vsel %vm412, %v363, 0
        %v504 = vsel %vm412, %v364, 0
        %v507 = vsel %vm412, %v365, 0
        %v510 = vsel %vm412, %v366, 0
        %v513 = vsel %vm412, %v367, 0
        %v516 = vsel %vm412, %v368, 0
        %v519 = vsel %vm412, %v369, 0
        %v522 = vsel %vm412, %v370, 0
        %v525 = vsel %vm412, %v371, 0
        %v528 = vsel %vm412, %v372, 0
        %v531 = vsel %vm412, %v373, 0
        %v534 = vsel %vm412, %v374, 0
        %v537 = vsel %vm412, %v375, 0
        %v540 = vsel %vm412, %v376, 0
        %v543 = vsel %vm412, %v377, 0
        %v546 = vsel %vm412, %v378, 0
        %v549 = vsel %vm412, %v379, 0
        %v552 = vsel %vm412, %v380, 0
        %v555 = vsel %vm412, %v381, 0
        %v558 = vsel %vm412, %v382, 0
        %v561 = vsel %vm412, %v383, 0
        %v564 = vsel %vm412, %v384, 0
        %v567 = vsel %vm412, %v385, 0
        %v570 = vsel %vm412, %v386, 0
        %v573 = vsel %vm412, %v387, 0
        %v576 = vsel %vm412, %v388, 0
        %v579 = vsel %vm412, %v389, 0
        %v582 = vsel %vm412, %v390, 0
        %v585 = vsel %vm412, %v391, 0
        %v588 = vsel %vm412, %v392, 0
        %v591 = vsel %vm412, %v393, 0
        %v594 = vsel %vm412, %v394, 0
        %v597 = vsel %vm412, %v395, 0
        %v600 = vsel %vm412, %v396, 0
        %v603 = vsel %vm412, %v397, 0
        %605 = vmatpush.msra.mxu0 0.0
        %606 = vmatpush.msra.mxu0 0.0
        %607 = vmatpush.msra.mxu0 0.0
        %608 = vmatpush.msra.mxu0 0.0
        %609 = vmatpush.msra.mxu0 0.0
        %610 = vmatpush.msra.mxu0 0.0
        %611 = vmatpush.msra.mxu0 0.0
        %612 = vmatpush.msra.mxu0 0.0
        %613 = vmatpush.msra.mxu0 0.0
        %614 = vmatpush.msra.mxu0 0.0
        %615 = vmatpush.msra.mxu0 0.0
        %616 = vmatpush.msra.mxu0 0.0
        %617 = vmatpush.msra.mxu0 %v404
        %618 = vmatpush.msra.mxu0 %v402
        %619 = vmatpush.msra.mxu0 %v400
        %620 = vmatpush.msra.mxu0 %v398
        %621 = vmatmul.f32.gmra.mxu0 %v414
        %v622 = vpop.f32.mrf.mxu0
        %v623 = vadd.f32 %v408, %v622
        %624 = vmatmul.f32.gmra.mxu0 %v417
        %v625 = vpop.f32.mrf.mxu0
        %v626 = vadd.f32 %v408, %v625
        %627 = vmatmul.f32.gmra.mxu0 %v420
        %v628 = vpop.f32.mrf.mxu0
        %v629 = vadd.f32 %v408, %v628
        %630 = vmatmul.f32.gmra.mxu0 %v423
        %v631 = vpop.f32.mrf.mxu0
        %v632 = vadd.f32 %v408, %v631
        %633 = vmatmul.f32.gmra.mxu0 %v426
        %v634 = vpop.f32.mrf.mxu0
        %v635 = vadd.f32 %v408, %v634
        %636 = vmatmul.f32.gmra.mxu0 %v429
        %v637 = vpop.f32.mrf.mxu0
        %v638 = vadd.f32 %v408, %v637
        %639 = vmatmul.f32.gmra.mxu0 %v432
        %v640 = vpop.f32.mrf.mxu0
        %v641 = vadd.f32 %v408, %v640
        %642 = vmatmul.f32.gmra.mxu0 %v435
        %v643 = vpop.f32.mrf.mxu0
        %v644 = vadd.f32 %v408, %v643
        %645 = vmatmul.f32.gmra.mxu0 %v438
        %v646 = vpop.f32.mrf.mxu0
        %v647 = vadd.f32 %v408, %v646
        %648 = vmatmul.f32.gmra.mxu0 %v441
        %v649 = vpop.f32.mrf.mxu0
        %v650 = vadd.f32 %v408, %v649
        %651 = vmatmul.f32.gmra.mxu0 %v444
        %v652 = vpop.f32.mrf.mxu0
        %v653 = vadd.f32 %v408, %v652
        %654 = vmatmul.f32.gmra.mxu0 %v447
        %v655 = vpop.f32.mrf.mxu0
        %v656 = vadd.f32 %v408, %v655
        %657 = vmatmul.f32.gmra.mxu0 %v450
        %v658 = vpop.f32.mrf.mxu0
        %v659 = vadd.f32 %v408, %v658
        %660 = vmatmul.f32.gmra.mxu0 %v453
        %v661 = vpop.f32.mrf.mxu0
        %v662 = vadd.f32 %v408, %v661
        %663 = vmatmul.f32.gmra.mxu0 %v456
        %v664 = vpop.f32.mrf.mxu0
        %v665 = vadd.f32 %v408, %v664
        %666 = vmatmul.f32.gmra.mxu0 %v459
        %v667 = vpop.f32.mrf.mxu0
        %v668 = vadd.f32 %v408, %v667
        %669 = vmatmul.f32.gmra.mxu0 %v462
        %v670 = vpop.f32.mrf.mxu0
        %v671 = vadd.f32 %v408, %v670
        %672 = vmatmul.f32.gmra.mxu0 %v465
        %v673 = vpop.f32.mrf.mxu0
        %v674 = vadd.f32 %v408, %v673
        %675 = vmatmul.f32.gmra.mxu0 %v468
        %v676 = vpop.f32.mrf.mxu0
        %v677 = vadd.f32 %v408, %v676
        %678 = vmatmul.f32.gmra.mxu0 %v471
        %v679 = vpop.f32.mrf.mxu0
        %v680 = vadd.f32 %v408, %v679
        %681 = vmatmul.f32.gmra.mxu0 %v474
        %v682 = vpop.f32.mrf.mxu0
        %v683 = vadd.f32 %v408, %v682
        %684 = vmatmul.f32.gmra.mxu0 %v477
        %v685 = vpop.f32.mrf.mxu0
        %v686 = vadd.f32 %v408, %v685
        %687 = vmatmul.f32.gmra.mxu0 %v480
        %v688 = vpop.f32.mrf.mxu0
        %v689 = vadd.f32 %v408, %v688
        %690 = vmatmul.f32.gmra.mxu0 %v483
        %v691 = vpop.f32.mrf.mxu0
        %v692 = vadd.f32 %v408, %v691
        %693 = vmatmul.f32.gmra.mxu0 %v486
        %v694 = vpop.f32.mrf.mxu0
        %v695 = vadd.f32 %v408, %v694
        %696 = vmatmul.f32.gmra.mxu0 %v489
        %v697 = vpop.f32.mrf.mxu0
        %v698 = vadd.f32 %v408, %v697
        %699 = vmatmul.f32.gmra.mxu0 %v492
        %v700 = vpop.f32.mrf.mxu0
        %v701 = vadd.f32 %v408, %v700
        %702 = vmatmul.f32.gmra.mxu0 %v495
        %v703 = vpop.f32.mrf.mxu0
        %v704 = vadd.f32 %v408, %v703
        %705 = vmatmul.f32.gmra.mxu0 %v498
        %v706 = vpop.f32.mrf.mxu0
        %v707 = vadd.f32 %v408, %v706
        %708 = vmatmul.f32.gmra.mxu0 %v501
        %v709 = vpop.f32.mrf.mxu0
        %v710 = vadd.f32 %v408, %v709
        %711 = vmatmul.f32.gmra.mxu0 %v504
        %v712 = vpop.f32.mrf.mxu0
        %v713 = vadd.f32 %v408, %v712
        %714 = vmatmul.f32.gmra.mxu0 %v507
        %v715 = vpop.f32.mrf.mxu0
        %v716 = vadd.f32 %v408, %v715
        %717 = vmatmul.f32.gmra.mxu0 %v510
        %v718 = vpop.f32.mrf.mxu0
        %v719 = vadd.f32 %v408, %v718
        %720 = vmatmul.f32.gmra.mxu0 %v513
        %v721 = vpop.f32.mrf.mxu0
        %v722 = vadd.f32 %v408, %v721
        %723 = vmatmul.f32.gmra.mxu0 %v516
        %v724 = vpop.f32.mrf.mxu0
        %v725 = vadd.f32 %v408, %v724
        %726 = vmatmul.f32.gmra.mxu0 %v519
        %v727 = vpop.f32.mrf.mxu0
        %v728 = vadd.f32 %v408, %v727
        %729 = vmatmul.f32.gmra.mxu0 %v522
        %v730 = vpop.f32.mrf.mxu0
        %v731 = vadd.f32 %v408, %v730
        %732 = vmatmul.f32.gmra.mxu0 %v525
        %v733 = vpop.f32.mrf.mxu0
        %v734 = vadd.f32 %v408, %v733
        %735 = vmatmul.f32.gmra.mxu0 %v528
        %v736 = vpop.f32.mrf.mxu0
        %v737 = vadd.f32 %v408, %v736
        %738 = vmatmul.f32.gmra.mxu0 %v531
        %v739 = vpop.f32.mrf.mxu0
        %v740 = vadd.f32 %v408, %v739
        %741 = vmatmul.f32.gmra.mxu0 %v534
        %v742 = vpop.f32.mrf.mxu0
        %v743 = vadd.f32 %v408, %v742
        %744 = vmatmul.f32.gmra.mxu0 %v537
        %v745 = vpop.f32.mrf.mxu0
        %v746 = vadd.f32 %v408, %v745
        %747 = vmatmul.f32.gmra.mxu0 %v540
        %v748 = vpop.f32.mrf.mxu0
        %v749 = vadd.f32 %v408, %v748
        %750 = vmatmul.f32.gmra.mxu0 %v543
        %v751 = vpop.f32.mrf.mxu0
        %v752 = vadd.f32 %v408, %v751
        %753 = vmatmul.f32.gmra.mxu0 %v546
        %v754 = vpop.f32.mrf.mxu0
        %v755 = vadd.f32 %v408, %v754
        %756 = vmatmul.f32.gmra.mxu0 %v549
        %v757 = vpop.f32.mrf.mxu0
        %v758 = vadd.f32 %v408, %v757
        %759 = vmatmul.f32.gmra.mxu0 %v552
        %v760 = vpop.f32.mrf.mxu0
        %v761 = vadd.f32 %v408, %v760
        %762 = vmatmul.f32.gmra.mxu0 %v555
        %v763 = vpop.f32.mrf.mxu0
        %v764 = vadd.f32 %v408, %v763
        %765 = vmatmul.f32.gmra.mxu0 %v558
        %v766 = vpop.f32.mrf.mxu0
        %v767 = vadd.f32 %v408, %v766
        %768 = vmatmul.f32.gmra.mxu0 %v561
        %v769 = vpop.f32.mrf.mxu0
        %v770 = vadd.f32 %v408, %v769
        %771 = vmatmul.f32.gmra.mxu0 %v564
        %v772 = vpop.f32.mrf.mxu0
        %v773 = vadd.f32 %v408, %v772
        %774 = vmatmul.f32.gmra.mxu0 %v567
        %v775 = vpop.f32.mrf.mxu0
        %v776 = vadd.f32 %v408, %v775
        %777 = vmatmul.f32.gmra.mxu0 %v570
        %v778 = vpop.f32.mrf.mxu0
        %v779 = vadd.f32 %v408, %v778
        %780 = vmatmul.f32.gmra.mxu0 %v573
        %v781 = vpop.f32.mrf.mxu0
        %v782 = vadd.f32 %v408, %v781
        %783 = vmatmul.f32.gmra.mxu0 %v576
        %v784 = vpop.f32.mrf.mxu0
        %v785 = vadd.f32 %v408, %v784
        %786 = vmatmul.f32.gmra.mxu0 %v579
        %v787 = vpop.f32.mrf.mxu0
        %v788 = vadd.f32 %v408, %v787
        %789 = vmatmul.f32.gmra.mxu0 %v582
        %v790 = vpop.f32.mrf.mxu0
        %v791 = vadd.f32 %v408, %v790
        %792 = vmatmul.f32.gmra.mxu0 %v585
        %v793 = vpop.f32.mrf.mxu0
        %v794 = vadd.f32 %v408, %v793
        %795 = vmatmul.f32.gmra.mxu0 %v588
        %v796 = vpop.f32.mrf.mxu0
        %v797 = vadd.f32 %v408, %v796
        %798 = vmatmul.f32.gmra.mxu0 %v591
        %v799 = vpop.f32.mrf.mxu0
        %v800 = vadd.f32 %v408, %v799
        %801 = vmatmul.f32.gmra.mxu0 %v594
        %v802 = vpop.f32.mrf.mxu0
        %v803 = vadd.f32 %v408, %v802
        %804 = vmatmul.f32.gmra.mxu0 %v597
        %v805 = vpop.f32.mrf.mxu0
        %v806 = vadd.f32 %v408, %v805
        %807 = vmatmul.f32.gmra.mxu0 %v600
        %v808 = vpop.f32.mrf.mxu0
        %v809 = vadd.f32 %v408, %v808
        %810 = vmatmul.f32.gmra.mxu0 %v603
        %v811 = vpop.f32.mrf.mxu0
        %v812 = vadd.f32 %v408, %v811
        %813 = vdwg.mxu0
        %814 = vmatpush.msra.mxu0 0.0
        %815 = vmatpush.msra.mxu0 0.0
        %816 = vmatpush.msra.mxu0 0.0
        %817 = vmatpush.msra.mxu0 0.0
        %818 = vmatpush.msra.mxu0 0.0
        %819 = vmatpush.msra.mxu0 0.0
        %820 = vmatpush.msra.mxu0 0.0
        %821 = vmatpush.msra.mxu0 0.0
        %822 = vmatpush.msra.mxu0 0.0
        %823 = vmatpush.msra.mxu0 0.0
        %824 = vmatpush.msra.mxu0 0.0
        %825 = vmatpush.msra.mxu0 0.0
        %826 = vmatpush.msra.mxu0 %v405
        %827 = vmatpush.msra.mxu0 %v403
        %828 = vmatpush.msra.mxu0 %v401
        %829 = vmatpush.msra.mxu0 %v399
        %830 = vmatmul.f32.gmra.mxu0 %v414
        %v831 = vpop.f32.mrf.mxu0
        %v832 = vadd.f32 %v409, %v831
        %833 = vmatmul.f32.gmra.mxu0 %v417
        %v834 = vpop.f32.mrf.mxu0
        %v835 = vadd.f32 %v409, %v834
        %836 = vmatmul.f32.gmra.mxu0 %v420
        %v837 = vpop.f32.mrf.mxu0
        %v838 = vadd.f32 %v409, %v837
        %839 = vmatmul.f32.gmra.mxu0 %v423
        %v840 = vpop.f32.mrf.mxu0
        %v841 = vadd.f32 %v409, %v840
        %842 = vmatmul.f32.gmra.mxu0 %v426
        %v843 = vpop.f32.mrf.mxu0
        %v844 = vadd.f32 %v409, %v843
        %845 = vmatmul.f32.gmra.mxu0 %v429
        %v846 = vpop.f32.mrf.mxu0
        %v847 = vadd.f32 %v409, %v846
        %848 = vmatmul.f32.gmra.mxu0 %v432
        %v849 = vpop.f32.mrf.mxu0
        %v850 = vadd.f32 %v409, %v849
        %851 = vmatmul.f32.gmra.mxu0 %v435
        %v852 = vpop.f32.mrf.mxu0
        %v853 = vadd.f32 %v409, %v852
        %854 = vmatmul.f32.gmra.mxu0 %v438
        %v855 = vpop.f32.mrf.mxu0
        %v856 = vadd.f32 %v409, %v855
        %857 = vmatmul.f32.gmra.mxu0 %v441
        %v858 = vpop.f32.mrf.mxu0
        %v859 = vadd.f32 %v409, %v858
        %860 = vmatmul.f32.gmra.mxu0 %v444
        %v861 = vpop.f32.mrf.mxu0
        %v862 = vadd.f32 %v409, %v861
        %863 = vmatmul.f32.gmra.mxu0 %v447
        %v864 = vpop.f32.mrf.mxu0
        %v865 = vadd.f32 %v409, %v864
        %866 = vmatmul.f32.gmra.mxu0 %v450
        %v867 = vpop.f32.mrf.mxu0
        %v868 = vadd.f32 %v409, %v867
        %869 = vmatmul.f32.gmra.mxu0 %v453
        %v870 = vpop.f32.mrf.mxu0
        %v871 = vadd.f32 %v409, %v870
        %872 = vmatmul.f32.gmra.mxu0 %v456
        %v873 = vpop.f32.mrf.mxu0
        %v874 = vadd.f32 %v409, %v873
        %875 = vmatmul.f32.gmra.mxu0 %v459
        %v876 = vpop.f32.mrf.mxu0
        %v877 = vadd.f32 %v409, %v876
        %878 = vmatmul.f32.gmra.mxu0 %v462
        %v879 = vpop.f32.mrf.mxu0
        %v880 = vadd.f32 %v409, %v879
        %881 = vmatmul.f32.gmra.mxu0 %v465
        %v882 = vpop.f32.mrf.mxu0
        %v883 = vadd.f32 %v409, %v882
        %884 = vmatmul.f32.gmra.mxu0 %v468
        %v885 = vpop.f32.mrf.mxu0
        %v886 = vadd.f32 %v409, %v885
        %887 = vmatmul.f32.gmra.mxu0 %v471
        %v888 = vpop.f32.mrf.mxu0
        %v889 = vadd.f32 %v409, %v888
        %890 = vmatmul.f32.gmra.mxu0 %v474
        %v891 = vpop.f32.mrf.mxu0
        %v892 = vadd.f32 %v409, %v891
        %893 = vmatmul.f32.gmra.mxu0 %v477
        %v894 = vpop.f32.mrf.mxu0
        %v895 = vadd.f32 %v409, %v894
        %896 = vmatmul.f32.gmra.mxu0 %v480
        %v897 = vpop.f32.mrf.mxu0
        %v898 = vadd.f32 %v409, %v897
        %899 = vmatmul.f32.gmra.mxu0 %v483
        %v900 = vpop.f32.mrf.mxu0
        %v901 = vadd.f32 %v409, %v900
        %902 = vmatmul.f32.gmra.mxu0 %v486
        %v903 = vpop.f32.mrf.mxu0
        %v904 = vadd.f32 %v409, %v903
        %905 = vmatmul.f32.gmra.mxu0 %v489
        %v906 = vpop.f32.mrf.mxu0
        %v907 = vadd.f32 %v409, %v906
        %908 = vmatmul.f32.gmra.mxu0 %v492
        %v909 = vpop.f32.mrf.mxu0
        %v910 = vadd.f32 %v409, %v909
        %911 = vmatmul.f32.gmra.mxu0 %v495
        %v912 = vpop.f32.mrf.mxu0
        %v913 = vadd.f32 %v409, %v912
        %914 = vmatmul.f32.gmra.mxu0 %v498
        %v915 = vpop.f32.mrf.mxu0
        %v916 = vadd.f32 %v409, %v915
        %917 = vmatmul.f32.gmra.mxu0 %v501
        %v918 = vpop.f32.mrf.mxu0
        %v919 = vadd.f32 %v409, %v918
        %920 = vmatmul.f32.gmra.mxu0 %v504
        %v921 = vpop.f32.mrf.mxu0
        %v922 = vadd.f32 %v409, %v921
        %923 = vmatmul.f32.gmra.mxu0 %v507
        %v924 = vpop.f32.mrf.mxu0
        %v925 = vadd.f32 %v409, %v924
        %926 = vmatmul.f32.gmra.mxu0 %v510
        %v927 = vpop.f32.mrf.mxu0
        %v928 = vadd.f32 %v409, %v927
        %929 = vmatmul.f32.gmra.mxu0 %v513
        %v930 = vpop.f32.mrf.mxu0
        %v931 = vadd.f32 %v409, %v930
        %932 = vmatmul.f32.gmra.mxu0 %v516
        %v933 = vpop.f32.mrf.mxu0
        %v934 = vadd.f32 %v409, %v933
        %935 = vmatmul.f32.gmra.mxu0 %v519
        %v936 = vpop.f32.mrf.mxu0
        %v937 = vadd.f32 %v409, %v936
        %938 = vmatmul.f32.gmra.mxu0 %v522
        %v939 = vpop.f32.mrf.mxu0
        %v940 = vadd.f32 %v409, %v939
        %941 = vmatmul.f32.gmra.mxu0 %v525
        %v942 = vpop.f32.mrf.mxu0
        %v943 = vadd.f32 %v409, %v942
        %944 = vmatmul.f32.gmra.mxu0 %v528
        %v945 = vpop.f32.mrf.mxu0
        %v946 = vadd.f32 %v409, %v945
        %947 = vmatmul.f32.gmra.mxu0 %v531
        %v948 = vpop.f32.mrf.mxu0
        %v949 = vadd.f32 %v409, %v948
        %950 = vmatmul.f32.gmra.mxu0 %v534
        %v951 = vpop.f32.mrf.mxu0
        %v952 = vadd.f32 %v409, %v951
        %953 = vmatmul.f32.gmra.mxu0 %v537
        %v954 = vpop.f32.mrf.mxu0
        %v955 = vadd.f32 %v409, %v954
        %956 = vmatmul.f32.gmra.mxu0 %v540
        %v957 = vpop.f32.mrf.mxu0
        %v958 = vadd.f32 %v409, %v957
        %959 = vmatmul.f32.gmra.mxu0 %v543
        %v960 = vpop.f32.mrf.mxu0
        %v961 = vadd.f32 %v409, %v960
        %962 = vmatmul.f32.gmra.mxu0 %v546
        %v963 = vpop.f32.mrf.mxu0
        %v964 = vadd.f32 %v409, %v963
        %965 = vmatmul.f32.gmra.mxu0 %v549
        %v966 = vpop.f32.mrf.mxu0
        %v967 = vadd.f32 %v409, %v966
        %968 = vmatmul.f32.gmra.mxu0 %v552
        %v969 = vpop.f32.mrf.mxu0
        %v970 = vadd.f32 %v409, %v969
        %971 = vmatmul.f32.gmra.mxu0 %v555
        %v972 = vpop.f32.mrf.mxu0
        %v973 = vadd.f32 %v409, %v972
        %974 = vmatmul.f32.gmra.mxu0 %v558
        %v975 = vpop.f32.mrf.mxu0
        %v976 = vadd.f32 %v409, %v975
        %977 = vmatmul.f32.gmra.mxu0 %v561
        %v978 = vpop.f32.mrf.mxu0
        %v979 = vadd.f32 %v409, %v978
        %980 = vmatmul.f32.gmra.mxu0 %v564
        %v981 = vpop.f32.mrf.mxu0
        %v982 = vadd.f32 %v409, %v981
        %983 = vmatmul.f32.gmra.mxu0 %v567
        %v984 = vpop.f32.mrf.mxu0
        %v985 = vadd.f32 %v409, %v984
        %986 = vmatmul.f32.gmra.mxu0 %v570
        %v987 = vpop.f32.mrf.mxu0
        %v988 = vadd.f32 %v409, %v987
        %989 = vmatmul.f32.gmra.mxu0 %v573
        %v990 = vpop.f32.mrf.mxu0
        %v991 = vadd.f32 %v409, %v990
        %992 = vmatmul.f32.gmra.mxu0 %v576
        %v993 = vpop.f32.mrf.mxu0
        %v994 = vadd.f32 %v409, %v993
        %995 = vmatmul.f32.gmra.mxu0 %v579
        %v996 = vpop.f32.mrf.mxu0
        %v997 = vadd.f32 %v409, %v996
        %998 = vmatmul.f32.gmra.mxu0 %v582
        %v999 = vpop.f32.mrf.mxu0
        %v1000 = vadd.f32 %v409, %v999
        %1001 = vmatmul.f32.gmra.mxu0 %v585
        %v1002 = vpop.f32.mrf.mxu0
        %v1003 = vadd.f32 %v409, %v1002
        %1004 = vmatmul.f32.gmra.mxu0 %v588
        %v1005 = vpop.f32.mrf.mxu0
        %v1006 = vadd.f32 %v409, %v1005
        %1007 = vmatmul.f32.gmra.mxu0 %v591
        %v1008 = vpop.f32.mrf.mxu0
        %v1009 = vadd.f32 %v409, %v1008
        %1010 = vmatmul.f32.gmra.mxu0 %v594
        %v1011 = vpop.f32.mrf.mxu0
        %v1012 = vadd.f32 %v409, %v1011
        %1013 = vmatmul.f32.gmra.mxu0 %v597
        %v1014 = vpop.f32.mrf.mxu0
        %v1015 = vadd.f32 %v409, %v1014
        %1016 = vmatmul.f32.gmra.mxu0 %v600
        %v1017 = vpop.f32.mrf.mxu0
        %v1018 = vadd.f32 %v409, %v1017
        %1019 = vmatmul.f32.gmra.mxu0 %v603
        %v1020 = vpop.f32.mrf.mxu0
        %v1021 = vadd.f32 %v409, %v1020
        %1022 = vdwg.mxu0
        %v1023 = vmax.f32 %v623, 0.0
        %v1024 = vmax.f32 %v832, 0.0
        %v1025 = vmax.f32 %v626, 0.0
        %v1026 = vmax.f32 %v835, 0.0
        %v1027 = vmax.f32 %v629, 0.0
        %v1028 = vmax.f32 %v838, 0.0
        %v1029 = vmax.f32 %v632, 0.0
        %v1030 = vmax.f32 %v841, 0.0
        %v1031 = vmax.f32 %v635, 0.0
        %v1032 = vmax.f32 %v844, 0.0
        %v1033 = vmax.f32 %v638, 0.0
        %v1034 = vmax.f32 %v847, 0.0
        %v1035 = vmax.f32 %v641, 0.0
        %v1036 = vmax.f32 %v850, 0.0
        %v1037 = vmax.f32 %v644, 0.0
        %v1038 = vmax.f32 %v853, 0.0
        %v1039 = vmax.f32 %v647, 0.0
        %v1040 = vmax.f32 %v856, 0.0
        %v1041 = vmax.f32 %v650, 0.0
        %v1042 = vmax.f32 %v859, 0.0
        %v1043 = vmax.f32 %v653, 0.0
        %v1044 = vmax.f32 %v862, 0.0
        %v1045 = vmax.f32 %v656, 0.0
        %v1046 = vmax.f32 %v865, 0.0
        %v1047 = vmax.f32 %v659, 0.0
        %v1048 = vmax.f32 %v868, 0.0
        %v1049 = vmax.f32 %v662, 0.0
        %v1050 = vmax.f32 %v871, 0.0
        %v1051 = vmax.f32 %v665, 0.0
        %v1052 = vmax.f32 %v874, 0.0
        %v1053 = vmax.f32 %v668, 0.0
        %v1054 = vmax.f32 %v877, 0.0
        %v1055 = vmax.f32 %v671, 0.0
        %v1056 = vmax.f32 %v880, 0.0
        %v1057 = vmax.f32 %v674, 0.0
        %v1058 = vmax.f32 %v883, 0.0
        %v1059 = vmax.f32 %v677, 0.0
        %v1060 = vmax.f32 %v886, 0.0
        %v1061 = vmax.f32 %v680, 0.0
        %v1062 = vmax.f32 %v889, 0.0
        %v1063 = vmax.f32 %v683, 0.0
        %v1064 = vmax.f32 %v892, 0.0
        %v1065 = vmax.f32 %v686, 0.0
        %v1066 = vmax.f32 %v895, 0.0
        %v1067 = vmax.f32 %v689, 0.0
        %v1068 = vmax.f32 %v898, 0.0
        %v1069 = vmax.f32 %v692, 0.0
        %v1070 = vmax.f32 %v901, 0.0
        %v1071 = vmax.f32 %v695, 0.0
        %v1072 = vmax.f32 %v904, 0.0
        %v1073 = vmax.f32 %v698, 0.0
        %v1074 = vmax.f32 %v907, 0.0
        %v1075 = vmax.f32 %v701, 0.0
        %v1076 = vmax.f32 %v910, 0.0
        %v1077 = vmax.f32 %v704, 0.0
        %v1078 = vmax.f32 %v913, 0.0
        %v1079 = vmax.f32 %v707, 0.0
        %v1080 = vmax.f32 %v916, 0.0
        %v1081 = vmax.f32 %v710, 0.0
        %v1082 = vmax.f32 %v919, 0.0
        %v1083 = vmax.f32 %v713, 0.0
        %v1084 = vmax.f32 %v922, 0.0
        %v1085 = vmax.f32 %v716, 0.0
        %v1086 = vmax.f32 %v925, 0.0
        %v1087 = vmax.f32 %v719, 0.0
        %v1088 = vmax.f32 %v928, 0.0
        %v1089 = vmax.f32 %v722, 0.0
        %v1090 = vmax.f32 %v931, 0.0
        %v1091 = vmax.f32 %v725, 0.0
        %v1092 = vmax.f32 %v934, 0.0
        %v1093 = vmax.f32 %v728, 0.0
        %v1094 = vmax.f32 %v937, 0.0
        %v1095 = vmax.f32 %v731, 0.0
        %v1096 = vmax.f32 %v940, 0.0
        %v1097 = vmax.f32 %v734, 0.0
        %v1098 = vmax.f32 %v943, 0.0
        %v1099 = vmax.f32 %v737, 0.0
        %v1100 = vmax.f32 %v946, 0.0
        %v1101 = vmax.f32 %v740, 0.0
        %v1102 = vmax.f32 %v949, 0.0
        %v1103 = vmax.f32 %v743, 0.0
        %v1104 = vmax.f32 %v952, 0.0
        %v1105 = vmax.f32 %v746, 0.0
        %v1106 = vmax.f32 %v955, 0.0
        %v1107 = vmax.f32 %v749, 0.0
        %v1108 = vmax.f32 %v958, 0.0
        %v1109 = vmax.f32 %v752, 0.0
        %v1110 = vmax.f32 %v961, 0.0
        %v1111 = vmax.f32 %v755, 0.0
        %v1112 = vmax.f32 %v964, 0.0
        %v1113 = vmax.f32 %v758, 0.0
        %v1114 = vmax.f32 %v967, 0.0
        %v1115 = vmax.f32 %v761, 0.0
        %v1116 = vmax.f32 %v970, 0.0
        %v1117 = vmax.f32 %v764, 0.0
        %v1118 = vmax.f32 %v973, 0.0
        %v1119 = vmax.f32 %v767, 0.0
        %v1120 = vmax.f32 %v976, 0.0
        %v1121 = vmax.f32 %v770, 0.0
        %v1122 = vmax.f32 %v979, 0.0
        %v1123 = vmax.f32 %v773, 0.0
        %v1124 = vmax.f32 %v982, 0.0
        %v1125 = vmax.f32 %v776, 0.0
        %v1126 = vmax.f32 %v985, 0.0
        %v1127 = vmax.f32 %v779, 0.0
        %v1128 = vmax.f32 %v988, 0.0
        %v1129 = vmax.f32 %v782, 0.0
        %v1130 = vmax.f32 %v991, 0.0
        %v1131 = vmax.f32 %v785, 0.0
        %v1132 = vmax.f32 %v994, 0.0
        %v1133 = vmax.f32 %v788, 0.0
        %v1134 = vmax.f32 %v997, 0.0
        %v1135 = vmax.f32 %v791, 0.0
        %v1136 = vmax.f32 %v1000, 0.0
        %v1137 = vmax.f32 %v794, 0.0
        %v1138 = vmax.f32 %v1003, 0.0
        %v1139 = vmax.f32 %v797, 0.0
        %v1140 = vmax.f32 %v1006, 0.0
        %v1141 = vmax.f32 %v800, 0.0
        %v1142 = vmax.f32 %v1009, 0.0
        %v1143 = vmax.f32 %v803, 0.0
        %v1144 = vmax.f32 %v1012, 0.0
        %v1145 = vmax.f32 %v806, 0.0
        %v1146 = vmax.f32 %v1015, 0.0
        %v1147 = vmax.f32 %v809, 0.0
        %v1148 = vmax.f32 %v1018, 0.0
        %v1149 = vmax.f32 %v812, 0.0
        %v1150 = vmax.f32 %v1021, 0.0
        %1279 = vrot.lane.b32.xlu0 %v1023, 127
        %v1280 = vpop.permute.xlu0 %1279
        %1281 = vrot.lane.b32.xlu0 %v1024, 127
        %v1282 = vpop.permute.xlu0 %1281
        %1283 = vrot.lane.b32.xlu0 %v1025, 127
        %v1284 = vpop.permute.xlu0 %1283
        %1285 = vrot.lane.b32.xlu0 %v1026, 127
        %v1286 = vpop.permute.xlu0 %1285
        %1287 = vrot.lane.b32.xlu0 %v1027, 127
        %v1288 = vpop.permute.xlu0 %1287
        %1289 = vrot.lane.b32.xlu0 %v1028, 127
        %v1290 = vpop.permute.xlu0 %1289
        %1291 = vrot.lane.b32.xlu0 %v1029, 127
        %v1292 = vpop.permute.xlu0 %1291
        %1293 = vrot.lane.b32.xlu0 %v1030, 127
        %v1294 = vpop.permute.xlu0 %1293
        %1295 = vrot.lane.b32.xlu0 %v1031, 127
        %v1296 = vpop.permute.xlu0 %1295
        %1297 = vrot.lane.b32.xlu0 %v1032, 127
        %v1298 = vpop.permute.xlu0 %1297
        %1299 = vrot.lane.b32.xlu0 %v1033, 127
        %v1300 = vpop.permute.xlu0 %1299
        %1301 = vrot.lane.b32.xlu0 %v1034, 127
        %v1302 = vpop.permute.xlu0 %1301
        %1303 = vrot.lane.b32.xlu0 %v1035, 127
        %v1304 = vpop.permute.xlu0 %1303
        %1305 = vrot.lane.b32.xlu0 %v1036, 127
        %v1306 = vpop.permute.xlu0 %1305
        %1307 = vrot.lane.b32.xlu0 %v1037, 127
        %v1308 = vpop.permute.xlu0 %1307
        %1309 = vrot.lane.b32.xlu0 %v1038, 127
        %v1310 = vpop.permute.xlu0 %1309
        %1311 = vrot.lane.b32.xlu0 %v1039, 127
        %v1312 = vpop.permute.xlu0 %1311
        %1313 = vrot.lane.b32.xlu0 %v1040, 127
        %v1314 = vpop.permute.xlu0 %1313
        %1315 = vrot.lane.b32.xlu0 %v1041, 127
        %v1316 = vpop.permute.xlu0 %1315
        %1317 = vrot.lane.b32.xlu0 %v1042, 127
        %v1318 = vpop.permute.xlu0 %1317
        %1319 = vrot.lane.b32.xlu0 %v1043, 127
        %v1320 = vpop.permute.xlu0 %1319
        %1321 = vrot.lane.b32.xlu0 %v1044, 127
        %v1322 = vpop.permute.xlu0 %1321
        %1323 = vrot.lane.b32.xlu0 %v1045, 127
        %v1324 = vpop.permute.xlu0 %1323
        %1325 = vrot.lane.b32.xlu0 %v1046, 127
        %v1326 = vpop.permute.xlu0 %1325
        %1327 = vrot.lane.b32.xlu0 %v1047, 127
        %v1328 = vpop.permute.xlu0 %1327
        %1329 = vrot.lane.b32.xlu0 %v1048, 127
        %v1330 = vpop.permute.xlu0 %1329
        %1331 = vrot.lane.b32.xlu0 %v1049, 127
        %v1332 = vpop.permute.xlu0 %1331
        %1333 = vrot.lane.b32.xlu0 %v1050, 127
        %v1334 = vpop.permute.xlu0 %1333
        %1335 = vrot.lane.b32.xlu0 %v1051, 127
        %v1336 = vpop.permute.xlu0 %1335
        %1337 = vrot.lane.b32.xlu0 %v1052, 127
        %v1338 = vpop.permute.xlu0 %1337
        %1339 = vrot.lane.b32.xlu0 %v1053, 127
        %v1340 = vpop.permute.xlu0 %1339
        %1341 = vrot.lane.b32.xlu0 %v1054, 127
        %v1342 = vpop.permute.xlu0 %1341
        %1343 = vrot.lane.b32.xlu0 %v1055, 127
        %v1344 = vpop.permute.xlu0 %1343
        %1345 = vrot.lane.b32.xlu0 %v1056, 127
        %v1346 = vpop.permute.xlu0 %1345
        %1347 = vrot.lane.b32.xlu0 %v1057, 127
        %v1348 = vpop.permute.xlu0 %1347
        %1349 = vrot.lane.b32.xlu0 %v1058, 127
        %v1350 = vpop.permute.xlu0 %1349
        %1351 = vrot.lane.b32.xlu0 %v1059, 127
        %v1352 = vpop.permute.xlu0 %1351
        %1353 = vrot.lane.b32.xlu0 %v1060, 127
        %v1354 = vpop.permute.xlu0 %1353
        %1355 = vrot.lane.b32.xlu0 %v1061, 127
        %v1356 = vpop.permute.xlu0 %1355
        %1357 = vrot.lane.b32.xlu0 %v1062, 127
        %v1358 = vpop.permute.xlu0 %1357
        %1359 = vrot.lane.b32.xlu0 %v1063, 127
        %v1360 = vpop.permute.xlu0 %1359
        %1361 = vrot.lane.b32.xlu0 %v1064, 127
        %v1362 = vpop.permute.xlu0 %1361
        %1363 = vrot.lane.b32.xlu0 %v1065, 127
        %v1364 = vpop.permute.xlu0 %1363
        %1365 = vrot.lane.b32.xlu0 %v1066, 127
        %v1366 = vpop.permute.xlu0 %1365
        %1367 = vrot.lane.b32.xlu0 %v1067, 127
        %v1368 = vpop.permute.xlu0 %1367
        %1369 = vrot.lane.b32.xlu0 %v1068, 127
        %v1370 = vpop.permute.xlu0 %1369
        %1371 = vrot.lane.b32.xlu0 %v1069, 127
        %v1372 = vpop.permute.xlu0 %1371
        %1373 = vrot.lane.b32.xlu0 %v1070, 127
        %v1374 = vpop.permute.xlu0 %1373
        %1375 = vrot.lane.b32.xlu0 %v1071, 127
        %v1376 = vpop.permute.xlu0 %1375
        %1377 = vrot.lane.b32.xlu0 %v1072, 127
        %v1378 = vpop.permute.xlu0 %1377
        %1379 = vrot.lane.b32.xlu0 %v1073, 127
        %v1380 = vpop.permute.xlu0 %1379
        %1381 = vrot.lane.b32.xlu0 %v1074, 127
        %v1382 = vpop.permute.xlu0 %1381
        %1383 = vrot.lane.b32.xlu0 %v1075, 127
        %v1384 = vpop.permute.xlu0 %1383
        %1385 = vrot.lane.b32.xlu0 %v1076, 127
        %v1386 = vpop.permute.xlu0 %1385
        %1387 = vrot.lane.b32.xlu0 %v1077, 127
        %v1388 = vpop.permute.xlu0 %1387
        %1389 = vrot.lane.b32.xlu0 %v1078, 127
        %v1390 = vpop.permute.xlu0 %1389
        %1391 = vrot.lane.b32.xlu0 %v1079, 127
        %v1392 = vpop.permute.xlu0 %1391
        %1393 = vrot.lane.b32.xlu0 %v1080, 127
        %v1394 = vpop.permute.xlu0 %1393
        %1395 = vrot.lane.b32.xlu0 %v1081, 127
        %v1396 = vpop.permute.xlu0 %1395
        %1397 = vrot.lane.b32.xlu0 %v1082, 127
        %v1398 = vpop.permute.xlu0 %1397
        %1399 = vrot.lane.b32.xlu0 %v1083, 127
        %v1400 = vpop.permute.xlu0 %1399
        %1401 = vrot.lane.b32.xlu0 %v1084, 127
        %v1402 = vpop.permute.xlu0 %1401
        %1403 = vrot.lane.b32.xlu0 %v1085, 127
        %v1404 = vpop.permute.xlu0 %1403
        %1405 = vrot.lane.b32.xlu0 %v1086, 127
        %v1406 = vpop.permute.xlu0 %1405
        %1407 = vrot.lane.b32.xlu0 %v1087, 127
        %v1408 = vpop.permute.xlu0 %1407
        %1409 = vrot.lane.b32.xlu0 %v1088, 127
        %v1410 = vpop.permute.xlu0 %1409
        %1411 = vrot.lane.b32.xlu0 %v1089, 127
        %v1412 = vpop.permute.xlu0 %1411
        %1413 = vrot.lane.b32.xlu0 %v1090, 127
        %v1414 = vpop.permute.xlu0 %1413
        %1415 = vrot.lane.b32.xlu0 %v1091, 127
        %v1416 = vpop.permute.xlu0 %1415
        %1417 = vrot.lane.b32.xlu0 %v1092, 127
        %v1418 = vpop.permute.xlu0 %1417
        %1419 = vrot.lane.b32.xlu0 %v1093, 127
        %v1420 = vpop.permute.xlu0 %1419
        %1421 = vrot.lane.b32.xlu0 %v1094, 127
        %v1422 = vpop.permute.xlu0 %1421
        %1423 = vrot.lane.b32.xlu0 %v1095, 127
        %v1424 = vpop.permute.xlu0 %1423
        %1425 = vrot.lane.b32.xlu0 %v1096, 127
        %v1426 = vpop.permute.xlu0 %1425
        %1427 = vrot.lane.b32.xlu0 %v1097, 127
        %v1428 = vpop.permute.xlu0 %1427
        %1429 = vrot.lane.b32.xlu0 %v1098, 127
        %v1430 = vpop.permute.xlu0 %1429
        %1431 = vrot.lane.b32.xlu0 %v1099, 127
        %v1432 = vpop.permute.xlu0 %1431
        %1433 = vrot.lane.b32.xlu0 %v1100, 127
        %v1434 = vpop.permute.xlu0 %1433
        %1435 = vrot.lane.b32.xlu0 %v1101, 127
        %v1436 = vpop.permute.xlu0 %1435
        %1437 = vrot.lane.b32.xlu0 %v1102, 127
        %v1438 = vpop.permute.xlu0 %1437
        %1439 = vrot.lane.b32.xlu0 %v1103, 127
        %v1440 = vpop.permute.xlu0 %1439
        %1441 = vrot.lane.b32.xlu0 %v1104, 127
        %v1442 = vpop.permute.xlu0 %1441
        %1443 = vrot.lane.b32.xlu0 %v1105, 127
        %v1444 = vpop.permute.xlu0 %1443
        %1445 = vrot.lane.b32.xlu0 %v1106, 127
        %v1446 = vpop.permute.xlu0 %1445
        %1447 = vrot.lane.b32.xlu0 %v1107, 127
        %v1448 = vpop.permute.xlu0 %1447
        %1449 = vrot.lane.b32.xlu0 %v1108, 127
        %v1450 = vpop.permute.xlu0 %1449
        %1451 = vrot.lane.b32.xlu0 %v1109, 127
        %v1452 = vpop.permute.xlu0 %1451
        %1453 = vrot.lane.b32.xlu0 %v1110, 127
        %v1454 = vpop.permute.xlu0 %1453
        %1455 = vrot.lane.b32.xlu0 %v1111, 127
        %v1456 = vpop.permute.xlu0 %1455
        %1457 = vrot.lane.b32.xlu0 %v1112, 127
        %v1458 = vpop.permute.xlu0 %1457
        %1459 = vrot.lane.b32.xlu0 %v1113, 127
        %v1460 = vpop.permute.xlu0 %1459
        %1461 = vrot.lane.b32.xlu0 %v1114, 127
        %v1462 = vpop.permute.xlu0 %1461
        %1463 = vrot.lane.b32.xlu0 %v1115, 127
        %v1464 = vpop.permute.xlu0 %1463
        %1465 = vrot.lane.b32.xlu0 %v1116, 127
        %v1466 = vpop.permute.xlu0 %1465
        %1467 = vrot.lane.b32.xlu0 %v1117, 127
        %v1468 = vpop.permute.xlu0 %1467
        %1469 = vrot.lane.b32.xlu0 %v1118, 127
        %v1470 = vpop.permute.xlu0 %1469
        %1471 = vrot.lane.b32.xlu0 %v1119, 127
        %v1472 = vpop.permute.xlu0 %1471
        %1473 = vrot.lane.b32.xlu0 %v1120, 127
        %v1474 = vpop.permute.xlu0 %1473
        %1475 = vrot.lane.b32.xlu0 %v1121, 127
        %v1476 = vpop.permute.xlu0 %1475
        %1477 = vrot.lane.b32.xlu0 %v1122, 127
        %v1478 = vpop.permute.xlu0 %1477
        %1479 = vrot.lane.b32.xlu0 %v1123, 127
        %v1480 = vpop.permute.xlu0 %1479
        %1481 = vrot.lane.b32.xlu0 %v1124, 127
        %v1482 = vpop.permute.xlu0 %1481
        %1483 = vrot.lane.b32.xlu0 %v1125, 127
        %v1484 = vpop.permute.xlu0 %1483
        %1485 = vrot.lane.b32.xlu0 %v1126, 127
        %v1486 = vpop.permute.xlu0 %1485
        %1487 = vrot.lane.b32.xlu0 %v1127, 127
        %v1488 = vpop.permute.xlu0 %1487
        %1489 = vrot.lane.b32.xlu0 %v1128, 127
        %v1490 = vpop.permute.xlu0 %1489
        %1491 = vrot.lane.b32.xlu0 %v1129, 127
        %v1492 = vpop.permute.xlu0 %1491
        %1493 = vrot.lane.b32.xlu0 %v1130, 127
        %v1494 = vpop.permute.xlu0 %1493
        %1495 = vrot.lane.b32.xlu0 %v1131, 127
        %v1496 = vpop.permute.xlu0 %1495
        %1497 = vrot.lane.b32.xlu0 %v1132, 127
        %v1498 = vpop.permute.xlu0 %1497
        %1499 = vrot.lane.b32.xlu0 %v1133, 127
        %v1500 = vpop.permute.xlu0 %1499
        %1501 = vrot.lane.b32.xlu0 %v1134, 127
        %v1502 = vpop.permute.xlu0 %1501
        %1503 = vrot.lane.b32.xlu0 %v1135, 127
        %v1504 = vpop.permute.xlu0 %1503
        %1505 = vrot.lane.b32.xlu0 %v1136, 127
        %v1506 = vpop.permute.xlu0 %1505
        %1507 = vrot.lane.b32.xlu0 %v1137, 127
        %v1508 = vpop.permute.xlu0 %1507
        %1509 = vrot.lane.b32.xlu0 %v1138, 127
        %v1510 = vpop.permute.xlu0 %1509
        %1511 = vrot.lane.b32.xlu0 %v1139, 127
        %v1512 = vpop.permute.xlu0 %1511
        %1513 = vrot.lane.b32.xlu0 %v1140, 127
        %v1514 = vpop.permute.xlu0 %1513
        %1515 = vrot.lane.b32.xlu0 %v1141, 127
        %v1516 = vpop.permute.xlu0 %1515
        %1517 = vrot.lane.b32.xlu0 %v1142, 127
        %v1518 = vpop.permute.xlu0 %1517
        %1519 = vrot.lane.b32.xlu0 %v1143, 127
        %v1520 = vpop.permute.xlu0 %1519
        %1521 = vrot.lane.b32.xlu0 %v1144, 127
        %v1522 = vpop.permute.xlu0 %1521
        %1523 = vrot.lane.b32.xlu0 %v1145, 127
        %v1524 = vpop.permute.xlu0 %1523
        %1525 = vrot.lane.b32.xlu0 %v1146, 127
        %v1526 = vpop.permute.xlu0 %1525
        %1527 = vrot.lane.b32.xlu0 %v1147, 127
        %v1528 = vpop.permute.xlu0 %1527
        %1529 = vrot.lane.b32.xlu0 %v1148, 127
        %v1530 = vpop.permute.xlu0 %1529
        %1531 = vrot.lane.b32.xlu0 %v1149, 127
        %v1532 = vpop.permute.xlu0 %1531
        %1533 = vrot.lane.b32.xlu0 %v1150, 127
        %v1534 = vpop.permute.xlu0 %1533
        %vm1535 = vcmask 1039360
        %v1536 = vsel %vm1535, %v1280, %v1282
        %v1537 = vsel %vm1535, %v1284, %v1286
        %v1538 = vsel %vm1535, %v1288, %v1290
        %v1539 = vsel %vm1535, %v1292, %v1294
        %v1540 = vsel %vm1535, %v1296, %v1298
        %v1541 = vsel %vm1535, %v1300, %v1302
        %v1542 = vsel %vm1535, %v1304, %v1306
        %v1543 = vsel %vm1535, %v1308, %v1310
        %v1544 = vsel %vm1535, %v1312, %v1314
        %v1545 = vsel %vm1535, %v1316, %v1318
        %v1546 = vsel %vm1535, %v1320, %v1322
        %v1547 = vsel %vm1535, %v1324, %v1326
        %v1548 = vsel %vm1535, %v1328, %v1330
        %v1549 = vsel %vm1535, %v1332, %v1334
        %v1550 = vsel %vm1535, %v1336, %v1338
        %v1551 = vsel %vm1535, %v1340, %v1342
        %v1552 = vsel %vm1535, %v1344, %v1346
        %v1553 = vsel %vm1535, %v1348, %v1350
        %v1554 = vsel %vm1535, %v1352, %v1354
        %v1555 = vsel %vm1535, %v1356, %v1358
        %v1556 = vsel %vm1535, %v1360, %v1362
        %v1557 = vsel %vm1535, %v1364, %v1366
        %v1558 = vsel %vm1535, %v1368, %v1370
        %v1559 = vsel %vm1535, %v1372, %v1374
        %v1560 = vsel %vm1535, %v1376, %v1378
        %v1561 = vsel %vm1535, %v1380, %v1382
        %v1562 = vsel %vm1535, %v1384, %v1386
        %v1563 = vsel %vm1535, %v1388, %v1390
        %v1564 = vsel %vm1535, %v1392, %v1394
        %v1565 = vsel %vm1535, %v1396, %v1398
        %v1566 = vsel %vm1535, %v1400, %v1402
        %v1567 = vsel %vm1535, %v1404, %v1406
        %v1568 = vsel %vm1535, %v1408, %v1410
        %v1569 = vsel %vm1535, %v1412, %v1414
        %v1570 = vsel %vm1535, %v1416, %v1418
        %v1571 = vsel %vm1535, %v1420, %v1422
        %v1572 = vsel %vm1535, %v1424, %v1426
        %v1573 = vsel %vm1535, %v1428, %v1430
        %v1574 = vsel %vm1535, %v1432, %v1434
        %v1575 = vsel %vm1535, %v1436, %v1438
        %v1576 = vsel %vm1535, %v1440, %v1442
        %v1577 = vsel %vm1535, %v1444, %v1446
        %v1578 = vsel %vm1535, %v1448, %v1450
        %v1579 = vsel %vm1535, %v1452, %v1454
        %v1580 = vsel %vm1535, %v1456, %v1458
        %v1581 = vsel %vm1535, %v1460, %v1462
        %v1582 = vsel %vm1535, %v1464, %v1466
        %v1583 = vsel %vm1535, %v1468, %v1470
        %v1584 = vsel %vm1535, %v1472, %v1474
        %v1585 = vsel %vm1535, %v1476, %v1478
        %v1586 = vsel %vm1535, %v1480, %v1482
        %v1587 = vsel %vm1535, %v1484, %v1486
        %v1588 = vsel %vm1535, %v1488, %v1490
        %v1589 = vsel %vm1535, %v1492, %v1494
        %v1590 = vsel %vm1535, %v1496, %v1498
        %v1591 = vsel %vm1535, %v1500, %v1502
        %v1592 = vsel %vm1535, %v1504, %v1506
        %v1593 = vsel %vm1535, %v1508, %v1510
        %v1594 = vsel %vm1535, %v1512, %v1514
        %v1595 = vsel %vm1535, %v1516, %v1518
        %v1596 = vsel %vm1535, %v1520, %v1522
        %v1597 = vsel %vm1535, %v1524, %v1526
        %v1598 = vsel %vm1535, %v1528, %v1530
        %v1599 = vsel %vm1535, %v1532, %v1534
        %v1792 = vsel %vm1535, %v1282, %v1280
        %v1793 = vsel %vm1535, %v1286, %v1284
        %v1794 = vsel %vm1535, %v1290, %v1288
        %v1795 = vsel %vm1535, %v1294, %v1292
        %v1796 = vsel %vm1535, %v1298, %v1296
        %v1797 = vsel %vm1535, %v1302, %v1300
        %v1798 = vsel %vm1535, %v1306, %v1304
        %v1799 = vsel %vm1535, %v1310, %v1308
        %v1800 = vsel %vm1535, %v1314, %v1312
        %v1801 = vsel %vm1535, %v1318, %v1316
        %v1802 = vsel %vm1535, %v1322, %v1320
        %v1803 = vsel %vm1535, %v1326, %v1324
        %v1804 = vsel %vm1535, %v1330, %v1328
        %v1805 = vsel %vm1535, %v1334, %v1332
        %v1806 = vsel %vm1535, %v1338, %v1336
        %v1807 = vsel %vm1535, %v1342, %v1340
        %v1808 = vsel %vm1535, %v1346, %v1344
        %v1809 = vsel %vm1535, %v1350, %v1348
        %v1810 = vsel %vm1535, %v1354, %v1352
        %v1811 = vsel %vm1535, %v1358, %v1356
        %v1812 = vsel %vm1535, %v1362, %v1360
        %v1813 = vsel %vm1535, %v1366, %v1364
        %v1814 = vsel %vm1535, %v1370, %v1368
        %v1815 = vsel %vm1535, %v1374, %v1372
        %v1816 = vsel %vm1535, %v1378, %v1376
        %v1817 = vsel %vm1535, %v1382, %v1380
        %v1818 = vsel %vm1535, %v1386, %v1384
        %v1819 = vsel %vm1535, %v1390, %v1388
        %v1820 = vsel %vm1535, %v1394, %v1392
        %v1821 = vsel %vm1535, %v1398, %v1396
        %v1822 = vsel %vm1535, %v1402, %v1400
        %v1823 = vsel %vm1535, %v1406, %v1404
        %v1824 = vsel %vm1535, %v1410, %v1408
        %v1825 = vsel %vm1535, %v1414, %v1412
        %v1826 = vsel %vm1535, %v1418, %v1416
        %v1827 = vsel %vm1535, %v1422, %v1420
        %v1828 = vsel %vm1535, %v1426, %v1424
        %v1829 = vsel %vm1535, %v1430, %v1428
        %v1830 = vsel %vm1535, %v1434, %v1432
        %v1831 = vsel %vm1535, %v1438, %v1436
        %v1832 = vsel %vm1535, %v1442, %v1440
        %v1833 = vsel %vm1535, %v1446, %v1444
        %v1834 = vsel %vm1535, %v1450, %v1448
        %v1835 = vsel %vm1535, %v1454, %v1452
        %v1836 = vsel %vm1535, %v1458, %v1456
        %v1837 = vsel %vm1535, %v1462, %v1460
        %v1838 = vsel %vm1535, %v1466, %v1464
        %v1839 = vsel %vm1535, %v1470, %v1468
        %v1840 = vsel %vm1535, %v1474, %v1472
        %v1841 = vsel %vm1535, %v1478, %v1476
        %v1842 = vsel %vm1535, %v1482, %v1480
        %v1843 = vsel %vm1535, %v1486, %v1484
        %v1844 = vsel %vm1535, %v1490, %v1488
        %v1845 = vsel %vm1535, %v1494, %v1492
        %v1846 = vsel %vm1535, %v1498, %v1496
        %v1847 = vsel %vm1535, %v1502, %v1500
        %v1848 = vsel %vm1535, %v1506, %v1504
        %v1849 = vsel %vm1535, %v1510, %v1508
        %v1850 = vsel %vm1535, %v1514, %v1512
        %v1851 = vsel %vm1535, %v1518, %v1516
        %v1852 = vsel %vm1535, %v1522, %v1520
        %v1853 = vsel %vm1535, %v1526, %v1524
        %v1854 = vsel %vm1535, %v1530, %v1528
        %v1855 = vsel %vm1535, %v1534, %v1532
        %v1856 = vmax.f32 %v1023, %v1536
        %v1857 = vmax.f32 %v1024, %v1792
        %v1858 = vmax.f32 %v1025, %v1537
        %v1859 = vmax.f32 %v1026, %v1793
        %v1860 = vmax.f32 %v1027, %v1538
        %v1861 = vmax.f32 %v1028, %v1794
        %v1862 = vmax.f32 %v1029, %v1539
        %v1863 = vmax.f32 %v1030, %v1795
        %v1864 = vmax.f32 %v1031, %v1540
        %v1865 = vmax.f32 %v1032, %v1796
        %v1866 = vmax.f32 %v1033, %v1541
        %v1867 = vmax.f32 %v1034, %v1797
        %v1868 = vmax.f32 %v1035, %v1542
        %v1869 = vmax.f32 %v1036, %v1798
        %v1870 = vmax.f32 %v1037, %v1543
        %v1871 = vmax.f32 %v1038, %v1799
        %v1872 = vmax.f32 %v1039, %v1544
        %v1873 = vmax.f32 %v1040, %v1800
        %v1874 = vmax.f32 %v1041, %v1545
        %v1875 = vmax.f32 %v1042, %v1801
        %v1876 = vmax.f32 %v1043, %v1546
        %v1877 = vmax.f32 %v1044, %v1802
        %v1878 = vmax.f32 %v1045, %v1547
        %v1879 = vmax.f32 %v1046, %v1803
        %v1880 = vmax.f32 %v1047, %v1548
        %v1881 = vmax.f32 %v1048, %v1804
        %v1882 = vmax.f32 %v1049, %v1549
        %v1883 = vmax.f32 %v1050, %v1805
        %v1884 = vmax.f32 %v1051, %v1550
        %v1885 = vmax.f32 %v1052, %v1806
        %v1886 = vmax.f32 %v1053, %v1551
        %v1887 = vmax.f32 %v1054, %v1807
        %v1888 = vmax.f32 %v1055, %v1552
        %v1889 = vmax.f32 %v1056, %v1808
        %v1890 = vmax.f32 %v1057, %v1553
        %v1891 = vmax.f32 %v1058, %v1809
        %v1892 = vmax.f32 %v1059, %v1554
        %v1893 = vmax.f32 %v1060, %v1810
        %v1894 = vmax.f32 %v1061, %v1555
        %v1895 = vmax.f32 %v1062, %v1811
        %v1896 = vmax.f32 %v1063, %v1556
        %v1897 = vmax.f32 %v1064, %v1812
        %v1898 = vmax.f32 %v1065, %v1557
        %v1899 = vmax.f32 %v1066, %v1813
        %v1900 = vmax.f32 %v1067, %v1558
        %v1901 = vmax.f32 %v1068, %v1814
        %v1902 = vmax.f32 %v1069, %v1559
        %v1903 = vmax.f32 %v1070, %v1815
        %v1904 = vmax.f32 %v1071, %v1560
        %v1905 = vmax.f32 %v1072, %v1816
        %v1906 = vmax.f32 %v1073, %v1561
        %v1907 = vmax.f32 %v1074, %v1817
        %v1908 = vmax.f32 %v1075, %v1562
        %v1909 = vmax.f32 %v1076, %v1818
        %v1910 = vmax.f32 %v1077, %v1563
        %v1911 = vmax.f32 %v1078, %v1819
        %v1912 = vmax.f32 %v1079, %v1564
        %v1913 = vmax.f32 %v1080, %v1820
        %v1914 = vmax.f32 %v1081, %v1565
        %v1915 = vmax.f32 %v1082, %v1821
        %v1916 = vmax.f32 %v1083, %v1566
        %v1917 = vmax.f32 %v1084, %v1822
        %v1918 = vmax.f32 %v1085, %v1567
        %v1919 = vmax.f32 %v1086, %v1823
        %v1920 = vmax.f32 %v1087, %v1568
        %v1921 = vmax.f32 %v1088, %v1824
        %v1922 = vmax.f32 %v1089, %v1569
        %v1923 = vmax.f32 %v1090, %v1825
        %v1924 = vmax.f32 %v1091, %v1570
        %v1925 = vmax.f32 %v1092, %v1826
        %v1926 = vmax.f32 %v1093, %v1571
        %v1927 = vmax.f32 %v1094, %v1827
        %v1928 = vmax.f32 %v1095, %v1572
        %v1929 = vmax.f32 %v1096, %v1828
        %v1930 = vmax.f32 %v1097, %v1573
        %v1931 = vmax.f32 %v1098, %v1829
        %v1932 = vmax.f32 %v1099, %v1574
        %v1933 = vmax.f32 %v1100, %v1830
        %v1934 = vmax.f32 %v1101, %v1575
        %v1935 = vmax.f32 %v1102, %v1831
        %v1936 = vmax.f32 %v1103, %v1576
        %v1937 = vmax.f32 %v1104, %v1832
        %v1938 = vmax.f32 %v1105, %v1577
        %v1939 = vmax.f32 %v1106, %v1833
        %v1940 = vmax.f32 %v1107, %v1578
        %v1941 = vmax.f32 %v1108, %v1834
        %v1942 = vmax.f32 %v1109, %v1579
        %v1943 = vmax.f32 %v1110, %v1835
        %v1944 = vmax.f32 %v1111, %v1580
        %v1945 = vmax.f32 %v1112, %v1836
        %v1946 = vmax.f32 %v1113, %v1581
        %v1947 = vmax.f32 %v1114, %v1837
        %v1948 = vmax.f32 %v1115, %v1582
        %v1949 = vmax.f32 %v1116, %v1838
        %v1950 = vmax.f32 %v1117, %v1583
        %v1951 = vmax.f32 %v1118, %v1839
        %v1952 = vmax.f32 %v1119, %v1584
        %v1953 = vmax.f32 %v1120, %v1840
        %v1954 = vmax.f32 %v1121, %v1585
        %v1955 = vmax.f32 %v1122, %v1841
        %v1956 = vmax.f32 %v1123, %v1586
        %v1957 = vmax.f32 %v1124, %v1842
        %v1958 = vmax.f32 %v1125, %v1587
        %v1959 = vmax.f32 %v1126, %v1843
        %v1960 = vmax.f32 %v1127, %v1588
        %v1961 = vmax.f32 %v1128, %v1844
        %v1962 = vmax.f32 %v1129, %v1589
        %v1963 = vmax.f32 %v1130, %v1845
        %v1964 = vmax.f32 %v1131, %v1590
        %v1965 = vmax.f32 %v1132, %v1846
        %v1966 = vmax.f32 %v1133, %v1591
        %v1967 = vmax.f32 %v1134, %v1847
        %v1968 = vmax.f32 %v1135, %v1592
        %v1969 = vmax.f32 %v1136, %v1848
        %v1970 = vmax.f32 %v1137, %v1593
        %v1971 = vmax.f32 %v1138, %v1849
        %v1972 = vmax.f32 %v1139, %v1594
        %v1973 = vmax.f32 %v1140, %v1850
        %v1974 = vmax.f32 %v1141, %v1595
        %v1975 = vmax.f32 %v1142, %v1851
        %v1976 = vmax.f32 %v1143, %v1596
        %v1977 = vmax.f32 %v1144, %v1852
        %v1978 = vmax.f32 %v1145, %v1597
        %v1979 = vmax.f32 %v1146, %v1853
        %v1980 = vmax.f32 %v1147, %v1598
        %v1981 = vmax.f32 %v1148, %v1854
        %v1982 = vmax.f32 %v1149, %v1599
        %v1983 = vmax.f32 %v1150, %v1855
        %v1984 = vld [vmem:[%s3] sm:$0xff]
        %v1985 = vld [vmem:[%s3 + $0x8] sm:$0xff]
        %v1986 = vld [vmem:[%s3 + $0x10] sm:$0xff]
        %v1987 = vld [vmem:[%s3 + $0x18] sm:$0xff]
        %v1988 = vld [vmem:[%s3 + $0x20] sm:$0xff]
        %v1989 = vld [vmem:[%s3 + $0x28] sm:$0xff]
        %v1990 = vld [vmem:[%s3 + $0x30] sm:$0xff]
        %v1991 = vld [vmem:[%s3 + $0x38] sm:$0xff]
        %v1992 = vld [vmem:[%s3 + $0x40] sm:$0xff]
        %v1993 = vld [vmem:[%s3 + $0x48] sm:$0xff]
        %v1994 = vld [vmem:[%s3 + $0x50] sm:$0xff]
        %v1995 = vld [vmem:[%s3 + $0x58] sm:$0xff]
        %v1996 = vld [vmem:[%s3 + $0x60] sm:$0xff]
        %v1997 = vld [vmem:[%s3 + $0x68] sm:$0xff]
        %v1998 = vld [vmem:[%s3 + $0x70] sm:$0xff]
        %v1999 = vld [vmem:[%s3 + $0x78] sm:$0xff]
        %v2000 = vld [vmem:[%s3 + $0x80] sm:$0xff]
        %v2001 = vld [vmem:[%s3 + $0x88] sm:$0xff]
        %v2002 = vld [vmem:[%s3 + $0x90] sm:$0xff]
        %v2003 = vld [vmem:[%s3 + $0x98] sm:$0xff]
        %v2004 = vld [vmem:[%s3 + $0xa0] sm:$0xff]
        %v2005 = vld [vmem:[%s3 + $0xa8] sm:$0xff]
        %v2006 = vld [vmem:[%s3 + $0xb0] sm:$0xff]
        %v2007 = vld [vmem:[%s3 + $0xb8] sm:$0xff]
        %v2008 = vld [vmem:[%s3 + $0xc0] sm:$0xff]
        %v2009 = vld [vmem:[%s3 + $0xc8] sm:$0xff]
        %v2010 = vld [vmem:[%s3 + $0xd0] sm:$0xff]
        %v2011 = vld [vmem:[%s3 + $0xd8] sm:$0xff]
        %v2012 = vld [vmem:[%s3 + $0xe0] sm:$0xff]
        %v2013 = vld [vmem:[%s3 + $0xe8] sm:$0xff]
        %v2014 = vld [vmem:[%s3 + $0xf0] sm:$0xff]
        %v2015 = vld [vmem:[%s3 + $0xf8] sm:$0xff]
        %v2016 = vld [vmem:[%s3 + $0x100] sm:$0xff]
        %v2017 = vld [vmem:[%s3 + $0x108] sm:$0xff]
        %v2018 = vld [vmem:[%s3 + $0x110] sm:$0xff]
        %v2019 = vld [vmem:[%s3 + $0x118] sm:$0xff]
        %v2020 = vld [vmem:[%s3 + $0x120] sm:$0xff]
        %v2021 = vld [vmem:[%s3 + $0x128] sm:$0xff]
        %v2022 = vld [vmem:[%s3 + $0x130] sm:$0xff]
        %v2023 = vld [vmem:[%s3 + $0x138] sm:$0xff]
        %v2024 = vld [vmem:[%s3 + $0x140] sm:$0xff]
        %v2025 = vld [vmem:[%s3 + $0x148] sm:$0xff]
        %v2026 = vld [vmem:[%s3 + $0x150] sm:$0xff]
        %v2027 = vld [vmem:[%s3 + $0x158] sm:$0xff]
        %v2028 = vld [vmem:[%s3 + $0x160] sm:$0xff]
        %v2029 = vld [vmem:[%s3 + $0x168] sm:$0xff]
        %v2030 = vld [vmem:[%s3 + $0x170] sm:$0xff]
        %v2031 = vld [vmem:[%s3 + $0x178] sm:$0xff]
        %v2032 = vld [vmem:[%s3 + $0x180] sm:$0xff]
        %v2033 = vld [vmem:[%s3 + $0x188] sm:$0xff]
        %v2034 = vld [vmem:[%s3 + $0x190] sm:$0xff]
        %v2035 = vld [vmem:[%s3 + $0x198] sm:$0xff]
        %v2036 = vld [vmem:[%s3 + $0x1a0] sm:$0xff]
        %v2037 = vld [vmem:[%s3 + $0x1a8] sm:$0xff]
        %v2038 = vld [vmem:[%s3 + $0x1b0] sm:$0xff]
        %v2039 = vld [vmem:[%s3 + $0x1b8] sm:$0xff]
        %v2040 = vld [vmem:[%s3 + $0x1c0] sm:$0xff]
        %v2041 = vld [vmem:[%s3 + $0x1c8] sm:$0xff]
        %v2042 = vld [vmem:[%s3 + $0x1d0] sm:$0xff]
        %v2043 = vld [vmem:[%s3 + $0x1d8] sm:$0xff]
        %v2044 = vld [vmem:[%s3 + $0x1e0] sm:$0xff]
        %v2045 = vld [vmem:[%s3 + $0x1e8] sm:$0xff]
        %v2046 = vld [vmem:[%s3 + $0x1f0] sm:$0xff]
        %v2047 = vld [vmem:[%s3 + $0x1f8] sm:$0xff]
        %v2048 = vld [vmem:[%s4] sm:$0x3]
        %v2050 = vperm.slane %v2048, 0
        %v2051 = vperm.slane %v2048, 1
        %2054 = vmatpush.msra.mxu0 %v2014
        %2055 = vmatpush.msra.mxu0 %v2012
        %2056 = vmatpush.msra.mxu0 %v2010
        %2057 = vmatpush.msra.mxu0 %v2008
        %2058 = vmatpush.msra.mxu0 %v2006
        %2059 = vmatpush.msra.mxu0 %v2004
        %2060 = vmatpush.msra.mxu0 %v2002
        %2061 = vmatpush.msra.mxu0 %v2000
        %2062 = vmatpush.msra.mxu0 %v1998
        %2063 = vmatpush.msra.mxu0 %v1996
        %2064 = vmatpush.msra.mxu0 %v1994
        %2065 = vmatpush.msra.mxu0 %v1992
        %2066 = vmatpush.msra.mxu0 %v1990
        %2067 = vmatpush.msra.mxu0 %v1988
        %2068 = vmatpush.msra.mxu0 %v1986
        %2069 = vmatpush.msra.mxu0 %v1984
        %2070 = vmatmul.f32.gmra.mxu0 %v1856
        %v2071 = vpop.f32.mrf.mxu0
        %v2072 = vadd.f32 %v2050, %v2071
        %2073 = vmatmul.f32.gmra.mxu0 %v1858
        %v2074 = vpop.f32.mrf.mxu0
        %v2075 = vadd.f32 %v2050, %v2074
        %2076 = vmatmul.f32.gmra.mxu0 %v1860
        %v2077 = vpop.f32.mrf.mxu0
        %v2078 = vadd.f32 %v2050, %v2077
        %2079 = vmatmul.f32.gmra.mxu0 %v1862
        %v2080 = vpop.f32.mrf.mxu0
        %v2081 = vadd.f32 %v2050, %v2080
        %2082 = vmatmul.f32.gmra.mxu0 %v1864
        %v2083 = vpop.f32.mrf.mxu0
        %v2084 = vadd.f32 %v2050, %v2083
        %2085 = vmatmul.f32.gmra.mxu0 %v1866
        %v2086 = vpop.f32.mrf.mxu0
        %v2087 = vadd.f32 %v2050, %v2086
        %2088 = vmatmul.f32.gmra.mxu0 %v1868
        %v2089 = vpop.f32.mrf.mxu0
        %v2090 = vadd.f32 %v2050, %v2089
        %2091 = vmatmul.f32.gmra.mxu0 %v1870
        %v2092 = vpop.f32.mrf.mxu0
        %v2093 = vadd.f32 %v2050, %v2092
        %2094 = vmatmul.f32.gmra.mxu0 %v1872
        %v2095 = vpop.f32.mrf.mxu0
        %v2096 = vadd.f32 %v2050, %v2095
        %2097 = vmatmul.f32.gmra.mxu0 %v1874
        %v2098 = vpop.f32.mrf.mxu0
        %v2099 = vadd.f32 %v2050, %v2098
        %2100 = vmatmul.f32.gmra.mxu0 %v1876
        %v2101 = vpop.f32.mrf.mxu0
        %v2102 = vadd.f32 %v2050, %v2101
        %2103 = vmatmul.f32.gmra.mxu0 %v1878
        %v2104 = vpop.f32.mrf.mxu0
        %v2105 = vadd.f32 %v2050, %v2104
        %2106 = vmatmul.f32.gmra.mxu0 %v1880
        %v2107 = vpop.f32.mrf.mxu0
        %v2108 = vadd.f32 %v2050, %v2107
        %2109 = vmatmul.f32.gmra.mxu0 %v1882
        %v2110 = vpop.f32.mrf.mxu0
        %v2111 = vadd.f32 %v2050, %v2110
        %2112 = vmatmul.f32.gmra.mxu0 %v1884
        %v2113 = vpop.f32.mrf.mxu0
        %v2114 = vadd.f32 %v2050, %v2113
        %2115 = vmatmul.f32.gmra.mxu0 %v1886
        %v2116 = vpop.f32.mrf.mxu0
        %v2117 = vadd.f32 %v2050, %v2116
        %2118 = vmatmul.f32.gmra.mxu0 %v1888
        %v2119 = vpop.f32.mrf.mxu0
        %v2120 = vadd.f32 %v2050, %v2119
        %2121 = vmatmul.f32.gmra.mxu0 %v1890
        %v2122 = vpop.f32.mrf.mxu0
        %v2123 = vadd.f32 %v2050, %v2122
        %2124 = vmatmul.f32.gmra.mxu0 %v1892
        %v2125 = vpop.f32.mrf.mxu0
        %v2126 = vadd.f32 %v2050, %v2125
        %2127 = vmatmul.f32.gmra.mxu0 %v1894
        %v2128 = vpop.f32.mrf.mxu0
        %v2129 = vadd.f32 %v2050, %v2128
        %2130 = vmatmul.f32.gmra.mxu0 %v1896
        %v2131 = vpop.f32.mrf.mxu0
        %v2132 = vadd.f32 %v2050, %v2131
        %2133 = vmatmul.f32.gmra.mxu0 %v1898
        %v2134 = vpop.f32.mrf.mxu0
        %v2135 = vadd.f32 %v2050, %v2134
        %2136 = vmatmul.f32.gmra.mxu0 %v1900
        %v2137 = vpop.f32.mrf.mxu0
        %v2138 = vadd.f32 %v2050, %v2137
        %2139 = vmatmul.f32.gmra.mxu0 %v1902
        %v2140 = vpop.f32.mrf.mxu0
        %v2141 = vadd.f32 %v2050, %v2140
        %2142 = vmatmul.f32.gmra.mxu0 %v1904
        %v2143 = vpop.f32.mrf.mxu0
        %v2144 = vadd.f32 %v2050, %v2143
        %2145 = vmatmul.f32.gmra.mxu0 %v1906
        %v2146 = vpop.f32.mrf.mxu0
        %v2147 = vadd.f32 %v2050, %v2146
        %2148 = vmatmul.f32.gmra.mxu0 %v1908
        %v2149 = vpop.f32.mrf.mxu0
        %v2150 = vadd.f32 %v2050, %v2149
        %2151 = vmatmul.f32.gmra.mxu0 %v1910
        %v2152 = vpop.f32.mrf.mxu0
        %v2153 = vadd.f32 %v2050, %v2152
        %2154 = vmatmul.f32.gmra.mxu0 %v1912
        %v2155 = vpop.f32.mrf.mxu0
        %v2156 = vadd.f32 %v2050, %v2155
        %2157 = vmatmul.f32.gmra.mxu0 %v1914
        %v2158 = vpop.f32.mrf.mxu0
        %v2159 = vadd.f32 %v2050, %v2158
        %2160 = vmatmul.f32.gmra.mxu0 %v1916
        %v2161 = vpop.f32.mrf.mxu0
        %v2162 = vadd.f32 %v2050, %v2161
        %2163 = vmatmul.f32.gmra.mxu0 %v1918
        %v2164 = vpop.f32.mrf.mxu0
        %v2165 = vadd.f32 %v2050, %v2164
        %2166 = vmatmul.f32.gmra.mxu0 %v1920
        %v2167 = vpop.f32.mrf.mxu0
        %v2168 = vadd.f32 %v2050, %v2167
        %2169 = vmatmul.f32.gmra.mxu0 %v1922
        %v2170 = vpop.f32.mrf.mxu0
        %v2171 = vadd.f32 %v2050, %v2170
        %2172 = vmatmul.f32.gmra.mxu0 %v1924
        %v2173 = vpop.f32.mrf.mxu0
        %v2174 = vadd.f32 %v2050, %v2173
        %2175 = vmatmul.f32.gmra.mxu0 %v1926
        %v2176 = vpop.f32.mrf.mxu0
        %v2177 = vadd.f32 %v2050, %v2176
        %2178 = vmatmul.f32.gmra.mxu0 %v1928
        %v2179 = vpop.f32.mrf.mxu0
        %v2180 = vadd.f32 %v2050, %v2179
        %2181 = vmatmul.f32.gmra.mxu0 %v1930
        %v2182 = vpop.f32.mrf.mxu0
        %v2183 = vadd.f32 %v2050, %v2182
        %2184 = vmatmul.f32.gmra.mxu0 %v1932
        %v2185 = vpop.f32.mrf.mxu0
        %v2186 = vadd.f32 %v2050, %v2185
        %2187 = vmatmul.f32.gmra.mxu0 %v1934
        %v2188 = vpop.f32.mrf.mxu0
        %v2189 = vadd.f32 %v2050, %v2188
        %2190 = vmatmul.f32.gmra.mxu0 %v1936
        %v2191 = vpop.f32.mrf.mxu0
        %v2192 = vadd.f32 %v2050, %v2191
        %2193 = vmatmul.f32.gmra.mxu0 %v1938
        %v2194 = vpop.f32.mrf.mxu0
        %v2195 = vadd.f32 %v2050, %v2194
        %2196 = vmatmul.f32.gmra.mxu0 %v1940
        %v2197 = vpop.f32.mrf.mxu0
        %v2198 = vadd.f32 %v2050, %v2197
        %2199 = vmatmul.f32.gmra.mxu0 %v1942
        %v2200 = vpop.f32.mrf.mxu0
        %v2201 = vadd.f32 %v2050, %v2200
        %2202 = vmatmul.f32.gmra.mxu0 %v1944
        %v2203 = vpop.f32.mrf.mxu0
        %v2204 = vadd.f32 %v2050, %v2203
        %2205 = vmatmul.f32.gmra.mxu0 %v1946
        %v2206 = vpop.f32.mrf.mxu0
        %v2207 = vadd.f32 %v2050, %v2206
        %2208 = vmatmul.f32.gmra.mxu0 %v1948
        %v2209 = vpop.f32.mrf.mxu0
        %v2210 = vadd.f32 %v2050, %v2209
        %2211 = vmatmul.f32.gmra.mxu0 %v1950
        %v2212 = vpop.f32.mrf.mxu0
        %v2213 = vadd.f32 %v2050, %v2212
        %2214 = vmatmul.f32.gmra.mxu0 %v1952
        %v2215 = vpop.f32.mrf.mxu0
        %v2216 = vadd.f32 %v2050, %v2215
        %2217 = vmatmul.f32.gmra.mxu0 %v1954
        %v2218 = vpop.f32.mrf.mxu0
        %v2219 = vadd.f32 %v2050, %v2218
        %2220 = vmatmul.f32.gmra.mxu0 %v1956
        %v2221 = vpop.f32.mrf.mxu0
        %v2222 = vadd.f32 %v2050, %v2221
        %2223 = vmatmul.f32.gmra.mxu0 %v1958
        %v2224 = vpop.f32.mrf.mxu0
        %v2225 = vadd.f32 %v2050, %v2224
        %2226 = vmatmul.f32.gmra.mxu0 %v1960
        %v2227 = vpop.f32.mrf.mxu0
        %v2228 = vadd.f32 %v2050, %v2227
        %2229 = vmatmul.f32.gmra.mxu0 %v1962
        %v2230 = vpop.f32.mrf.mxu0
        %v2231 = vadd.f32 %v2050, %v2230
        %2232 = vmatmul.f32.gmra.mxu0 %v1964
        %v2233 = vpop.f32.mrf.mxu0
        %v2234 = vadd.f32 %v2050, %v2233
        %2235 = vmatmul.f32.gmra.mxu0 %v1966
        %v2236 = vpop.f32.mrf.mxu0
        %v2237 = vadd.f32 %v2050, %v2236
        %2238 = vmatmul.f32.gmra.mxu0 %v1968
        %v2239 = vpop.f32.mrf.mxu0
        %v2240 = vadd.f32 %v2050, %v2239
        %2241 = vmatmul.f32.gmra.mxu0 %v1970
        %v2242 = vpop.f32.mrf.mxu0
        %v2243 = vadd.f32 %v2050, %v2242
        %2244 = vmatmul.f32.gmra.mxu0 %v1972
        %v2245 = vpop.f32.mrf.mxu0
        %v2246 = vadd.f32 %v2050, %v2245
        %2247 = vmatmul.f32.gmra.mxu0 %v1974
        %v2248 = vpop.f32.mrf.mxu0
        %v2249 = vadd.f32 %v2050, %v2248
        %2250 = vmatmul.f32.gmra.mxu0 %v1976
        %v2251 = vpop.f32.mrf.mxu0
        %v2252 = vadd.f32 %v2050, %v2251
        %2253 = vmatmul.f32.gmra.mxu0 %v1978
        %v2254 = vpop.f32.mrf.mxu0
        %v2255 = vadd.f32 %v2050, %v2254
        %2256 = vmatmul.f32.gmra.mxu0 %v1980
        %v2257 = vpop.f32.mrf.mxu0
        %v2258 = vadd.f32 %v2050, %v2257
        %2259 = vmatmul.f32.gmra.mxu0 %v1982
        %v2260 = vpop.f32.mrf.mxu0
        %v2261 = vadd.f32 %v2050, %v2260
        %2262 = vdwg.mxu0
        %2263 = vmatpush.msra.mxu0 %v2046
        %2264 = vmatpush.msra.mxu0 %v2044
        %2265 = vmatpush.msra.mxu0 %v2042
        %2266 = vmatpush.msra.mxu0 %v2040
        %2267 = vmatpush.msra.mxu0 %v2038
        %2268 = vmatpush.msra.mxu0 %v2036
        %2269 = vmatpush.msra.mxu0 %v2034
        %2270 = vmatpush.msra.mxu0 %v2032
        %2271 = vmatpush.msra.mxu0 %v2030
        %2272 = vmatpush.msra.mxu0 %v2028
        %2273 = vmatpush.msra.mxu0 %v2026
        %2274 = vmatpush.msra.mxu0 %v2024
        %2275 = vmatpush.msra.mxu0 %v2022
        %2276 = vmatpush.msra.mxu0 %v2020
        %2277 = vmatpush.msra.mxu0 %v2018
        %2278 = vmatpush.msra.mxu0 %v2016
        %2279 = vmatmul.f32.gmra.mxu0 %v1857
        %v2280 = vpop.f32.mrf.mxu0
        %v2281 = vadd.f32 %v2072, %v2280
        %2282 = vmatmul.f32.gmra.mxu0 %v1859
        %v2283 = vpop.f32.mrf.mxu0
        %v2284 = vadd.f32 %v2075, %v2283
        %2285 = vmatmul.f32.gmra.mxu0 %v1861
        %v2286 = vpop.f32.mrf.mxu0
        %v2287 = vadd.f32 %v2078, %v2286
        %2288 = vmatmul.f32.gmra.mxu0 %v1863
        %v2289 = vpop.f32.mrf.mxu0
        %v2290 = vadd.f32 %v2081, %v2289
        %2291 = vmatmul.f32.gmra.mxu0 %v1865
        %v2292 = vpop.f32.mrf.mxu0
        %v2293 = vadd.f32 %v2084, %v2292
        %2294 = vmatmul.f32.gmra.mxu0 %v1867
        %v2295 = vpop.f32.mrf.mxu0
        %v2296 = vadd.f32 %v2087, %v2295
        %2297 = vmatmul.f32.gmra.mxu0 %v1869
        %v2298 = vpop.f32.mrf.mxu0
        %v2299 = vadd.f32 %v2090, %v2298
        %2300 = vmatmul.f32.gmra.mxu0 %v1871
        %v2301 = vpop.f32.mrf.mxu0
        %v2302 = vadd.f32 %v2093, %v2301
        %2303 = vmatmul.f32.gmra.mxu0 %v1873
        %v2304 = vpop.f32.mrf.mxu0
        %v2305 = vadd.f32 %v2096, %v2304
        %2306 = vmatmul.f32.gmra.mxu0 %v1875
        %v2307 = vpop.f32.mrf.mxu0
        %v2308 = vadd.f32 %v2099, %v2307
        %2309 = vmatmul.f32.gmra.mxu0 %v1877
        %v2310 = vpop.f32.mrf.mxu0
        %v2311 = vadd.f32 %v2102, %v2310
        %2312 = vmatmul.f32.gmra.mxu0 %v1879
        %v2313 = vpop.f32.mrf.mxu0
        %v2314 = vadd.f32 %v2105, %v2313
        %2315 = vmatmul.f32.gmra.mxu0 %v1881
        %v2316 = vpop.f32.mrf.mxu0
        %v2317 = vadd.f32 %v2108, %v2316
        %2318 = vmatmul.f32.gmra.mxu0 %v1883
        %v2319 = vpop.f32.mrf.mxu0
        %v2320 = vadd.f32 %v2111, %v2319
        %2321 = vmatmul.f32.gmra.mxu0 %v1885
        %v2322 = vpop.f32.mrf.mxu0
        %v2323 = vadd.f32 %v2114, %v2322
        %2324 = vmatmul.f32.gmra.mxu0 %v1887
        %v2325 = vpop.f32.mrf.mxu0
        %v2326 = vadd.f32 %v2117, %v2325
        %2327 = vmatmul.f32.gmra.mxu0 %v1889
        %v2328 = vpop.f32.mrf.mxu0
        %v2329 = vadd.f32 %v2120, %v2328
        %2330 = vmatmul.f32.gmra.mxu0 %v1891
        %v2331 = vpop.f32.mrf.mxu0
        %v2332 = vadd.f32 %v2123, %v2331
        %2333 = vmatmul.f32.gmra.mxu0 %v1893
        %v2334 = vpop.f32.mrf.mxu0
        %v2335 = vadd.f32 %v2126, %v2334
        %2336 = vmatmul.f32.gmra.mxu0 %v1895
        %v2337 = vpop.f32.mrf.mxu0
        %v2338 = vadd.f32 %v2129, %v2337
        %2339 = vmatmul.f32.gmra.mxu0 %v1897
        %v2340 = vpop.f32.mrf.mxu0
        %v2341 = vadd.f32 %v2132, %v2340
        %2342 = vmatmul.f32.gmra.mxu0 %v1899
        %v2343 = vpop.f32.mrf.mxu0
        %v2344 = vadd.f32 %v2135, %v2343
        %2345 = vmatmul.f32.gmra.mxu0 %v1901
        %v2346 = vpop.f32.mrf.mxu0
        %v2347 = vadd.f32 %v2138, %v2346
        %2348 = vmatmul.f32.gmra.mxu0 %v1903
        %v2349 = vpop.f32.mrf.mxu0
        %v2350 = vadd.f32 %v2141, %v2349
        %2351 = vmatmul.f32.gmra.mxu0 %v1905
        %v2352 = vpop.f32.mrf.mxu0
        %v2353 = vadd.f32 %v2144, %v2352
        %2354 = vmatmul.f32.gmra.mxu0 %v1907
        %v2355 = vpop.f32.mrf.mxu0
        %v2356 = vadd.f32 %v2147, %v2355
        %2357 = vmatmul.f32.gmra.mxu0 %v1909
        %v2358 = vpop.f32.mrf.mxu0
        %v2359 = vadd.f32 %v2150, %v2358
        %2360 = vmatmul.f32.gmra.mxu0 %v1911
        %v2361 = vpop.f32.mrf.mxu0
        %v2362 = vadd.f32 %v2153, %v2361
        %2363 = vmatmul.f32.gmra.mxu0 %v1913
        %v2364 = vpop.f32.mrf.mxu0
        %v2365 = vadd.f32 %v2156, %v2364
        %2366 = vmatmul.f32.gmra.mxu0 %v1915
        %v2367 = vpop.f32.mrf.mxu0
        %v2368 = vadd.f32 %v2159, %v2367
        %2369 = vmatmul.f32.gmra.mxu0 %v1917
        %v2370 = vpop.f32.mrf.mxu0
        %v2371 = vadd.f32 %v2162, %v2370
        %2372 = vmatmul.f32.gmra.mxu0 %v1919
        %v2373 = vpop.f32.mrf.mxu0
        %v2374 = vadd.f32 %v2165, %v2373
        %2375 = vmatmul.f32.gmra.mxu0 %v1921
        %v2376 = vpop.f32.mrf.mxu0
        %v2377 = vadd.f32 %v2168, %v2376
        %2378 = vmatmul.f32.gmra.mxu0 %v1923
        %v2379 = vpop.f32.mrf.mxu0
        %v2380 = vadd.f32 %v2171, %v2379
        %2381 = vmatmul.f32.gmra.mxu0 %v1925
        %v2382 = vpop.f32.mrf.mxu0
        %v2383 = vadd.f32 %v2174, %v2382
        %2384 = vmatmul.f32.gmra.mxu0 %v1927
        %v2385 = vpop.f32.mrf.mxu0
        %v2386 = vadd.f32 %v2177, %v2385
        %2387 = vmatmul.f32.gmra.mxu0 %v1929
        %v2388 = vpop.f32.mrf.mxu0
        %v2389 = vadd.f32 %v2180, %v2388
        %2390 = vmatmul.f32.gmra.mxu0 %v1931
        %v2391 = vpop.f32.mrf.mxu0
        %v2392 = vadd.f32 %v2183, %v2391
        %2393 = vmatmul.f32.gmra.mxu0 %v1933
        %v2394 = vpop.f32.mrf.mxu0
        %v2395 = vadd.f32 %v2186, %v2394
        %2396 = vmatmul.f32.gmra.mxu0 %v1935
        %v2397 = vpop.f32.mrf.mxu0
        %v2398 = vadd.f32 %v2189, %v2397
        %2399 = vmatmul.f32.gmra.mxu0 %v1937
        %v2400 = vpop.f32.mrf.mxu0
        %v2401 = vadd.f32 %v2192, %v2400
        %2402 = vmatmul.f32.gmra.mxu0 %v1939
        %v2403 = vpop.f32.mrf.mxu0
        %v2404 = vadd.f32 %v2195, %v2403
        %2405 = vmatmul.f32.gmra.mxu0 %v1941
        %v2406 = vpop.f32.mrf.mxu0
        %v2407 = vadd.f32 %v2198, %v2406
        %2408 = vmatmul.f32.gmra.mxu0 %v1943
        %v2409 = vpop.f32.mrf.mxu0
        %v2410 = vadd.f32 %v2201, %v2409
        %2411 = vmatmul.f32.gmra.mxu0 %v1945
        %v2412 = vpop.f32.mrf.mxu0
        %v2413 = vadd.f32 %v2204, %v2412
        %2414 = vmatmul.f32.gmra.mxu0 %v1947
        %v2415 = vpop.f32.mrf.mxu0
        %v2416 = vadd.f32 %v2207, %v2415
        %2417 = vmatmul.f32.gmra.mxu0 %v1949
        %v2418 = vpop.f32.mrf.mxu0
        %v2419 = vadd.f32 %v2210, %v2418
        %2420 = vmatmul.f32.gmra.mxu0 %v1951
        %v2421 = vpop.f32.mrf.mxu0
        %v2422 = vadd.f32 %v2213, %v2421
        %2423 = vmatmul.f32.gmra.mxu0 %v1953
        %v2424 = vpop.f32.mrf.mxu0
        %v2425 = vadd.f32 %v2216, %v2424
        %2426 = vmatmul.f32.gmra.mxu0 %v1955
        %v2427 = vpop.f32.mrf.mxu0
        %v2428 = vadd.f32 %v2219, %v2427
        %2429 = vmatmul.f32.gmra.mxu0 %v1957
        %v2430 = vpop.f32.mrf.mxu0
        %v2431 = vadd.f32 %v2222, %v2430
        %2432 = vmatmul.f32.gmra.mxu0 %v1959
        %v2433 = vpop.f32.mrf.mxu0
        %v2434 = vadd.f32 %v2225, %v2433
        %2435 = vmatmul.f32.gmra.mxu0 %v1961
        %v2436 = vpop.f32.mrf.mxu0
        %v2437 = vadd.f32 %v2228, %v2436
        %2438 = vmatmul.f32.gmra.mxu0 %v1963
        %v2439 = vpop.f32.mrf.mxu0
        %v2440 = vadd.f32 %v2231, %v2439
        %2441 = vmatmul.f32.gmra.mxu0 %v1965
        %v2442 = vpop.f32.mrf.mxu0
        %v2443 = vadd.f32 %v2234, %v2442
        %2444 = vmatmul.f32.gmra.mxu0 %v1967
        %v2445 = vpop.f32.mrf.mxu0
        %v2446 = vadd.f32 %v2237, %v2445
        %2447 = vmatmul.f32.gmra.mxu0 %v1969
        %v2448 = vpop.f32.mrf.mxu0
        %v2449 = vadd.f32 %v2240, %v2448
        %2450 = vmatmul.f32.gmra.mxu0 %v1971
        %v2451 = vpop.f32.mrf.mxu0
        %v2452 = vadd.f32 %v2243, %v2451
        %2453 = vmatmul.f32.gmra.mxu0 %v1973
        %v2454 = vpop.f32.mrf.mxu0
        %v2455 = vadd.f32 %v2246, %v2454
        %2456 = vmatmul.f32.gmra.mxu0 %v1975
        %v2457 = vpop.f32.mrf.mxu0
        %v2458 = vadd.f32 %v2249, %v2457
        %2459 = vmatmul.f32.gmra.mxu0 %v1977
        %v2460 = vpop.f32.mrf.mxu0
        %v2461 = vadd.f32 %v2252, %v2460
        %2462 = vmatmul.f32.gmra.mxu0 %v1979
        %v2463 = vpop.f32.mrf.mxu0
        %v2464 = vadd.f32 %v2255, %v2463
        %2465 = vmatmul.f32.gmra.mxu0 %v1981
        %v2466 = vpop.f32.mrf.mxu0
        %v2467 = vadd.f32 %v2258, %v2466
        %2468 = vmatmul.f32.gmra.mxu0 %v1983
        %v2469 = vpop.f32.mrf.mxu0
        %v2470 = vadd.f32 %v2261, %v2469
        %2471 = vdwg.mxu0
        %2472 = vmatpush.msra.mxu0 %v2015
        %2473 = vmatpush.msra.mxu0 %v2013
        %2474 = vmatpush.msra.mxu0 %v2011
        %2475 = vmatpush.msra.mxu0 %v2009
        %2476 = vmatpush.msra.mxu0 %v2007
        %2477 = vmatpush.msra.mxu0 %v2005
        %2478 = vmatpush.msra.mxu0 %v2003
        %2479 = vmatpush.msra.mxu0 %v2001
        %2480 = vmatpush.msra.mxu0 %v1999
        %2481 = vmatpush.msra.mxu0 %v1997
        %2482 = vmatpush.msra.mxu0 %v1995
        %2483 = vmatpush.msra.mxu0 %v1993
        %2484 = vmatpush.msra.mxu0 %v1991
        %2485 = vmatpush.msra.mxu0 %v1989
        %2486 = vmatpush.msra.mxu0 %v1987
        %2487 = vmatpush.msra.mxu0 %v1985
        %2488 = vmatmul.f32.gmra.mxu0 %v1856
        %v2489 = vpop.f32.mrf.mxu0
        %v2490 = vadd.f32 %v2051, %v2489
        %2491 = vmatmul.f32.gmra.mxu0 %v1858
        %v2492 = vpop.f32.mrf.mxu0
        %v2493 = vadd.f32 %v2051, %v2492
        %2494 = vmatmul.f32.gmra.mxu0 %v1860
        %v2495 = vpop.f32.mrf.mxu0
        %v2496 = vadd.f32 %v2051, %v2495
        %2497 = vmatmul.f32.gmra.mxu0 %v1862
        %v2498 = vpop.f32.mrf.mxu0
        %v2499 = vadd.f32 %v2051, %v2498
        %2500 = vmatmul.f32.gmra.mxu0 %v1864
        %v2501 = vpop.f32.mrf.mxu0
        %v2502 = vadd.f32 %v2051, %v2501
        %2503 = vmatmul.f32.gmra.mxu0 %v1866
        %v2504 = vpop.f32.mrf.mxu0
        %v2505 = vadd.f32 %v2051, %v2504
        %2506 = vmatmul.f32.gmra.mxu0 %v1868
        %v2507 = vpop.f32.mrf.mxu0
        %v2508 = vadd.f32 %v2051, %v2507
        %2509 = vmatmul.f32.gmra.mxu0 %v1870
        %v2510 = vpop.f32.mrf.mxu0
        %v2511 = vadd.f32 %v2051, %v2510
        %2512 = vmatmul.f32.gmra.mxu0 %v1872
        %v2513 = vpop.f32.mrf.mxu0
        %v2514 = vadd.f32 %v2051, %v2513
        %2515 = vmatmul.f32.gmra.mxu0 %v1874
        %v2516 = vpop.f32.mrf.mxu0
        %v2517 = vadd.f32 %v2051, %v2516
        %2518 = vmatmul.f32.gmra.mxu0 %v1876
        %v2519 = vpop.f32.mrf.mxu0
        %v2520 = vadd.f32 %v2051, %v2519
        %2521 = vmatmul.f32.gmra.mxu0 %v1878
        %v2522 = vpop.f32.mrf.mxu0
        %v2523 = vadd.f32 %v2051, %v2522
        %2524 = vmatmul.f32.gmra.mxu0 %v1880
        %v2525 = vpop.f32.mrf.mxu0
        %v2526 = vadd.f32 %v2051, %v2525
        %2527 = vmatmul.f32.gmra.mxu0 %v1882
        %v2528 = vpop.f32.mrf.mxu0
        %v2529 = vadd.f32 %v2051, %v2528
        %2530 = vmatmul.f32.gmra.mxu0 %v1884
        %v2531 = vpop.f32.mrf.mxu0
        %v2532 = vadd.f32 %v2051, %v2531
        %2533 = vmatmul.f32.gmra.mxu0 %v1886
        %v2534 = vpop.f32.mrf.mxu0
        %v2535 = vadd.f32 %v2051, %v2534
        %2536 = vmatmul.f32.gmra.mxu0 %v1888
        %v2537 = vpop.f32.mrf.mxu0
        %v2538 = vadd.f32 %v2051, %v2537
        %2539 = vmatmul.f32.gmra.mxu0 %v1890
        %v2540 = vpop.f32.mrf.mxu0
        %v2541 = vadd.f32 %v2051, %v2540
        %2542 = vmatmul.f32.gmra.mxu0 %v1892
        %v2543 = vpop.f32.mrf.mxu0
        %v2544 = vadd.f32 %v2051, %v2543
        %2545 = vmatmul.f32.gmra.mxu0 %v1894
        %v2546 = vpop.f32.mrf.mxu0
        %v2547 = vadd.f32 %v2051, %v2546
        %2548 = vmatmul.f32.gmra.mxu0 %v1896
        %v2549 = vpop.f32.mrf.mxu0
        %v2550 = vadd.f32 %v2051, %v2549
        %2551 = vmatmul.f32.gmra.mxu0 %v1898
        %v2552 = vpop.f32.mrf.mxu0
        %v2553 = vadd.f32 %v2051, %v2552
        %2554 = vmatmul.f32.gmra.mxu0 %v1900
        %v2555 = vpop.f32.mrf.mxu0
        %v2556 = vadd.f32 %v2051, %v2555
        %2557 = vmatmul.f32.gmra.mxu0 %v1902
        %v2558 = vpop.f32.mrf.mxu0
        %v2559 = vadd.f32 %v2051, %v2558
        %2560 = vmatmul.f32.gmra.mxu0 %v1904
        %v2561 = vpop.f32.mrf.mxu0
        %v2562 = vadd.f32 %v2051, %v2561
        %2563 = vmatmul.f32.gmra.mxu0 %v1906
        %v2564 = vpop.f32.mrf.mxu0
        %v2565 = vadd.f32 %v2051, %v2564
        %2566 = vmatmul.f32.gmra.mxu0 %v1908
        %v2567 = vpop.f32.mrf.mxu0
        %v2568 = vadd.f32 %v2051, %v2567
        %2569 = vmatmul.f32.gmra.mxu0 %v1910
        %v2570 = vpop.f32.mrf.mxu0
        %v2571 = vadd.f32 %v2051, %v2570
        %2572 = vmatmul.f32.gmra.mxu0 %v1912
        %v2573 = vpop.f32.mrf.mxu0
        %v2574 = vadd.f32 %v2051, %v2573
        %2575 = vmatmul.f32.gmra.mxu0 %v1914
        %v2576 = vpop.f32.mrf.mxu0
        %v2577 = vadd.f32 %v2051, %v2576
        %2578 = vmatmul.f32.gmra.mxu0 %v1916
        %v2579 = vpop.f32.mrf.mxu0
        %v2580 = vadd.f32 %v2051, %v2579
        %2581 = vmatmul.f32.gmra.mxu0 %v1918
        %v2582 = vpop.f32.mrf.mxu0
        %v2583 = vadd.f32 %v2051, %v2582
        %2584 = vmatmul.f32.gmra.mxu0 %v1920
        %v2585 = vpop.f32.mrf.mxu0
        %v2586 = vadd.f32 %v2051, %v2585
        %2587 = vmatmul.f32.gmra.mxu0 %v1922
        %v2588 = vpop.f32.mrf.mxu0
        %v2589 = vadd.f32 %v2051, %v2588
        %2590 = vmatmul.f32.gmra.mxu0 %v1924
        %v2591 = vpop.f32.mrf.mxu0
        %v2592 = vadd.f32 %v2051, %v2591
        %2593 = vmatmul.f32.gmra.mxu0 %v1926
        %v2594 = vpop.f32.mrf.mxu0
        %v2595 = vadd.f32 %v2051, %v2594
        %2596 = vmatmul.f32.gmra.mxu0 %v1928
        %v2597 = vpop.f32.mrf.mxu0
        %v2598 = vadd.f32 %v2051, %v2597
        %2599 = vmatmul.f32.gmra.mxu0 %v1930
        %v2600 = vpop.f32.mrf.mxu0
        %v2601 = vadd.f32 %v2051, %v2600
        %2602 = vmatmul.f32.gmra.mxu0 %v1932
        %v2603 = vpop.f32.mrf.mxu0
        %v2604 = vadd.f32 %v2051, %v2603
        %2605 = vmatmul.f32.gmra.mxu0 %v1934
        %v2606 = vpop.f32.mrf.mxu0
        %v2607 = vadd.f32 %v2051, %v2606
        %2608 = vmatmul.f32.gmra.mxu0 %v1936
        %v2609 = vpop.f32.mrf.mxu0
        %v2610 = vadd.f32 %v2051, %v2609
        %2611 = vmatmul.f32.gmra.mxu0 %v1938
        %v2612 = vpop.f32.mrf.mxu0
        %v2613 = vadd.f32 %v2051, %v2612
        %2614 = vmatmul.f32.gmra.mxu0 %v1940
        %v2615 = vpop.f32.mrf.mxu0
        %v2616 = vadd.f32 %v2051, %v2615
        %2617 = vmatmul.f32.gmra.mxu0 %v1942
        %v2618 = vpop.f32.mrf.mxu0
        %v2619 = vadd.f32 %v2051, %v2618
        %2620 = vmatmul.f32.gmra.mxu0 %v1944
        %v2621 = vpop.f32.mrf.mxu0
        %v2622 = vadd.f32 %v2051, %v2621
        %2623 = vmatmul.f32.gmra.mxu0 %v1946
        %v2624 = vpop.f32.mrf.mxu0
        %v2625 = vadd.f32 %v2051, %v2624
        %2626 = vmatmul.f32.gmra.mxu0 %v1948
        %v2627 = vpop.f32.mrf.mxu0
        %v2628 = vadd.f32 %v2051, %v2627
        %2629 = vmatmul.f32.gmra.mxu0 %v1950
        %v2630 = vpop.f32.mrf.mxu0
        %v2631 = vadd.f32 %v2051, %v2630
        %2632 = vmatmul.f32.gmra.mxu0 %v1952
        %v2633 = vpop.f32.mrf.mxu0
        %v2634 = vadd.f32 %v2051, %v2633
        %2635 = vmatmul.f32.gmra.mxu0 %v1954
        %v2636 = vpop.f32.mrf.mxu0
        %v2637 = vadd.f32 %v2051, %v2636
        %2638 = vmatmul.f32.gmra.mxu0 %v1956
        %v2639 = vpop.f32.mrf.mxu0
        %v2640 = vadd.f32 %v2051, %v2639
        %2641 = vmatmul.f32.gmra.mxu0 %v1958
        %v2642 = vpop.f32.mrf.mxu0
        %v2643 = vadd.f32 %v2051, %v2642
        %2644 = vmatmul.f32.gmra.mxu0 %v1960
        %v2645 = vpop.f32.mrf.mxu0
        %v2646 = vadd.f32 %v2051, %v2645
        %2647 = vmatmul.f32.gmra.mxu0 %v1962
        %v2648 = vpop.f32.mrf.mxu0
        %v2649 = vadd.f32 %v2051, %v2648
        %2650 = vmatmul.f32.gmra.mxu0 %v1964
        %v2651 = vpop.f32.mrf.mxu0
        %v2652 = vadd.f32 %v2051, %v2651
        %2653 = vmatmul.f32.gmra.mxu0 %v1966
        %v2654 = vpop.f32.mrf.mxu0
        %v2655 = vadd.f32 %v2051, %v2654
        %2656 = vmatmul.f32.gmra.mxu0 %v1968
        %v2657 = vpop.f32.mrf.mxu0
        %v2658 = vadd.f32 %v2051, %v2657
        %2659 = vmatmul.f32.gmra.mxu0 %v1970
        %v2660 = vpop.f32.mrf.mxu0
        %v2661 = vadd.f32 %v2051, %v2660
        %2662 = vmatmul.f32.gmra.mxu0 %v1972
        %v2663 = vpop.f32.mrf.mxu0
        %v2664 = vadd.f32 %v2051, %v2663
        %2665 = vmatmul.f32.gmra.mxu0 %v1974
        %v2666 = vpop.f32.mrf.mxu0
        %v2667 = vadd.f32 %v2051, %v2666
        %2668 = vmatmul.f32.gmra.mxu0 %v1976
        %v2669 = vpop.f32.mrf.mxu0
        %v2670 = vadd.f32 %v2051, %v2669
        %2671 = vmatmul.f32.gmra.mxu0 %v1978
        %v2672 = vpop.f32.mrf.mxu0
        %v2673 = vadd.f32 %v2051, %v2672
        %2674 = vmatmul.f32.gmra.mxu0 %v1980
        %v2675 = vpop.f32.mrf.mxu0
        %v2676 = vadd.f32 %v2051, %v2675
        %2677 = vmatmul.f32.gmra.mxu0 %v1982
        %v2678 = vpop.f32.mrf.mxu0
        %v2679 = vadd.f32 %v2051, %v2678
        %2680 = vdwg.mxu0
        %2681 = vmatpush.msra.mxu0 %v2047
        %2682 = vmatpush.msra.mxu0 %v2045
        %2683 = vmatpush.msra.mxu0 %v2043
        %2684 = vmatpush.msra.mxu0 %v2041
        %2685 = vmatpush.msra.mxu0 %v2039
        %2686 = vmatpush.msra.mxu0 %v2037
        %2687 = vmatpush.msra.mxu0 %v2035
        %2688 = vmatpush.msra.mxu0 %v2033
        %2689 = vmatpush.msra.mxu0 %v2031
        %2690 = vmatpush.msra.mxu0 %v2029
        %2691 = vmatpush.msra.mxu0 %v2027
        %2692 = vmatpush.msra.mxu0 %v2025
        %2693 = vmatpush.msra.mxu0 %v2023
        %2694 = vmatpush.msra.mxu0 %v2021
        %2695 = vmatpush.msra.mxu0 %v2019
        %2696 = vmatpush.msra.mxu0 %v2017
        %2697 = vmatmul.f32.gmra.mxu0 %v1857
        %v2698 = vpop.f32.mrf.mxu0
        %v2699 = vadd.f32 %v2490, %v2698
        %2700 = vmatmul.f32.gmra.mxu0 %v1859
        %v2701 = vpop.f32.mrf.mxu0
        %v2702 = vadd.f32 %v2493, %v2701
        %2703 = vmatmul.f32.gmra.mxu0 %v1861
        %v2704 = vpop.f32.mrf.mxu0
        %v2705 = vadd.f32 %v2496, %v2704
        %2706 = vmatmul.f32.gmra.mxu0 %v1863
        %v2707 = vpop.f32.mrf.mxu0
        %v2708 = vadd.f32 %v2499, %v2707
        %2709 = vmatmul.f32.gmra.mxu0 %v1865
        %v2710 = vpop.f32.mrf.mxu0
        %v2711 = vadd.f32 %v2502, %v2710
        %2712 = vmatmul.f32.gmra.mxu0 %v1867
        %v2713 = vpop.f32.mrf.mxu0
        %v2714 = vadd.f32 %v2505, %v2713
        %2715 = vmatmul.f32.gmra.mxu0 %v1869
        %v2716 = vpop.f32.mrf.mxu0
        %v2717 = vadd.f32 %v2508, %v2716
        %2718 = vmatmul.f32.gmra.mxu0 %v1871
        %v2719 = vpop.f32.mrf.mxu0
        %v2720 = vadd.f32 %v2511, %v2719
        %2721 = vmatmul.f32.gmra.mxu0 %v1873
        %v2722 = vpop.f32.mrf.mxu0
        %v2723 = vadd.f32 %v2514, %v2722
        %2724 = vmatmul.f32.gmra.mxu0 %v1875
        %v2725 = vpop.f32.mrf.mxu0
        %v2726 = vadd.f32 %v2517, %v2725
        %2727 = vmatmul.f32.gmra.mxu0 %v1877
        %v2728 = vpop.f32.mrf.mxu0
        %v2729 = vadd.f32 %v2520, %v2728
        %2730 = vmatmul.f32.gmra.mxu0 %v1879
        %v2731 = vpop.f32.mrf.mxu0
        %v2732 = vadd.f32 %v2523, %v2731
        %2733 = vmatmul.f32.gmra.mxu0 %v1881
        %v2734 = vpop.f32.mrf.mxu0
        %v2735 = vadd.f32 %v2526, %v2734
        %2736 = vmatmul.f32.gmra.mxu0 %v1883
        %v2737 = vpop.f32.mrf.mxu0
        %v2738 = vadd.f32 %v2529, %v2737
        %2739 = vmatmul.f32.gmra.mxu0 %v1885
        %v2740 = vpop.f32.mrf.mxu0
        %v2741 = vadd.f32 %v2532, %v2740
        %2742 = vmatmul.f32.gmra.mxu0 %v1887
        %v2743 = vpop.f32.mrf.mxu0
        %v2744 = vadd.f32 %v2535, %v2743
        %2745 = vmatmul.f32.gmra.mxu0 %v1889
        %v2746 = vpop.f32.mrf.mxu0
        %v2747 = vadd.f32 %v2538, %v2746
        %2748 = vmatmul.f32.gmra.mxu0 %v1891
        %v2749 = vpop.f32.mrf.mxu0
        %v2750 = vadd.f32 %v2541, %v2749
        %2751 = vmatmul.f32.gmra.mxu0 %v1893
        %v2752 = vpop.f32.mrf.mxu0
        %v2753 = vadd.f32 %v2544, %v2752
        %2754 = vmatmul.f32.gmra.mxu0 %v1895
        %v2755 = vpop.f32.mrf.mxu0
        %v2756 = vadd.f32 %v2547, %v2755
        %2757 = vmatmul.f32.gmra.mxu0 %v1897
        %v2758 = vpop.f32.mrf.mxu0
        %v2759 = vadd.f32 %v2550, %v2758
        %2760 = vmatmul.f32.gmra.mxu0 %v1899
        %v2761 = vpop.f32.mrf.mxu0
        %v2762 = vadd.f32 %v2553, %v2761
        %2763 = vmatmul.f32.gmra.mxu0 %v1901
        %v2764 = vpop.f32.mrf.mxu0
        %v2765 = vadd.f32 %v2556, %v2764
        %2766 = vmatmul.f32.gmra.mxu0 %v1903
        %v2767 = vpop.f32.mrf.mxu0
        %v2768 = vadd.f32 %v2559, %v2767
        %2769 = vmatmul.f32.gmra.mxu0 %v1905
        %v2770 = vpop.f32.mrf.mxu0
        %v2771 = vadd.f32 %v2562, %v2770
        %2772 = vmatmul.f32.gmra.mxu0 %v1907
        %v2773 = vpop.f32.mrf.mxu0
        %v2774 = vadd.f32 %v2565, %v2773
        %2775 = vmatmul.f32.gmra.mxu0 %v1909
        %v2776 = vpop.f32.mrf.mxu0
        %v2777 = vadd.f32 %v2568, %v2776
        %2778 = vmatmul.f32.gmra.mxu0 %v1911
        %v2779 = vpop.f32.mrf.mxu0
        %v2780 = vadd.f32 %v2571, %v2779
        %2781 = vmatmul.f32.gmra.mxu0 %v1913
        %v2782 = vpop.f32.mrf.mxu0
        %v2783 = vadd.f32 %v2574, %v2782
        %2784 = vmatmul.f32.gmra.mxu0 %v1915
        %v2785 = vpop.f32.mrf.mxu0
        %v2786 = vadd.f32 %v2577, %v2785
        %2787 = vmatmul.f32.gmra.mxu0 %v1917
        %v2788 = vpop.f32.mrf.mxu0
        %v2789 = vadd.f32 %v2580, %v2788
        %2790 = vmatmul.f32.gmra.mxu0 %v1919
        %v2791 = vpop.f32.mrf.mxu0
        %v2792 = vadd.f32 %v2583, %v2791
        %2793 = vmatmul.f32.gmra.mxu0 %v1921
        %v2794 = vpop.f32.mrf.mxu0
        %v2795 = vadd.f32 %v2586, %v2794
        %2796 = vmatmul.f32.gmra.mxu0 %v1923
        %v2797 = vpop.f32.mrf.mxu0
        %v2798 = vadd.f32 %v2589, %v2797
        %2799 = vmatmul.f32.gmra.mxu0 %v1925
        %v2800 = vpop.f32.mrf.mxu0
        %v2801 = vadd.f32 %v2592, %v2800
        %2802 = vmatmul.f32.gmra.mxu0 %v1927
        %v2803 = vpop.f32.mrf.mxu0
        %v2804 = vadd.f32 %v2595, %v2803
        %2805 = vmatmul.f32.gmra.mxu0 %v1929
        %v2806 = vpop.f32.mrf.mxu0
        %v2807 = vadd.f32 %v2598, %v2806
        %2808 = vmatmul.f32.gmra.mxu0 %v1931
        %v2809 = vpop.f32.mrf.mxu0
        %v2810 = vadd.f32 %v2601, %v2809
        %2811 = vmatmul.f32.gmra.mxu0 %v1933
        %v2812 = vpop.f32.mrf.mxu0
        %v2813 = vadd.f32 %v2604, %v2812
        %2814 = vmatmul.f32.gmra.mxu0 %v1935
        %v2815 = vpop.f32.mrf.mxu0
        %v2816 = vadd.f32 %v2607, %v2815
        %2817 = vmatmul.f32.gmra.mxu0 %v1937
        %v2818 = vpop.f32.mrf.mxu0
        %v2819 = vadd.f32 %v2610, %v2818
        %2820 = vmatmul.f32.gmra.mxu0 %v1939
        %v2821 = vpop.f32.mrf.mxu0
        %v2822 = vadd.f32 %v2613, %v2821
        %2823 = vmatmul.f32.gmra.mxu0 %v1941
        %v2824 = vpop.f32.mrf.mxu0
        %v2825 = vadd.f32 %v2616, %v2824
        %2826 = vmatmul.f32.gmra.mxu0 %v1943
        %v2827 = vpop.f32.mrf.mxu0
        %v2828 = vadd.f32 %v2619, %v2827
        %2829 = vmatmul.f32.gmra.mxu0 %v1945
        %v2830 = vpop.f32.mrf.mxu0
        %v2831 = vadd.f32 %v2622, %v2830
        %2832 = vmatmul.f32.gmra.mxu0 %v1947
        %v2833 = vpop.f32.mrf.mxu0
        %v2834 = vadd.f32 %v2625, %v2833
        %2835 = vmatmul.f32.gmra.mxu0 %v1949
        %v2836 = vpop.f32.mrf.mxu0
        %v2837 = vadd.f32 %v2628, %v2836
        %2838 = vmatmul.f32.gmra.mxu0 %v1951
        %v2839 = vpop.f32.mrf.mxu0
        %v2840 = vadd.f32 %v2631, %v2839
        %2841 = vmatmul.f32.gmra.mxu0 %v1953
        %v2842 = vpop.f32.mrf.mxu0
        %v2843 = vadd.f32 %v2634, %v2842
        %2844 = vmatmul.f32.gmra.mxu0 %v1955
        %v2845 = vpop.f32.mrf.mxu0
        %v2846 = vadd.f32 %v2637, %v2845
        %2847 = vmatmul.f32.gmra.mxu0 %v1957
        %v2848 = vpop.f32.mrf.mxu0
        %v2849 = vadd.f32 %v2640, %v2848
        %2850 = vmatmul.f32.gmra.mxu0 %v1959
        %v2851 = vpop.f32.mrf.mxu0
        %v2852 = vadd.f32 %v2643, %v2851
        %2853 = vmatmul.f32.gmra.mxu0 %v1961
        %v2854 = vpop.f32.mrf.mxu0
        %v2855 = vadd.f32 %v2646, %v2854
        %2856 = vmatmul.f32.gmra.mxu0 %v1963
        %v2857 = vpop.f32.mrf.mxu0
        %v2858 = vadd.f32 %v2649, %v2857
        %2859 = vmatmul.f32.gmra.mxu0 %v1965
        %v2860 = vpop.f32.mrf.mxu0
        %v2861 = vadd.f32 %v2652, %v2860
        %2862 = vmatmul.f32.gmra.mxu0 %v1967
        %v2863 = vpop.f32.mrf.mxu0
        %v2864 = vadd.f32 %v2655, %v2863
        %2865 = vmatmul.f32.gmra.mxu0 %v1969
        %v2866 = vpop.f32.mrf.mxu0
        %v2867 = vadd.f32 %v2658, %v2866
        %2868 = vmatmul.f32.gmra.mxu0 %v1971
        %v2869 = vpop.f32.mrf.mxu0
        %v2870 = vadd.f32 %v2661, %v2869
        %2871 = vmatmul.f32.gmra.mxu0 %v1973
        %v2872 = vpop.f32.mrf.mxu0
        %v2873 = vadd.f32 %v2664, %v2872
        %2874 = vmatmul.f32.gmra.mxu0 %v1975
        %v2875 = vpop.f32.mrf.mxu0
        %v2876 = vadd.f32 %v2667, %v2875
        %2877 = vmatmul.f32.gmra.mxu0 %v1977
        %v2878 = vpop.f32.mrf.mxu0
        %v2879 = vadd.f32 %v2670, %v2878
        %2880 = vmatmul.f32.gmra.mxu0 %v1979
        %v2881 = vpop.f32.mrf.mxu0
        %v2882 = vadd.f32 %v2673, %v2881
        %2883 = vmatmul.f32.gmra.mxu0 %v1981
        %v2884 = vpop.f32.mrf.mxu0
        %v2885 = vadd.f32 %v2676, %v2884
        %2886 = vmatmul.f32.gmra.mxu0 %v1983
        %v2887 = vpop.f32.mrf.mxu0
        %v2888 = vadd.f32 %v2679, %v2887
        %2889 = vdwg.mxu0
        %v2890 = vmax.f32 %v2281, 0.0
        %v2891 = vmax.f32 %v2699, 0.0
        %v2892 = vmax.f32 %v2284, 0.0
        %v2893 = vmax.f32 %v2702, 0.0
        %v2894 = vmax.f32 %v2287, 0.0
        %v2895 = vmax.f32 %v2705, 0.0
        %v2896 = vmax.f32 %v2290, 0.0
        %v2897 = vmax.f32 %v2708, 0.0
        %v2898 = vmax.f32 %v2293, 0.0
        %v2899 = vmax.f32 %v2711, 0.0
        %v2900 = vmax.f32 %v2296, 0.0
        %v2901 = vmax.f32 %v2714, 0.0
        %v2902 = vmax.f32 %v2299, 0.0
        %v2903 = vmax.f32 %v2717, 0.0
        %v2904 = vmax.f32 %v2302, 0.0
        %v2905 = vmax.f32 %v2720, 0.0
        %v2906 = vmax.f32 %v2305, 0.0
        %v2907 = vmax.f32 %v2723, 0.0
        %v2908 = vmax.f32 %v2308, 0.0
        %v2909 = vmax.f32 %v2726, 0.0
        %v2910 = vmax.f32 %v2311, 0.0
        %v2911 = vmax.f32 %v2729, 0.0
        %v2912 = vmax.f32 %v2314, 0.0
        %v2913 = vmax.f32 %v2732, 0.0
        %v2914 = vmax.f32 %v2317, 0.0
        %v2915 = vmax.f32 %v2735, 0.0
        %v2916 = vmax.f32 %v2320, 0.0
        %v2917 = vmax.f32 %v2738, 0.0
        %v2918 = vmax.f32 %v2323, 0.0
        %v2919 = vmax.f32 %v2741, 0.0
        %v2920 = vmax.f32 %v2326, 0.0
        %v2921 = vmax.f32 %v2744, 0.0
        %v2922 = vmax.f32 %v2329, 0.0
        %v2923 = vmax.f32 %v2747, 0.0
        %v2924 = vmax.f32 %v2332, 0.0
        %v2925 = vmax.f32 %v2750, 0.0
        %v2926 = vmax.f32 %v2335, 0.0
        %v2927 = vmax.f32 %v2753, 0.0
        %v2928 = vmax.f32 %v2338, 0.0
        %v2929 = vmax.f32 %v2756, 0.0
        %v2930 = vmax.f32 %v2341, 0.0
        %v2931 = vmax.f32 %v2759, 0.0
        %v2932 = vmax.f32 %v2344, 0.0
        %v2933 = vmax.f32 %v2762, 0.0
        %v2934 = vmax.f32 %v2347, 0.0
        %v2935 = vmax.f32 %v2765, 0.0
        %v2936 = vmax.f32 %v2350, 0.0
        %v2937 = vmax.f32 %v2768, 0.0
        %v2938 = vmax.f32 %v2353, 0.0
        %v2939 = vmax.f32 %v2771, 0.0
        %v2940 = vmax.f32 %v2356, 0.0
        %v2941 = vmax.f32 %v2774, 0.0
        %v2942 = vmax.f32 %v2359, 0.0
        %v2943 = vmax.f32 %v2777, 0.0
        %v2944 = vmax.f32 %v2362, 0.0
        %v2945 = vmax.f32 %v2780, 0.0
        %v2946 = vmax.f32 %v2365, 0.0
        %v2947 = vmax.f32 %v2783, 0.0
        %v2948 = vmax.f32 %v2368, 0.0
        %v2949 = vmax.f32 %v2786, 0.0
        %v2950 = vmax.f32 %v2371, 0.0
        %v2951 = vmax.f32 %v2789, 0.0
        %v2952 = vmax.f32 %v2374, 0.0
        %v2953 = vmax.f32 %v2792, 0.0
        %v2954 = vmax.f32 %v2377, 0.0
        %v2955 = vmax.f32 %v2795, 0.0
        %v2956 = vmax.f32 %v2380, 0.0
        %v2957 = vmax.f32 %v2798, 0.0
        %v2958 = vmax.f32 %v2383, 0.0
        %v2959 = vmax.f32 %v2801, 0.0
        %v2960 = vmax.f32 %v2386, 0.0
        %v2961 = vmax.f32 %v2804, 0.0
        %v2962 = vmax.f32 %v2389, 0.0
        %v2963 = vmax.f32 %v2807, 0.0
        %v2964 = vmax.f32 %v2392, 0.0
        %v2965 = vmax.f32 %v2810, 0.0
        %v2966 = vmax.f32 %v2395, 0.0
        %v2967 = vmax.f32 %v2813, 0.0
        %v2968 = vmax.f32 %v2398, 0.0
        %v2969 = vmax.f32 %v2816, 0.0
        %v2970 = vmax.f32 %v2401, 0.0
        %v2971 = vmax.f32 %v2819, 0.0
        %v2972 = vmax.f32 %v2404, 0.0
        %v2973 = vmax.f32 %v2822, 0.0
        %v2974 = vmax.f32 %v2407, 0.0
        %v2975 = vmax.f32 %v2825, 0.0
        %v2976 = vmax.f32 %v2410, 0.0
        %v2977 = vmax.f32 %v2828, 0.0
        %v2978 = vmax.f32 %v2413, 0.0
        %v2979 = vmax.f32 %v2831, 0.0
        %v2980 = vmax.f32 %v2416, 0.0
        %v2981 = vmax.f32 %v2834, 0.0
        %v2982 = vmax.f32 %v2419, 0.0
        %v2983 = vmax.f32 %v2837, 0.0
        %v2984 = vmax.f32 %v2422, 0.0
        %v2985 = vmax.f32 %v2840, 0.0
        %v2986 = vmax.f32 %v2425, 0.0
        %v2987 = vmax.f32 %v2843, 0.0
        %v2988 = vmax.f32 %v2428, 0.0
        %v2989 = vmax.f32 %v2846, 0.0
        %v2990 = vmax.f32 %v2431, 0.0
        %v2991 = vmax.f32 %v2849, 0.0
        %v2992 = vmax.f32 %v2434, 0.0
        %v2993 = vmax.f32 %v2852, 0.0
        %v2994 = vmax.f32 %v2437, 0.0
        %v2995 = vmax.f32 %v2855, 0.0
        %v2996 = vmax.f32 %v2440, 0.0
        %v2997 = vmax.f32 %v2858, 0.0
        %v2998 = vmax.f32 %v2443, 0.0
        %v2999 = vmax.f32 %v2861, 0.0
        %v3000 = vmax.f32 %v2446, 0.0
        %v3001 = vmax.f32 %v2864, 0.0
        %v3002 = vmax.f32 %v2449, 0.0
        %v3003 = vmax.f32 %v2867, 0.0
        %v3004 = vmax.f32 %v2452, 0.0
        %v3005 = vmax.f32 %v2870, 0.0
        %v3006 = vmax.f32 %v2455, 0.0
        %v3007 = vmax.f32 %v2873, 0.0
        %v3008 = vmax.f32 %v2458, 0.0
        %v3009 = vmax.f32 %v2876, 0.0
        %v3010 = vmax.f32 %v2461, 0.0
        %v3011 = vmax.f32 %v2879, 0.0
        %v3012 = vmax.f32 %v2464, 0.0
        %v3013 = vmax.f32 %v2882, 0.0
        %v3014 = vmax.f32 %v2467, 0.0
        %v3015 = vmax.f32 %v2885, 0.0
        %v3016 = vmax.f32 %v2470, 0.0
        %v3017 = vmax.f32 %v2888, 0.0
        %3146 = vrot.lane.b32.xlu0 %v2890, 127
        %v3147 = vpop.permute.xlu0 %3146
        %3148 = vrot.lane.b32.xlu0 %v2891, 127
        %v3149 = vpop.permute.xlu0 %3148
        %3150 = vrot.lane.b32.xlu0 %v2892, 127
        %v3151 = vpop.permute.xlu0 %3150
        %3152 = vrot.lane.b32.xlu0 %v2893, 127
        %v3153 = vpop.permute.xlu0 %3152
        %3154 = vrot.lane.b32.xlu0 %v2894, 127
        %v3155 = vpop.permute.xlu0 %3154
        %3156 = vrot.lane.b32.xlu0 %v2895, 127
        %v3157 = vpop.permute.xlu0 %3156
        %3158 = vrot.lane.b32.xlu0 %v2896, 127
        %v3159 = vpop.permute.xlu0 %3158
        %3160 = vrot.lane.b32.xlu0 %v2897, 127
        %v3161 = vpop.permute.xlu0 %3160
        %3162 = vrot.lane.b32.xlu0 %v2898, 127
        %v3163 = vpop.permute.xlu0 %3162
        %3164 = vrot.lane.b32.xlu0 %v2899, 127
        %v3165 = vpop.permute.xlu0 %3164
        %3166 = vrot.lane.b32.xlu0 %v2900, 127
        %v3167 = vpop.permute.xlu0 %3166
        %3168 = vrot.lane.b32.xlu0 %v2901, 127
        %v3169 = vpop.permute.xlu0 %3168
        %3170 = vrot.lane.b32.xlu0 %v2902, 127
        %v3171 = vpop.permute.xlu0 %3170
        %3172 = vrot.lane.b32.xlu0 %v2903, 127
        %v3173 = vpop.permute.xlu0 %3172
        %3174 = vrot.lane.b32.xlu0 %v2904, 127
        %v3175 = vpop.permute.xlu0 %3174
        %3176 = vrot.lane.b32.xlu0 %v2905, 127
        %v3177 = vpop.permute.xlu0 %3176
        %3178 = vrot.lane.b32.xlu0 %v2906, 127
        %v3179 = vpop.permute.xlu0 %3178
        %3180 = vrot.lane.b32.xlu0 %v2907, 127
        %v3181 = vpop.permute.xlu0 %3180
        %3182 = vrot.lane.b32.xlu0 %v2908, 127
        %v3183 = vpop.permute.xlu0 %3182
        %3184 = vrot.lane.b32.xlu0 %v2909, 127
        %v3185 = vpop.permute.xlu0 %3184
        %3186 = vrot.lane.b32.xlu0 %v2910, 127
        %v3187 = vpop.permute.xlu0 %3186
        %3188 = vrot.lane.b32.xlu0 %v2911, 127
        %v3189 = vpop.permute.xlu0 %3188
        %3190 = vrot.lane.b32.xlu0 %v2912, 127
        %v3191 = vpop.permute.xlu0 %3190
        %3192 = vrot.lane.b32.xlu0 %v2913, 127
        %v3193 = vpop.permute.xlu0 %3192
        %3194 = vrot.lane.b32.xlu0 %v2914, 127
        %v3195 = vpop.permute.xlu0 %3194
        %3196 = vrot.lane.b32.xlu0 %v2915, 127
        %v3197 = vpop.permute.xlu0 %3196
        %3198 = vrot.lane.b32.xlu0 %v2916, 127
        %v3199 = vpop.permute.xlu0 %3198
        %3200 = vrot.lane.b32.xlu0 %v2917, 127
        %v3201 = vpop.permute.xlu0 %3200
        %3202 = vrot.lane.b32.xlu0 %v2918, 127
        %v3203 = vpop.permute.xlu0 %3202
        %3204 = vrot.lane.b32.xlu0 %v2919, 127
        %v3205 = vpop.permute.xlu0 %3204
        %3206 = vrot.lane.b32.xlu0 %v2920, 127
        %v3207 = vpop.permute.xlu0 %3206
        %3208 = vrot.lane.b32.xlu0 %v2921, 127
        %v3209 = vpop.permute.xlu0 %3208
        %3210 = vrot.lane.b32.xlu0 %v2922, 127
        %v3211 = vpop.permute.xlu0 %3210
        %3212 = vrot.lane.b32.xlu0 %v2923, 127
        %v3213 = vpop.permute.xlu0 %3212
        %3214 = vrot.lane.b32.xlu0 %v2924, 127
        %v3215 = vpop.permute.xlu0 %3214
        %3216 = vrot.lane.b32.xlu0 %v2925, 127
        %v3217 = vpop.permute.xlu0 %3216
        %3218 = vrot.lane.b32.xlu0 %v2926, 127
        %v3219 = vpop.permute.xlu0 %3218
        %3220 = vrot.lane.b32.xlu0 %v2927, 127
        %v3221 = vpop.permute.xlu0 %3220
        %3222 = vrot.lane.b32.xlu0 %v2928, 127
        %v3223 = vpop.permute.xlu0 %3222
        %3224 = vrot.lane.b32.xlu0 %v2929, 127
        %v3225 = vpop.permute.xlu0 %3224
        %3226 = vrot.lane.b32.xlu0 %v2930, 127
        %v3227 = vpop.permute.xlu0 %3226
        %3228 = vrot.lane.b32.xlu0 %v2931, 127
        %v3229 = vpop.permute.xlu0 %3228
        %3230 = vrot.lane.b32.xlu0 %v2932, 127
        %v3231 = vpop.permute.xlu0 %3230
        %3232 = vrot.lane.b32.xlu0 %v2933, 127
        %v3233 = vpop.permute.xlu0 %3232
        %3234 = vrot.lane.b32.xlu0 %v2934, 127
        %v3235 = vpop.permute.xlu0 %3234
        %3236 = vrot.lane.b32.xlu0 %v2935, 127
        %v3237 = vpop.permute.xlu0 %3236
        %3238 = vrot.lane.b32.xlu0 %v2936, 127
        %v3239 = vpop.permute.xlu0 %3238
        %3240 = vrot.lane.b32.xlu0 %v2937, 127
        %v3241 = vpop.permute.xlu0 %3240
        %3242 = vrot.lane.b32.xlu0 %v2938, 127
        %v3243 = vpop.permute.xlu0 %3242
        %3244 = vrot.lane.b32.xlu0 %v2939, 127
        %v3245 = vpop.permute.xlu0 %3244
        %3246 = vrot.lane.b32.xlu0 %v2940, 127
        %v3247 = vpop.permute.xlu0 %3246
        %3248 = vrot.lane.b32.xlu0 %v2941, 127
        %v3249 = vpop.permute.xlu0 %3248
        %3250 = vrot.lane.b32.xlu0 %v2942, 127
        %v3251 = vpop.permute.xlu0 %3250
        %3252 = vrot.lane.b32.xlu0 %v2943, 127
        %v3253 = vpop.permute.xlu0 %3252
        %3254 = vrot.lane.b32.xlu0 %v2944, 127
        %v3255 = vpop.permute.xlu0 %3254
        %3256 = vrot.lane.b32.xlu0 %v2945, 127
        %v3257 = vpop.permute.xlu0 %3256
        %3258 = vrot.lane.b32.xlu0 %v2946, 127
        %v3259 = vpop.permute.xlu0 %3258
        %3260 = vrot.lane.b32.xlu0 %v2947, 127
        %v3261 = vpop.permute.xlu0 %3260
        %3262 = vrot.lane.b32.xlu0 %v2948, 127
        %v3263 = vpop.permute.xlu0 %3262
        %3264 = vrot.lane.b32.xlu0 %v2949, 127
        %v3265 = vpop.permute.xlu0 %3264
        %3266 = vrot.lane.b32.xlu0 %v2950, 127
        %v3267 = vpop.permute.xlu0 %3266
        %3268 = vrot.lane.b32.xlu0 %v2951, 127
        %v3269 = vpop.permute.xlu0 %3268
        %3270 = vrot.lane.b32.xlu0 %v2952, 127
        %v3271 = vpop.permute.xlu0 %3270
        %3272 = vrot.lane.b32.xlu0 %v2953, 127
        %v3273 = vpop.permute.xlu0 %3272
        %3274 = vrot.lane.b32.xlu0 %v2954, 127
        %v3275 = vpop.permute.xlu0 %3274
        %3276 = vrot.lane.b32.xlu0 %v2955, 127
        %v3277 = vpop.permute.xlu0 %3276
        %3278 = vrot.lane.b32.xlu0 %v2956, 127
        %v3279 = vpop.permute.xlu0 %3278
        %3280 = vrot.lane.b32.xlu0 %v2957, 127
        %v3281 = vpop.permute.xlu0 %3280
        %3282 = vrot.lane.b32.xlu0 %v2958, 127
        %v3283 = vpop.permute.xlu0 %3282
        %3284 = vrot.lane.b32.xlu0 %v2959, 127
        %v3285 = vpop.permute.xlu0 %3284
        %3286 = vrot.lane.b32.xlu0 %v2960, 127
        %v3287 = vpop.permute.xlu0 %3286
        %3288 = vrot.lane.b32.xlu0 %v2961, 127
        %v3289 = vpop.permute.xlu0 %3288
        %3290 = vrot.lane.b32.xlu0 %v2962, 127
        %v3291 = vpop.permute.xlu0 %3290
        %3292 = vrot.lane.b32.xlu0 %v2963, 127
        %v3293 = vpop.permute.xlu0 %3292
        %3294 = vrot.lane.b32.xlu0 %v2964, 127
        %v3295 = vpop.permute.xlu0 %3294
        %3296 = vrot.lane.b32.xlu0 %v2965, 127
        %v3297 = vpop.permute.xlu0 %3296
        %3298 = vrot.lane.b32.xlu0 %v2966, 127
        %v3299 = vpop.permute.xlu0 %3298
        %3300 = vrot.lane.b32.xlu0 %v2967, 127
        %v3301 = vpop.permute.xlu0 %3300
        %3302 = vrot.lane.b32.xlu0 %v2968, 127
        %v3303 = vpop.permute.xlu0 %3302
        %3304 = vrot.lane.b32.xlu0 %v2969, 127
        %v3305 = vpop.permute.xlu0 %3304
        %3306 = vrot.lane.b32.xlu0 %v2970, 127
        %v3307 = vpop.permute.xlu0 %3306
        %3308 = vrot.lane.b32.xlu0 %v2971, 127
        %v3309 = vpop.permute.xlu0 %3308
        %3310 = vrot.lane.b32.xlu0 %v2972, 127
        %v3311 = vpop.permute.xlu0 %3310
        %3312 = vrot.lane.b32.xlu0 %v2973, 127
        %v3313 = vpop.permute.xlu0 %3312
        %3314 = vrot.lane.b32.xlu0 %v2974, 127
        %v3315 = vpop.permute.xlu0 %3314
        %3316 = vrot.lane.b32.xlu0 %v2975, 127
        %v3317 = vpop.permute.xlu0 %3316
        %3318 = vrot.lane.b32.xlu0 %v2976, 127
        %v3319 = vpop.permute.xlu0 %3318
        %3320 = vrot.lane.b32.xlu0 %v2977, 127
        %v3321 = vpop.permute.xlu0 %3320
        %3322 = vrot.lane.b32.xlu0 %v2978, 127
        %v3323 = vpop.permute.xlu0 %3322
        %3324 = vrot.lane.b32.xlu0 %v2979, 127
        %v3325 = vpop.permute.xlu0 %3324
        %3326 = vrot.lane.b32.xlu0 %v2980, 127
        %v3327 = vpop.permute.xlu0 %3326
        %3328 = vrot.lane.b32.xlu0 %v2981, 127
        %v3329 = vpop.permute.xlu0 %3328
        %3330 = vrot.lane.b32.xlu0 %v2982, 127
        %v3331 = vpop.permute.xlu0 %3330
        %3332 = vrot.lane.b32.xlu0 %v2983, 127
        %v3333 = vpop.permute.xlu0 %3332
        %3334 = vrot.lane.b32.xlu0 %v2984, 127
        %v3335 = vpop.permute.xlu0 %3334
        %3336 = vrot.lane.b32.xlu0 %v2985, 127
        %v3337 = vpop.permute.xlu0 %3336
        %3338 = vrot.lane.b32.xlu0 %v2986, 127
        %v3339 = vpop.permute.xlu0 %3338
        %3340 = vrot.lane.b32.xlu0 %v2987, 127
        %v3341 = vpop.permute.xlu0 %3340
        %3342 = vrot.lane.b32.xlu0 %v2988, 127
        %v3343 = vpop.permute.xlu0 %3342
        %3344 = vrot.lane.b32.xlu0 %v2989, 127
        %v3345 = vpop.permute.xlu0 %3344
        %3346 = vrot.lane.b32.xlu0 %v2990, 127
        %v3347 = vpop.permute.xlu0 %3346
        %3348 = vrot.lane.b32.xlu0 %v2991, 127
        %v3349 = vpop.permute.xlu0 %3348
        %3350 = vrot.lane.b32.xlu0 %v2992, 127
        %v3351 = vpop.permute.xlu0 %3350
        %3352 = vrot.lane.b32.xlu0 %v2993, 127
        %v3353 = vpop.permute.xlu0 %3352
        %3354 = vrot.lane.b32.xlu0 %v2994, 127
        %v3355 = vpop.permute.xlu0 %3354
        %3356 = vrot.lane.b32.xlu0 %v2995, 127
        %v3357 = vpop.permute.xlu0 %3356
        %3358 = vrot.lane.b32.xlu0 %v2996, 127
        %v3359 = vpop.permute.xlu0 %3358
        %3360 = vrot.lane.b32.xlu0 %v2997, 127
        %v3361 = vpop.permute.xlu0 %3360
        %3362 = vrot.lane.b32.xlu0 %v2998, 127
        %v3363 = vpop.permute.xlu0 %3362
        %3364 = vrot.lane.b32.xlu0 %v2999, 127
        %v3365 = vpop.permute.xlu0 %3364
        %3366 = vrot.lane.b32.xlu0 %v3000, 127
        %v3367 = vpop.permute.xlu0 %3366
        %3368 = vrot.lane.b32.xlu0 %v3001, 127
        %v3369 = vpop.permute.xlu0 %3368
        %3370 = vrot.lane.b32.xlu0 %v3002, 127
        %v3371 = vpop.permute.xlu0 %3370
        %3372 = vrot.lane.b32.xlu0 %v3003, 127
        %v3373 = vpop.permute.xlu0 %3372
        %3374 = vrot.lane.b32.xlu0 %v3004, 127
        %v3375 = vpop.permute.xlu0 %3374
        %3376 = vrot.lane.b32.xlu0 %v3005, 127
        %v3377 = vpop.permute.xlu0 %3376
        %3378 = vrot.lane.b32.xlu0 %v3006, 127
        %v3379 = vpop.permute.xlu0 %3378
        %3380 = vrot.lane.b32.xlu0 %v3007, 127
        %v3381 = vpop.permute.xlu0 %3380
        %3382 = vrot.lane.b32.xlu0 %v3008, 127
        %v3383 = vpop.permute.xlu0 %3382
        %3384 = vrot.lane.b32.xlu0 %v3009, 127
        %v3385 = vpop.permute.xlu0 %3384
        %3386 = vrot.lane.b32.xlu0 %v3010, 127
        %v3387 = vpop.permute.xlu0 %3386
        %3388 = vrot.lane.b32.xlu0 %v3011, 127
        %v3389 = vpop.permute.xlu0 %3388
        %3390 = vrot.lane.b32.xlu0 %v3012, 127
        %v3391 = vpop.permute.xlu0 %3390
        %3392 = vrot.lane.b32.xlu0 %v3013, 127
        %v3393 = vpop.permute.xlu0 %3392
        %3394 = vrot.lane.b32.xlu0 %v3014, 127
        %v3395 = vpop.permute.xlu0 %3394
        %3396 = vrot.lane.b32.xlu0 %v3015, 127
        %v3397 = vpop.permute.xlu0 %3396
        %3398 = vrot.lane.b32.xlu0 %v3016, 127
        %v3399 = vpop.permute.xlu0 %3398
        %3400 = vrot.lane.b32.xlu0 %v3017, 127
        %v3401 = vpop.permute.xlu0 %3400
        %v3402 = vsel %vm1535, %v3147, %v3149
        %v3403 = vsel %vm1535, %v3151, %v3153
        %v3404 = vsel %vm1535, %v3155, %v3157
        %v3405 = vsel %vm1535, %v3159, %v3161
        %v3406 = vsel %vm1535, %v3163, %v3165
        %v3407 = vsel %vm1535, %v3167, %v3169
        %v3408 = vsel %vm1535, %v3171, %v3173
        %v3409 = vsel %vm1535, %v3175, %v3177
        %v3410 = vsel %vm1535, %v3179, %v3181
        %v3411 = vsel %vm1535, %v3183, %v3185
        %v3412 = vsel %vm1535, %v3187, %v3189
        %v3413 = vsel %vm1535, %v3191, %v3193
        %v3414 = vsel %vm1535, %v3195, %v3197
        %v3415 = vsel %vm1535, %v3199, %v3201
        %v3416 = vsel %vm1535, %v3203, %v3205
        %v3417 = vsel %vm1535, %v3207, %v3209
        %v3418 = vsel %vm1535, %v3211, %v3213
        %v3419 = vsel %vm1535, %v3215, %v3217
        %v3420 = vsel %vm1535, %v3219, %v3221
        %v3421 = vsel %vm1535, %v3223, %v3225
        %v3422 = vsel %vm1535, %v3227, %v3229
        %v3423 = vsel %vm1535, %v3231, %v3233
        %v3424 = vsel %vm1535, %v3235, %v3237
        %v3425 = vsel %vm1535, %v3239, %v3241
        %v3426 = vsel %vm1535, %v3243, %v3245
        %v3427 = vsel %vm1535, %v3247, %v3249
        %v3428 = vsel %vm1535, %v3251, %v3253
        %v3429 = vsel %vm1535, %v3255, %v3257
        %v3430 = vsel %vm1535, %v3259, %v3261
        %v3431 = vsel %vm1535, %v3263, %v3265
        %v3432 = vsel %vm1535, %v3267, %v3269
        %v3433 = vsel %vm1535, %v3271, %v3273
        %v3434 = vsel %vm1535, %v3275, %v3277
        %v3435 = vsel %vm1535, %v3279, %v3281
        %v3436 = vsel %vm1535, %v3283, %v3285
        %v3437 = vsel %vm1535, %v3287, %v3289
        %v3438 = vsel %vm1535, %v3291, %v3293
        %v3439 = vsel %vm1535, %v3295, %v3297
        %v3440 = vsel %vm1535, %v3299, %v3301
        %v3441 = vsel %vm1535, %v3303, %v3305
        %v3442 = vsel %vm1535, %v3307, %v3309
        %v3443 = vsel %vm1535, %v3311, %v3313
        %v3444 = vsel %vm1535, %v3315, %v3317
        %v3445 = vsel %vm1535, %v3319, %v3321
        %v3446 = vsel %vm1535, %v3323, %v3325
        %v3447 = vsel %vm1535, %v3327, %v3329
        %v3448 = vsel %vm1535, %v3331, %v3333
        %v3449 = vsel %vm1535, %v3335, %v3337
        %v3450 = vsel %vm1535, %v3339, %v3341
        %v3451 = vsel %vm1535, %v3343, %v3345
        %v3452 = vsel %vm1535, %v3347, %v3349
        %v3453 = vsel %vm1535, %v3351, %v3353
        %v3454 = vsel %vm1535, %v3355, %v3357
        %v3455 = vsel %vm1535, %v3359, %v3361
        %v3456 = vsel %vm1535, %v3363, %v3365
        %v3457 = vsel %vm1535, %v3367, %v3369
        %v3458 = vsel %vm1535, %v3371, %v3373
        %v3459 = vsel %vm1535, %v3375, %v3377
        %v3460 = vsel %vm1535, %v3379, %v3381
        %v3461 = vsel %vm1535, %v3383, %v3385
        %v3462 = vsel %vm1535, %v3387, %v3389
        %v3463 = vsel %vm1535, %v3391, %v3393
        %v3464 = vsel %vm1535, %v3395, %v3397
        %v3465 = vsel %vm1535, %v3399, %v3401
        %v3658 = vsel %vm1535, %v3149, %v3147
        %v3659 = vsel %vm1535, %v3153, %v3151
        %v3660 = vsel %vm1535, %v3157, %v3155
        %v3661 = vsel %vm1535, %v3161, %v3159
        %v3662 = vsel %vm1535, %v3165, %v3163
        %v3663 = vsel %vm1535, %v3169, %v3167
        %v3664 = vsel %vm1535, %v3173, %v3171
        %v3665 = vsel %vm1535, %v3177, %v3175
        %v3666 = vsel %vm1535, %v3181, %v3179
        %v3667 = vsel %vm1535, %v3185, %v3183
        %v3668 = vsel %vm1535, %v3189, %v3187
        %v3669 = vsel %vm1535, %v3193, %v3191
        %v3670 = vsel %vm1535, %v3197, %v3195
        %v3671 = vsel %vm1535, %v3201, %v3199
        %v3672 = vsel %vm1535, %v3205, %v3203
        %v3673 = vsel %vm1535, %v3209, %v3207
        %v3674 = vsel %vm1535, %v3213, %v3211
        %v3675 = vsel %vm1535, %v3217, %v3215
        %v3676 = vsel %vm1535, %v3221, %v3219
        %v3677 = vsel %vm1535, %v3225, %v3223
        %v3678 = vsel %vm1535, %v3229, %v3227
        %v3679 = vsel %vm1535, %v3233, %v3231
        %v3680 = vsel %vm1535, %v3237, %v3235
        %v3681 = vsel %vm1535, %v3241, %v3239
        %v3682 = vsel %vm1535, %v3245, %v3243
        %v3683 = vsel %vm1535, %v3249, %v3247
        %v3684 = vsel %vm1535, %v3253, %v3251
        %v3685 = vsel %vm1535, %v3257, %v3255
        %v3686 = vsel %vm1535, %v3261, %v3259
        %v3687 = vsel %vm1535, %v3265, %v3263
        %v3688 = vsel %vm1535, %v3269, %v3267
        %v3689 = vsel %vm1535, %v3273, %v3271
        %v3690 = vsel %vm1535, %v3277, %v3275
        %v3691 = vsel %vm1535, %v3281, %v3279
        %v3692 = vsel %vm1535, %v3285, %v3283
        %v3693 = vsel %vm1535, %v3289, %v3287
        %v3694 = vsel %vm1535, %v3293, %v3291
        %v3695 = vsel %vm1535, %v3297, %v3295
        %v3696 = vsel %vm1535, %v3301, %v3299
        %v3697 = vsel %vm1535, %v3305, %v3303
        %v3698 = vsel %vm1535, %v3309, %v3307
        %v3699 = vsel %vm1535, %v3313, %v3311
        %v3700 = vsel %vm1535, %v3317, %v3315
        %v3701 = vsel %vm1535, %v3321, %v3319
        %v3702 = vsel %vm1535, %v3325, %v3323
        %v3703 = vsel %vm1535, %v3329, %v3327
        %v3704 = vsel %vm1535, %v3333, %v3331
        %v3705 = vsel %vm1535, %v3337, %v3335
        %v3706 = vsel %vm1535, %v3341, %v3339
        %v3707 = vsel %vm1535, %v3345, %v3343
        %v3708 = vsel %vm1535, %v3349, %v3347
        %v3709 = vsel %vm1535, %v3353, %v3351
        %v3710 = vsel %vm1535, %v3357, %v3355
        %v3711 = vsel %vm1535, %v3361, %v3359
        %v3712 = vsel %vm1535, %v3365, %v3363
        %v3713 = vsel %vm1535, %v3369, %v3367
        %v3714 = vsel %vm1535, %v3373, %v3371
        %v3715 = vsel %vm1535, %v3377, %v3375
        %v3716 = vsel %vm1535, %v3381, %v3379
        %v3717 = vsel %vm1535, %v3385, %v3383
        %v3718 = vsel %vm1535, %v3389, %v3387
        %v3719 = vsel %vm1535, %v3393, %v3391
        %v3720 = vsel %vm1535, %v3397, %v3395
        %v3721 = vsel %vm1535, %v3401, %v3399
        %v3722 = vmax.f32 %v2890, %v3402
        %v3723 = vmax.f32 %v2891, %v3658
        %v3724 = vmax.f32 %v2892, %v3403
        %v3725 = vmax.f32 %v2893, %v3659
        %v3726 = vmax.f32 %v2894, %v3404
        %v3727 = vmax.f32 %v2895, %v3660
        %v3728 = vmax.f32 %v2896, %v3405
        %v3729 = vmax.f32 %v2897, %v3661
        %v3730 = vmax.f32 %v2898, %v3406
        %v3731 = vmax.f32 %v2899, %v3662
        %v3732 = vmax.f32 %v2900, %v3407
        %v3733 = vmax.f32 %v2901, %v3663
        %v3734 = vmax.f32 %v2902, %v3408
        %v3735 = vmax.f32 %v2903, %v3664
        %v3736 = vmax.f32 %v2904, %v3409
        %v3737 = vmax.f32 %v2905, %v3665
        %v3738 = vmax.f32 %v2906, %v3410
        %v3739 = vmax.f32 %v2907, %v3666
        %v3740 = vmax.f32 %v2908, %v3411
        %v3741 = vmax.f32 %v2909, %v3667
        %v3742 = vmax.f32 %v2910, %v3412
        %v3743 = vmax.f32 %v2911, %v3668
        %v3744 = vmax.f32 %v2912, %v3413
        %v3745 = vmax.f32 %v2913, %v3669
        %v3746 = vmax.f32 %v2914, %v3414
        %v3747 = vmax.f32 %v2915, %v3670
        %v3748 = vmax.f32 %v2916, %v3415
        %v3749 = vmax.f32 %v2917, %v3671
        %v3750 = vmax.f32 %v2918, %v3416
        %v3751 = vmax.f32 %v2919, %v3672
        %v3752 = vmax.f32 %v2920, %v3417
        %v3753 = vmax.f32 %v2921, %v3673
        %v3754 = vmax.f32 %v2922, %v3418
        %v3755 = vmax.f32 %v2923, %v3674
        %v3756 = vmax.f32 %v2924, %v3419
        %v3757 = vmax.f32 %v2925, %v3675
        %v3758 = vmax.f32 %v2926, %v3420
        %v3759 = vmax.f32 %v2927, %v3676
        %v3760 = vmax.f32 %v2928, %v3421
        %v3761 = vmax.f32 %v2929, %v3677
        %v3762 = vmax.f32 %v2930, %v3422
        %v3763 = vmax.f32 %v2931, %v3678
        %v3764 = vmax.f32 %v2932, %v3423
        %v3765 = vmax.f32 %v2933, %v3679
        %v3766 = vmax.f32 %v2934, %v3424
        %v3767 = vmax.f32 %v2935, %v3680
        %v3768 = vmax.f32 %v2936, %v3425
        %v3769 = vmax.f32 %v2937, %v3681
        %v3770 = vmax.f32 %v2938, %v3426
        %v3771 = vmax.f32 %v2939, %v3682
        %v3772 = vmax.f32 %v2940, %v3427
        %v3773 = vmax.f32 %v2941, %v3683
        %v3774 = vmax.f32 %v2942, %v3428
        %v3775 = vmax.f32 %v2943, %v3684
        %v3776 = vmax.f32 %v2944, %v3429
        %v3777 = vmax.f32 %v2945, %v3685
        %v3778 = vmax.f32 %v2946, %v3430
        %v3779 = vmax.f32 %v2947, %v3686
        %v3780 = vmax.f32 %v2948, %v3431
        %v3781 = vmax.f32 %v2949, %v3687
        %v3782 = vmax.f32 %v2950, %v3432
        %v3783 = vmax.f32 %v2951, %v3688
        %v3784 = vmax.f32 %v2952, %v3433
        %v3785 = vmax.f32 %v2953, %v3689
        %v3786 = vmax.f32 %v2954, %v3434
        %v3787 = vmax.f32 %v2955, %v3690
        %v3788 = vmax.f32 %v2956, %v3435
        %v3789 = vmax.f32 %v2957, %v3691
        %v3790 = vmax.f32 %v2958, %v3436
        %v3791 = vmax.f32 %v2959, %v3692
        %v3792 = vmax.f32 %v2960, %v3437
        %v3793 = vmax.f32 %v2961, %v3693
        %v3794 = vmax.f32 %v2962, %v3438
        %v3795 = vmax.f32 %v2963, %v3694
        %v3796 = vmax.f32 %v2964, %v3439
        %v3797 = vmax.f32 %v2965, %v3695
        %v3798 = vmax.f32 %v2966, %v3440
        %v3799 = vmax.f32 %v2967, %v3696
        %v3800 = vmax.f32 %v2968, %v3441
        %v3801 = vmax.f32 %v2969, %v3697
        %v3802 = vmax.f32 %v2970, %v3442
        %v3803 = vmax.f32 %v2971, %v3698
        %v3804 = vmax.f32 %v2972, %v3443
        %v3805 = vmax.f32 %v2973, %v3699
        %v3806 = vmax.f32 %v2974, %v3444
        %v3807 = vmax.f32 %v2975, %v3700
        %v3808 = vmax.f32 %v2976, %v3445
        %v3809 = vmax.f32 %v2977, %v3701
        %v3810 = vmax.f32 %v2978, %v3446
        %v3811 = vmax.f32 %v2979, %v3702
        %v3812 = vmax.f32 %v2980, %v3447
        %v3813 = vmax.f32 %v2981, %v3703
        %v3814 = vmax.f32 %v2982, %v3448
        %v3815 = vmax.f32 %v2983, %v3704
        %v3816 = vmax.f32 %v2984, %v3449
        %v3817 = vmax.f32 %v2985, %v3705
        %v3818 = vmax.f32 %v2986, %v3450
        %v3819 = vmax.f32 %v2987, %v3706
        %v3820 = vmax.f32 %v2988, %v3451
        %v3821 = vmax.f32 %v2989, %v3707
        %v3822 = vmax.f32 %v2990, %v3452
        %v3823 = vmax.f32 %v2991, %v3708
        %v3824 = vmax.f32 %v2992, %v3453
        %v3825 = vmax.f32 %v2993, %v3709
        %v3826 = vmax.f32 %v2994, %v3454
        %v3827 = vmax.f32 %v2995, %v3710
        %v3828 = vmax.f32 %v2996, %v3455
        %v3829 = vmax.f32 %v2997, %v3711
        %v3830 = vmax.f32 %v2998, %v3456
        %v3831 = vmax.f32 %v2999, %v3712
        %v3832 = vmax.f32 %v3000, %v3457
        %v3833 = vmax.f32 %v3001, %v3713
        %v3834 = vmax.f32 %v3002, %v3458
        %v3835 = vmax.f32 %v3003, %v3714
        %v3836 = vmax.f32 %v3004, %v3459
        %v3837 = vmax.f32 %v3005, %v3715
        %v3838 = vmax.f32 %v3006, %v3460
        %v3839 = vmax.f32 %v3007, %v3716
        %v3840 = vmax.f32 %v3008, %v3461
        %v3841 = vmax.f32 %v3009, %v3717
        %v3842 = vmax.f32 %v3010, %v3462
        %v3843 = vmax.f32 %v3011, %v3718
        %v3844 = vmax.f32 %v3012, %v3463
        %v3845 = vmax.f32 %v3013, %v3719
        %v3846 = vmax.f32 %v3014, %v3464
        %v3847 = vmax.f32 %v3015, %v3720
        %v3848 = vmax.f32 %v3016, %v3465
        %v3849 = vmax.f32 %v3017, %v3721
        %v3850 = vld [vmem:[%s5] sm:$0xff]
        %v3851 = vld [vmem:[%s5 + $0x8] sm:$0xff]
        %v3852 = vld [vmem:[%s5 + $0x10] sm:$0xff]
        %v3853 = vld [vmem:[%s5 + $0x18] sm:$0xff]
        %v3854 = vld [vmem:[%s5 + $0x20] sm:$0xff]
        %v3855 = vld [vmem:[%s5 + $0x28] sm:$0xff]
        %v3856 = vld [vmem:[%s5 + $0x30] sm:$0xff]
        %v3857 = vld [vmem:[%s5 + $0x38] sm:$0xff]
        %v3858 = vld [vmem:[%s5 + $0x40] sm:$0xff]
        %v3859 = vld [vmem:[%s5 + $0x48] sm:$0xff]
        %v3860 = vld [vmem:[%s5 + $0x50] sm:$0xff]
        %v3861 = vld [vmem:[%s5 + $0x58] sm:$0xff]
        %v3862 = vld [vmem:[%s5 + $0x60] sm:$0xff]
        %v3863 = vld [vmem:[%s5 + $0x68] sm:$0xff]
        %v3864 = vld [vmem:[%s5 + $0x70] sm:$0xff]
        %v3865 = vld [vmem:[%s5 + $0x78] sm:$0xff]
        %v3866 = vld [vmem:[%s5 + $0x80] sm:$0xff]
        %v3867 = vld [vmem:[%s5 + $0x88] sm:$0xff]
        %v3868 = vld [vmem:[%s5 + $0x90] sm:$0xff]
        %v3869 = vld [vmem:[%s5 + $0x98] sm:$0xff]
        %v3870 = vld [vmem:[%s5 + $0xa0] sm:$0xff]
        %v3871 = vld [vmem:[%s5 + $0xa8] sm:$0xff]
        %v3872 = vld [vmem:[%s5 + $0xb0] sm:$0xff]
        %v3873 = vld [vmem:[%s5 + $0xb8] sm:$0xff]
        %v3874 = vld [vmem:[%s5 + $0xc0] sm:$0xff]
        %v3875 = vld [vmem:[%s5 + $0xc8] sm:$0xff]
        %v3876 = vld [vmem:[%s5 + $0xd0] sm:$0xff]
        %v3877 = vld [vmem:[%s5 + $0xd8] sm:$0xff]
        %v3878 = vld [vmem:[%s5 + $0xe0] sm:$0xff]
        %v3879 = vld [vmem:[%s5 + $0xe8] sm:$0xff]
        %v3880 = vld [vmem:[%s5 + $0xf0] sm:$0xff]
        %v3881 = vld [vmem:[%s5 + $0xf8] sm:$0xff]
        %v3882 = vld [vmem:[%s6] sm:$0x1]
        %v3884 = vperm.slane %v3882, 0
        %3886 = vmatpush.msra.mxu0 %v3865
        %3887 = vmatpush.msra.mxu0 %v3864
        %3888 = vmatpush.msra.mxu0 %v3863
        %3889 = vmatpush.msra.mxu0 %v3862
        %3890 = vmatpush.msra.mxu0 %v3861
        %3891 = vmatpush.msra.mxu0 %v3860
        %3892 = vmatpush.msra.mxu0 %v3859
        %3893 = vmatpush.msra.mxu0 %v3858
        %3894 = vmatpush.msra.mxu0 %v3857
        %3895 = vmatpush.msra.mxu0 %v3856
        %3896 = vmatpush.msra.mxu0 %v3855
        %3897 = vmatpush.msra.mxu0 %v3854
        %3898 = vmatpush.msra.mxu0 %v3853
        %3899 = vmatpush.msra.mxu0 %v3852
        %3900 = vmatpush.msra.mxu0 %v3851
        %3901 = vmatpush.msra.mxu0 %v3850
        %3902 = vmatmul.f32.gmra.mxu0 %v3722
        %v3903 = vpop.f32.mrf.mxu0
        %v3904 = vadd.f32 %v3884, %v3903
        %3905 = vmatmul.f32.gmra.mxu0 %v3724
        %v3906 = vpop.f32.mrf.mxu0
        %v3907 = vadd.f32 %v3884, %v3906
        %3908 = vmatmul.f32.gmra.mxu0 %v3726
        %v3909 = vpop.f32.mrf.mxu0
        %v3910 = vadd.f32 %v3884, %v3909
        %3911 = vmatmul.f32.gmra.mxu0 %v3728
        %v3912 = vpop.f32.mrf.mxu0
        %v3913 = vadd.f32 %v3884, %v3912
        %3914 = vmatmul.f32.gmra.mxu0 %v3730
        %v3915 = vpop.f32.mrf.mxu0
        %v3916 = vadd.f32 %v3884, %v3915
        %3917 = vmatmul.f32.gmra.mxu0 %v3732
        %v3918 = vpop.f32.mrf.mxu0
        %v3919 = vadd.f32 %v3884, %v3918
        %3920 = vmatmul.f32.gmra.mxu0 %v3734
        %v3921 = vpop.f32.mrf.mxu0
        %v3922 = vadd.f32 %v3884, %v3921
        %3923 = vmatmul.f32.gmra.mxu0 %v3736
        %v3924 = vpop.f32.mrf.mxu0
        %v3925 = vadd.f32 %v3884, %v3924
        %3926 = vmatmul.f32.gmra.mxu0 %v3738
        %v3927 = vpop.f32.mrf.mxu0
        %v3928 = vadd.f32 %v3884, %v3927
        %3929 = vmatmul.f32.gmra.mxu0 %v3740
        %v3930 = vpop.f32.mrf.mxu0
        %v3931 = vadd.f32 %v3884, %v3930
        %3932 = vmatmul.f32.gmra.mxu0 %v3742
        %v3933 = vpop.f32.mrf.mxu0
        %v3934 = vadd.f32 %v3884, %v3933
        %3935 = vmatmul.f32.gmra.mxu0 %v3744
        %v3936 = vpop.f32.mrf.mxu0
        %v3937 = vadd.f32 %v3884, %v3936
        %3938 = vmatmul.f32.gmra.mxu0 %v3746
        %v3939 = vpop.f32.mrf.mxu0
        %v3940 = vadd.f32 %v3884, %v3939
        %3941 = vmatmul.f32.gmra.mxu0 %v3748
        %v3942 = vpop.f32.mrf.mxu0
        %v3943 = vadd.f32 %v3884, %v3942
        %3944 = vmatmul.f32.gmra.mxu0 %v3750
        %v3945 = vpop.f32.mrf.mxu0
        %v3946 = vadd.f32 %v3884, %v3945
        %3947 = vmatmul.f32.gmra.mxu0 %v3752
        %v3948 = vpop.f32.mrf.mxu0
        %v3949 = vadd.f32 %v3884, %v3948
        %3950 = vmatmul.f32.gmra.mxu0 %v3754
        %v3951 = vpop.f32.mrf.mxu0
        %v3952 = vadd.f32 %v3884, %v3951
        %3953 = vmatmul.f32.gmra.mxu0 %v3756
        %v3954 = vpop.f32.mrf.mxu0
        %v3955 = vadd.f32 %v3884, %v3954
        %3956 = vmatmul.f32.gmra.mxu0 %v3758
        %v3957 = vpop.f32.mrf.mxu0
        %v3958 = vadd.f32 %v3884, %v3957
        %3959 = vmatmul.f32.gmra.mxu0 %v3760
        %v3960 = vpop.f32.mrf.mxu0
        %v3961 = vadd.f32 %v3884, %v3960
        %3962 = vmatmul.f32.gmra.mxu0 %v3762
        %v3963 = vpop.f32.mrf.mxu0
        %v3964 = vadd.f32 %v3884, %v3963
        %3965 = vmatmul.f32.gmra.mxu0 %v3764
        %v3966 = vpop.f32.mrf.mxu0
        %v3967 = vadd.f32 %v3884, %v3966
        %3968 = vmatmul.f32.gmra.mxu0 %v3766
        %v3969 = vpop.f32.mrf.mxu0
        %v3970 = vadd.f32 %v3884, %v3969
        %3971 = vmatmul.f32.gmra.mxu0 %v3768
        %v3972 = vpop.f32.mrf.mxu0
        %v3973 = vadd.f32 %v3884, %v3972
        %3974 = vmatmul.f32.gmra.mxu0 %v3770
        %v3975 = vpop.f32.mrf.mxu0
        %v3976 = vadd.f32 %v3884, %v3975
        %3977 = vmatmul.f32.gmra.mxu0 %v3772
        %v3978 = vpop.f32.mrf.mxu0
        %v3979 = vadd.f32 %v3884, %v3978
        %3980 = vmatmul.f32.gmra.mxu0 %v3774
        %v3981 = vpop.f32.mrf.mxu0
        %v3982 = vadd.f32 %v3884, %v3981
        %3983 = vmatmul.f32.gmra.mxu0 %v3776
        %v3984 = vpop.f32.mrf.mxu0
        %v3985 = vadd.f32 %v3884, %v3984
        %3986 = vmatmul.f32.gmra.mxu0 %v3778
        %v3987 = vpop.f32.mrf.mxu0
        %v3988 = vadd.f32 %v3884, %v3987
        %3989 = vmatmul.f32.gmra.mxu0 %v3780
        %v3990 = vpop.f32.mrf.mxu0
        %v3991 = vadd.f32 %v3884, %v3990
        %3992 = vmatmul.f32.gmra.mxu0 %v3782
        %v3993 = vpop.f32.mrf.mxu0
        %v3994 = vadd.f32 %v3884, %v3993
        %3995 = vmatmul.f32.gmra.mxu0 %v3784
        %v3996 = vpop.f32.mrf.mxu0
        %v3997 = vadd.f32 %v3884, %v3996
        %3998 = vmatmul.f32.gmra.mxu0 %v3786
        %v3999 = vpop.f32.mrf.mxu0
        %v4000 = vadd.f32 %v3884, %v3999
        %4001 = vmatmul.f32.gmra.mxu0 %v3788
        %v4002 = vpop.f32.mrf.mxu0
        %v4003 = vadd.f32 %v3884, %v4002
        %4004 = vmatmul.f32.gmra.mxu0 %v3790
        %v4005 = vpop.f32.mrf.mxu0
        %v4006 = vadd.f32 %v3884, %v4005
        %4007 = vmatmul.f32.gmra.mxu0 %v3792
        %v4008 = vpop.f32.mrf.mxu0
        %v4009 = vadd.f32 %v3884, %v4008
        %4010 = vmatmul.f32.gmra.mxu0 %v3794
        %v4011 = vpop.f32.mrf.mxu0
        %v4012 = vadd.f32 %v3884, %v4011
        %4013 = vmatmul.f32.gmra.mxu0 %v3796
        %v4014 = vpop.f32.mrf.mxu0
        %v4015 = vadd.f32 %v3884, %v4014
        %4016 = vmatmul.f32.gmra.mxu0 %v3798
        %v4017 = vpop.f32.mrf.mxu0
        %v4018 = vadd.f32 %v3884, %v4017
        %4019 = vmatmul.f32.gmra.mxu0 %v3800
        %v4020 = vpop.f32.mrf.mxu0
        %v4021 = vadd.f32 %v3884, %v4020
        %4022 = vmatmul.f32.gmra.mxu0 %v3802
        %v4023 = vpop.f32.mrf.mxu0
        %v4024 = vadd.f32 %v3884, %v4023
        %4025 = vmatmul.f32.gmra.mxu0 %v3804
        %v4026 = vpop.f32.mrf.mxu0
        %v4027 = vadd.f32 %v3884, %v4026
        %4028 = vmatmul.f32.gmra.mxu0 %v3806
        %v4029 = vpop.f32.mrf.mxu0
        %v4030 = vadd.f32 %v3884, %v4029
        %4031 = vmatmul.f32.gmra.mxu0 %v3808
        %v4032 = vpop.f32.mrf.mxu0
        %v4033 = vadd.f32 %v3884, %v4032
        %4034 = vmatmul.f32.gmra.mxu0 %v3810
        %v4035 = vpop.f32.mrf.mxu0
        %v4036 = vadd.f32 %v3884, %v4035
        %4037 = vmatmul.f32.gmra.mxu0 %v3812
        %v4038 = vpop.f32.mrf.mxu0
        %v4039 = vadd.f32 %v3884, %v4038
        %4040 = vmatmul.f32.gmra.mxu0 %v3814
        %v4041 = vpop.f32.mrf.mxu0
        %v4042 = vadd.f32 %v3884, %v4041
        %4043 = vmatmul.f32.gmra.mxu0 %v3816
        %v4044 = vpop.f32.mrf.mxu0
        %v4045 = vadd.f32 %v3884, %v4044
        %4046 = vmatmul.f32.gmra.mxu0 %v3818
        %v4047 = vpop.f32.mrf.mxu0
        %v4048 = vadd.f32 %v3884, %v4047
        %4049 = vmatmul.f32.gmra.mxu0 %v3820
        %v4050 = vpop.f32.mrf.mxu0
        %v4051 = vadd.f32 %v3884, %v4050
        %4052 = vmatmul.f32.gmra.mxu0 %v3822
        %v4053 = vpop.f32.mrf.mxu0
        %v4054 = vadd.f32 %v3884, %v4053
        %4055 = vmatmul.f32.gmra.mxu0 %v3824
        %v4056 = vpop.f32.mrf.mxu0
        %v4057 = vadd.f32 %v3884, %v4056
        %4058 = vmatmul.f32.gmra.mxu0 %v3826
        %v4059 = vpop.f32.mrf.mxu0
        %v4060 = vadd.f32 %v3884, %v4059
        %4061 = vmatmul.f32.gmra.mxu0 %v3828
        %v4062 = vpop.f32.mrf.mxu0
        %v4063 = vadd.f32 %v3884, %v4062
        %4064 = vmatmul.f32.gmra.mxu0 %v3830
        %v4065 = vpop.f32.mrf.mxu0
        %v4066 = vadd.f32 %v3884, %v4065
        %4067 = vmatmul.f32.gmra.mxu0 %v3832
        %v4068 = vpop.f32.mrf.mxu0
        %v4069 = vadd.f32 %v3884, %v4068
        %4070 = vmatmul.f32.gmra.mxu0 %v3834
        %v4071 = vpop.f32.mrf.mxu0
        %v4072 = vadd.f32 %v3884, %v4071
        %4073 = vmatmul.f32.gmra.mxu0 %v3836
        %v4074 = vpop.f32.mrf.mxu0
        %v4075 = vadd.f32 %v3884, %v4074
        %4076 = vmatmul.f32.gmra.mxu0 %v3838
        %v4077 = vpop.f32.mrf.mxu0
        %v4078 = vadd.f32 %v3884, %v4077
        %4079 = vmatmul.f32.gmra.mxu0 %v3840
        %v4080 = vpop.f32.mrf.mxu0
        %v4081 = vadd.f32 %v3884, %v4080
        %4082 = vmatmul.f32.gmra.mxu0 %v3842
        %v4083 = vpop.f32.mrf.mxu0
        %v4084 = vadd.f32 %v3884, %v4083
        %4085 = vmatmul.f32.gmra.mxu0 %v3844
        %v4086 = vpop.f32.mrf.mxu0
        %v4087 = vadd.f32 %v3884, %v4086
        %4088 = vmatmul.f32.gmra.mxu0 %v3846
        %v4089 = vpop.f32.mrf.mxu0
        %v4090 = vadd.f32 %v3884, %v4089
        %4091 = vmatmul.f32.gmra.mxu0 %v3848
        %v4092 = vpop.f32.mrf.mxu0
        %v4093 = vadd.f32 %v3884, %v4092
        %4094 = vdwg.mxu0
        %4095 = vmatpush.msra.mxu0 %v3881
        %4096 = vmatpush.msra.mxu0 %v3880
        %4097 = vmatpush.msra.mxu0 %v3879
        %4098 = vmatpush.msra.mxu0 %v3878
        %4099 = vmatpush.msra.mxu0 %v3877
        %4100 = vmatpush.msra.mxu0 %v3876
        %4101 = vmatpush.msra.mxu0 %v3875
        %4102 = vmatpush.msra.mxu0 %v3874
        %4103 = vmatpush.msra.mxu0 %v3873
        %4104 = vmatpush.msra.mxu0 %v3872
        %4105 = vmatpush.msra.mxu0 %v3871
        %4106 = vmatpush.msra.mxu0 %v3870
        %4107 = vmatpush.msra.mxu0 %v3869
        %4108 = vmatpush.msra.mxu0 %v3868
        %4109 = vmatpush.msra.mxu0 %v3867
        %4110 = vmatpush.msra.mxu0 %v3866
        %4111 = vmatmul.f32.gmra.mxu0 %v3723
        %v4112 = vpop.f32.mrf.mxu0
        %v4113 = vadd.f32 %v3904, %v4112
        %4114 = vmatmul.f32.gmra.mxu0 %v3725
        %v4115 = vpop.f32.mrf.mxu0
        %v4116 = vadd.f32 %v3907, %v4115
        %4117 = vmatmul.f32.gmra.mxu0 %v3727
        %v4118 = vpop.f32.mrf.mxu0
        %v4119 = vadd.f32 %v3910, %v4118
        %4120 = vmatmul.f32.gmra.mxu0 %v3729
        %v4121 = vpop.f32.mrf.mxu0
        %v4122 = vadd.f32 %v3913, %v4121
        %4123 = vmatmul.f32.gmra.mxu0 %v3731
        %v4124 = vpop.f32.mrf.mxu0
        %v4125 = vadd.f32 %v3916, %v4124
        %4126 = vmatmul.f32.gmra.mxu0 %v3733
        %v4127 = vpop.f32.mrf.mxu0
        %v4128 = vadd.f32 %v3919, %v4127
        %4129 = vmatmul.f32.gmra.mxu0 %v3735
        %v4130 = vpop.f32.mrf.mxu0
        %v4131 = vadd.f32 %v3922, %v4130
        %4132 = vmatmul.f32.gmra.mxu0 %v3737
        %v4133 = vpop.f32.mrf.mxu0
        %v4134 = vadd.f32 %v3925, %v4133
        %4135 = vmatmul.f32.gmra.mxu0 %v3739
        %v4136 = vpop.f32.mrf.mxu0
        %v4137 = vadd.f32 %v3928, %v4136
        %4138 = vmatmul.f32.gmra.mxu0 %v3741
        %v4139 = vpop.f32.mrf.mxu0
        %v4140 = vadd.f32 %v3931, %v4139
        %4141 = vmatmul.f32.gmra.mxu0 %v3743
        %v4142 = vpop.f32.mrf.mxu0
        %v4143 = vadd.f32 %v3934, %v4142
        %4144 = vmatmul.f32.gmra.mxu0 %v3745
        %v4145 = vpop.f32.mrf.mxu0
        %v4146 = vadd.f32 %v3937, %v4145
        %4147 = vmatmul.f32.gmra.mxu0 %v3747
        %v4148 = vpop.f32.mrf.mxu0
        %v4149 = vadd.f32 %v3940, %v4148
        %4150 = vmatmul.f32.gmra.mxu0 %v3749
        %v4151 = vpop.f32.mrf.mxu0
        %v4152 = vadd.f32 %v3943, %v4151
        %4153 = vmatmul.f32.gmra.mxu0 %v3751
        %v4154 = vpop.f32.mrf.mxu0
        %v4155 = vadd.f32 %v3946, %v4154
        %4156 = vmatmul.f32.gmra.mxu0 %v3753
        %v4157 = vpop.f32.mrf.mxu0
        %v4158 = vadd.f32 %v3949, %v4157
        %4159 = vmatmul.f32.gmra.mxu0 %v3755
        %v4160 = vpop.f32.mrf.mxu0
        %v4161 = vadd.f32 %v3952, %v4160
        %4162 = vmatmul.f32.gmra.mxu0 %v3757
        %v4163 = vpop.f32.mrf.mxu0
        %v4164 = vadd.f32 %v3955, %v4163
        %4165 = vmatmul.f32.gmra.mxu0 %v3759
        %v4166 = vpop.f32.mrf.mxu0
        %v4167 = vadd.f32 %v3958, %v4166
        %4168 = vmatmul.f32.gmra.mxu0 %v3761
        %v4169 = vpop.f32.mrf.mxu0
        %v4170 = vadd.f32 %v3961, %v4169
        %4171 = vmatmul.f32.gmra.mxu0 %v3763
        %v4172 = vpop.f32.mrf.mxu0
        %v4173 = vadd.f32 %v3964, %v4172
        %4174 = vmatmul.f32.gmra.mxu0 %v3765
        %v4175 = vpop.f32.mrf.mxu0
        %v4176 = vadd.f32 %v3967, %v4175
        %4177 = vmatmul.f32.gmra.mxu0 %v3767
        %v4178 = vpop.f32.mrf.mxu0
        %v4179 = vadd.f32 %v3970, %v4178
        %4180 = vmatmul.f32.gmra.mxu0 %v3769
        %v4181 = vpop.f32.mrf.mxu0
        %v4182 = vadd.f32 %v3973, %v4181
        %4183 = vmatmul.f32.gmra.mxu0 %v3771
        %v4184 = vpop.f32.mrf.mxu0
        %v4185 = vadd.f32 %v3976, %v4184
        %4186 = vmatmul.f32.gmra.mxu0 %v3773
        %v4187 = vpop.f32.mrf.mxu0
        %v4188 = vadd.f32 %v3979, %v4187
        %4189 = vmatmul.f32.gmra.mxu0 %v3775
        %v4190 = vpop.f32.mrf.mxu0
        %v4191 = vadd.f32 %v3982, %v4190
        %4192 = vmatmul.f32.gmra.mxu0 %v3777
        %v4193 = vpop.f32.mrf.mxu0
        %v4194 = vadd.f32 %v3985, %v4193
        %4195 = vmatmul.f32.gmra.mxu0 %v3779
        %v4196 = vpop.f32.mrf.mxu0
        %v4197 = vadd.f32 %v3988, %v4196
        %4198 = vmatmul.f32.gmra.mxu0 %v3781
        %v4199 = vpop.f32.mrf.mxu0
        %v4200 = vadd.f32 %v3991, %v4199
        %4201 = vmatmul.f32.gmra.mxu0 %v3783
        %v4202 = vpop.f32.mrf.mxu0
        %v4203 = vadd.f32 %v3994, %v4202
        %4204 = vmatmul.f32.gmra.mxu0 %v3785
        %v4205 = vpop.f32.mrf.mxu0
        %v4206 = vadd.f32 %v3997, %v4205
        %4207 = vmatmul.f32.gmra.mxu0 %v3787
        %v4208 = vpop.f32.mrf.mxu0
        %v4209 = vadd.f32 %v4000, %v4208
        %4210 = vmatmul.f32.gmra.mxu0 %v3789
        %v4211 = vpop.f32.mrf.mxu0
        %v4212 = vadd.f32 %v4003, %v4211
        %4213 = vmatmul.f32.gmra.mxu0 %v3791
        %v4214 = vpop.f32.mrf.mxu0
        %v4215 = vadd.f32 %v4006, %v4214
        %4216 = vmatmul.f32.gmra.mxu0 %v3793
        %v4217 = vpop.f32.mrf.mxu0
        %v4218 = vadd.f32 %v4009, %v4217
        %4219 = vmatmul.f32.gmra.mxu0 %v3795
        %v4220 = vpop.f32.mrf.mxu0
        %v4221 = vadd.f32 %v4012, %v4220
        %4222 = vmatmul.f32.gmra.mxu0 %v3797
        %v4223 = vpop.f32.mrf.mxu0
        %v4224 = vadd.f32 %v4015, %v4223
        %4225 = vmatmul.f32.gmra.mxu0 %v3799
        %v4226 = vpop.f32.mrf.mxu0
        %v4227 = vadd.f32 %v4018, %v4226
        %4228 = vmatmul.f32.gmra.mxu0 %v3801
        %v4229 = vpop.f32.mrf.mxu0
        %v4230 = vadd.f32 %v4021, %v4229
        %4231 = vmatmul.f32.gmra.mxu0 %v3803
        %v4232 = vpop.f32.mrf.mxu0
        %v4233 = vadd.f32 %v4024, %v4232
        %4234 = vmatmul.f32.gmra.mxu0 %v3805
        %v4235 = vpop.f32.mrf.mxu0
        %v4236 = vadd.f32 %v4027, %v4235
        %4237 = vmatmul.f32.gmra.mxu0 %v3807
        %v4238 = vpop.f32.mrf.mxu0
        %v4239 = vadd.f32 %v4030, %v4238
        %4240 = vmatmul.f32.gmra.mxu0 %v3809
        %v4241 = vpop.f32.mrf.mxu0
        %v4242 = vadd.f32 %v4033, %v4241
        %4243 = vmatmul.f32.gmra.mxu0 %v3811
        %v4244 = vpop.f32.mrf.mxu0
        %v4245 = vadd.f32 %v4036, %v4244
        %4246 = vmatmul.f32.gmra.mxu0 %v3813
        %v4247 = vpop.f32.mrf.mxu0
        %v4248 = vadd.f32 %v4039, %v4247
        %4249 = vmatmul.f32.gmra.mxu0 %v3815
        %v4250 = vpop.f32.mrf.mxu0
        %v4251 = vadd.f32 %v4042, %v4250
        %4252 = vmatmul.f32.gmra.mxu0 %v3817
        %v4253 = vpop.f32.mrf.mxu0
        %v4254 = vadd.f32 %v4045, %v4253
        %4255 = vmatmul.f32.gmra.mxu0 %v3819
        %v4256 = vpop.f32.mrf.mxu0
        %v4257 = vadd.f32 %v4048, %v4256
        %4258 = vmatmul.f32.gmra.mxu0 %v3821
        %v4259 = vpop.f32.mrf.mxu0
        %v4260 = vadd.f32 %v4051, %v4259
        %4261 = vmatmul.f32.gmra.mxu0 %v3823
        %v4262 = vpop.f32.mrf.mxu0
        %v4263 = vadd.f32 %v4054, %v4262
        %4264 = vmatmul.f32.gmra.mxu0 %v3825
        %v4265 = vpop.f32.mrf.mxu0
        %v4266 = vadd.f32 %v4057, %v4265
        %4267 = vmatmul.f32.gmra.mxu0 %v3827
        %v4268 = vpop.f32.mrf.mxu0
        %v4269 = vadd.f32 %v4060, %v4268
        %4270 = vmatmul.f32.gmra.mxu0 %v3829
        %v4271 = vpop.f32.mrf.mxu0
        %v4272 = vadd.f32 %v4063, %v4271
        %4273 = vmatmul.f32.gmra.mxu0 %v3831
        %v4274 = vpop.f32.mrf.mxu0
        %v4275 = vadd.f32 %v4066, %v4274
        %4276 = vmatmul.f32.gmra.mxu0 %v3833
        %v4277 = vpop.f32.mrf.mxu0
        %v4278 = vadd.f32 %v4069, %v4277
        %4279 = vmatmul.f32.gmra.mxu0 %v3835
        %v4280 = vpop.f32.mrf.mxu0
        %v4281 = vadd.f32 %v4072, %v4280
        %4282 = vmatmul.f32.gmra.mxu0 %v3837
        %v4283 = vpop.f32.mrf.mxu0
        %v4284 = vadd.f32 %v4075, %v4283
        %4285 = vmatmul.f32.gmra.mxu0 %v3839
        %v4286 = vpop.f32.mrf.mxu0
        %v4287 = vadd.f32 %v4078, %v4286
        %4288 = vmatmul.f32.gmra.mxu0 %v3841
        %v4289 = vpop.f32.mrf.mxu0
        %v4290 = vadd.f32 %v4081, %v4289
        %4291 = vmatmul.f32.gmra.mxu0 %v3843
        %v4292 = vpop.f32.mrf.mxu0
        %v4293 = vadd.f32 %v4084, %v4292
        %4294 = vmatmul.f32.gmra.mxu0 %v3845
        %v4295 = vpop.f32.mrf.mxu0
        %v4296 = vadd.f32 %v4087, %v4295
        %4297 = vmatmul.f32.gmra.mxu0 %v3847
        %v4298 = vpop.f32.mrf.mxu0
        %v4299 = vadd.f32 %v4090, %v4298
        %4300 = vmatmul.f32.gmra.mxu0 %v3849
        %v4301 = vpop.f32.mrf.mxu0
        %v4302 = vadd.f32 %v4093, %v4301
        %4303 = vdwg.mxu0
        %v4304 = vmax.f32 %v4113, 0.0
        %v4305 = vmax.f32 %v4116, 0.0
        %v4306 = vmax.f32 %v4119, 0.0
        %v4307 = vmax.f32 %v4122, 0.0
        %v4308 = vmax.f32 %v4125, 0.0
        %v4309 = vmax.f32 %v4128, 0.0
        %v4310 = vmax.f32 %v4131, 0.0
        %v4311 = vmax.f32 %v4134, 0.0
        %v4312 = vmax.f32 %v4137, 0.0
        %v4313 = vmax.f32 %v4140, 0.0
        %v4314 = vmax.f32 %v4143, 0.0
        %v4315 = vmax.f32 %v4146, 0.0
        %v4316 = vmax.f32 %v4149, 0.0
        %v4317 = vmax.f32 %v4152, 0.0
        %v4318 = vmax.f32 %v4155, 0.0
        %v4319 = vmax.f32 %v4158, 0.0
        %v4320 = vmax.f32 %v4161, 0.0
        %v4321 = vmax.f32 %v4164, 0.0
        %v4322 = vmax.f32 %v4167, 0.0
        %v4323 = vmax.f32 %v4170, 0.0
        %v4324 = vmax.f32 %v4173, 0.0
        %v4325 = vmax.f32 %v4176, 0.0
        %v4326 = vmax.f32 %v4179, 0.0
        %v4327 = vmax.f32 %v4182, 0.0
        %v4328 = vmax.f32 %v4185, 0.0
        %v4329 = vmax.f32 %v4188, 0.0
        %v4330 = vmax.f32 %v4191, 0.0
        %v4331 = vmax.f32 %v4194, 0.0
        %v4332 = vmax.f32 %v4197, 0.0
        %v4333 = vmax.f32 %v4200, 0.0
        %v4334 = vmax.f32 %v4203, 0.0
        %v4335 = vmax.f32 %v4206, 0.0
        %v4336 = vmax.f32 %v4209, 0.0
        %v4337 = vmax.f32 %v4212, 0.0
        %v4338 = vmax.f32 %v4215, 0.0
        %v4339 = vmax.f32 %v4218, 0.0
        %v4340 = vmax.f32 %v4221, 0.0
        %v4341 = vmax.f32 %v4224, 0.0
        %v4342 = vmax.f32 %v4227, 0.0
        %v4343 = vmax.f32 %v4230, 0.0
        %v4344 = vmax.f32 %v4233, 0.0
        %v4345 = vmax.f32 %v4236, 0.0
        %v4346 = vmax.f32 %v4239, 0.0
        %v4347 = vmax.f32 %v4242, 0.0
        %v4348 = vmax.f32 %v4245, 0.0
        %v4349 = vmax.f32 %v4248, 0.0
        %v4350 = vmax.f32 %v4251, 0.0
        %v4351 = vmax.f32 %v4254, 0.0
        %v4352 = vmax.f32 %v4257, 0.0
        %v4353 = vmax.f32 %v4260, 0.0
        %v4354 = vmax.f32 %v4263, 0.0
        %v4355 = vmax.f32 %v4266, 0.0
        %v4356 = vmax.f32 %v4269, 0.0
        %v4357 = vmax.f32 %v4272, 0.0
        %v4358 = vmax.f32 %v4275, 0.0
        %v4359 = vmax.f32 %v4278, 0.0
        %v4360 = vmax.f32 %v4281, 0.0
        %v4361 = vmax.f32 %v4284, 0.0
        %v4362 = vmax.f32 %v4287, 0.0
        %v4363 = vmax.f32 %v4290, 0.0
        %v4364 = vmax.f32 %v4293, 0.0
        %v4365 = vmax.f32 %v4296, 0.0
        %v4366 = vmax.f32 %v4299, 0.0
        %v4367 = vmax.f32 %v4302, 0.0
        %v4368 = vld [vmem:[%s7] sm:$0xf]
        %v4369 = vld [vmem:[%s8] sm:$0xf]
        %4371 = vset.pattern.permute.xlu0 0
        %4372 = vperm.xlu0 %4371, %v4369
        %v4373 = vpop.permute.xlu0 %4372
        %vm4375 = vcmask 326656
        %v4377 = vsel %vm4375, %v4368, 0
        %v4380 = vsel %vm4375, %v4304, 0
        %v4383 = vsel %vm4375, %v4305, 0
        %v4386 = vsel %vm4375, %v4306, 0
        %v4389 = vsel %vm4375, %v4307, 0
        %v4392 = vsel %vm4375, %v4308, 0
        %v4395 = vsel %vm4375, %v4309, 0
        %v4398 = vsel %vm4375, %v4310, 0
        %v4401 = vsel %vm4375, %v4311, 0
        %v4404 = vsel %vm4375, %v4312, 0
        %v4407 = vsel %vm4375, %v4313, 0
        %v4410 = vsel %vm4375, %v4314, 0
        %v4413 = vsel %vm4375, %v4315, 0
        %v4416 = vsel %vm4375, %v4316, 0
        %v4419 = vsel %vm4375, %v4317, 0
        %v4422 = vsel %vm4375, %v4318, 0
        %v4425 = vsel %vm4375, %v4319, 0
        %v4428 = vsel %vm4375, %v4320, 0
        %v4431 = vsel %vm4375, %v4321, 0
        %v4434 = vsel %vm4375, %v4322, 0
        %v4437 = vsel %vm4375, %v4323, 0
        %v4440 = vsel %vm4375, %v4324, 0
        %v4443 = vsel %vm4375, %v4325, 0
        %v4446 = vsel %vm4375, %v4326, 0
        %v4449 = vsel %vm4375, %v4327, 0
        %v4452 = vsel %vm4375, %v4328, 0
        %v4455 = vsel %vm4375, %v4329, 0
        %v4458 = vsel %vm4375, %v4330, 0
        %v4461 = vsel %vm4375, %v4331, 0
        %v4464 = vsel %vm4375, %v4332, 0
        %v4467 = vsel %vm4375, %v4333, 0
        %v4470 = vsel %vm4375, %v4334, 0
        %v4473 = vsel %vm4375, %v4335, 0
        %v4476 = vsel %vm4375, %v4336, 0
        %v4479 = vsel %vm4375, %v4337, 0
        %v4482 = vsel %vm4375, %v4338, 0
        %v4485 = vsel %vm4375, %v4339, 0
        %v4488 = vsel %vm4375, %v4340, 0
        %v4491 = vsel %vm4375, %v4341, 0
        %v4494 = vsel %vm4375, %v4342, 0
        %v4497 = vsel %vm4375, %v4343, 0
        %v4500 = vsel %vm4375, %v4344, 0
        %v4503 = vsel %vm4375, %v4345, 0
        %v4506 = vsel %vm4375, %v4346, 0
        %v4509 = vsel %vm4375, %v4347, 0
        %v4512 = vsel %vm4375, %v4348, 0
        %v4515 = vsel %vm4375, %v4349, 0
        %v4518 = vsel %vm4375, %v4350, 0
        %v4521 = vsel %vm4375, %v4351, 0
        %v4524 = vsel %vm4375, %v4352, 0
        %v4527 = vsel %vm4375, %v4353, 0
        %v4530 = vsel %vm4375, %v4354, 0
        %v4533 = vsel %vm4375, %v4355, 0
        %v4536 = vsel %vm4375, %v4356, 0
        %v4539 = vsel %vm4375, %v4357, 0
        %v4542 = vsel %vm4375, %v4358, 0
        %v4545 = vsel %vm4375, %v4359, 0
        %v4548 = vsel %vm4375, %v4360, 0
        %v4551 = vsel %vm4375, %v4361, 0
        %v4554 = vsel %vm4375, %v4362, 0
        %v4557 = vsel %vm4375, %v4363, 0
        %v4560 = vsel %vm4375, %v4364, 0
        %v4563 = vsel %vm4375, %v4365, 0
        %v4566 = vsel %vm4375, %v4366, 0
        %v4569 = vsel %vm4375, %v4367, 0
        %4571 = vmatpush.xpose.msra.mxu0 %v4425
        %4572 = vmatpush.xpose.msra.mxu0 %v4422
        %4573 = vmatpush.xpose.msra.mxu0 %v4419
        %4574 = vmatpush.xpose.msra.mxu0 %v4416
        %4575 = vmatpush.xpose.msra.mxu0 %v4413
        %4576 = vmatpush.xpose.msra.mxu0 %v4410
        %4577 = vmatpush.xpose.msra.mxu0 %v4407
        %4578 = vmatpush.xpose.msra.mxu0 %v4404
        %4579 = vmatpush.xpose.msra.mxu0 %v4401
        %4580 = vmatpush.xpose.msra.mxu0 %v4398
        %4581 = vmatpush.xpose.msra.mxu0 %v4395
        %4582 = vmatpush.xpose.msra.mxu0 %v4392
        %4583 = vmatpush.xpose.msra.mxu0 %v4389
        %4584 = vmatpush.xpose.msra.mxu0 %v4386
        %4585 = vmatpush.xpose.msra.mxu0 %v4383
        %4586 = vmatpush.xpose.msra.mxu0 %v4380
        %4587 = vmatmul.f32.gmra.mxu0 %v4377
        %v4588 = vpop.f32.mrf.mxu0
        %v4589 = vadd.f32 %v4373, %v4588
        %4590 = vdwg.mxu0
        %4591 = vmatpush.xpose.msra.mxu0 %v4473
        %4592 = vmatpush.xpose.msra.mxu0 %v4470
        %4593 = vmatpush.xpose.msra.mxu0 %v4467
        %4594 = vmatpush.xpose.msra.mxu0 %v4464
        %4595 = vmatpush.xpose.msra.mxu0 %v4461
        %4596 = vmatpush.xpose.msra.mxu0 %v4458
        %4597 = vmatpush.xpose.msra.mxu0 %v4455
        %4598 = vmatpush.xpose.msra.mxu0 %v4452
        %4599 = vmatpush.xpose.msra.mxu0 %v4449
        %4600 = vmatpush.xpose.msra.mxu0 %v4446
        %4601 = vmatpush.xpose.msra.mxu0 %v4443
        %4602 = vmatpush.xpose.msra.mxu0 %v4440
        %4603 = vmatpush.xpose.msra.mxu0 %v4437
        %4604 = vmatpush.xpose.msra.mxu0 %v4434
        %4605 = vmatpush.xpose.msra.mxu0 %v4431
        %4606 = vmatpush.xpose.msra.mxu0 %v4428
        %4607 = vmatmul.f32.gmra.mxu0 %v4377
        %v4608 = vpop.f32.mrf.mxu0
        %v4609 = vadd.f32 %v4373, %v4608
        %4610 = vdwg.mxu0
        %4611 = vmatpush.xpose.msra.mxu0 %v4521
        %4612 = vmatpush.xpose.msra.mxu0 %v4518
        %4613 = vmatpush.xpose.msra.mxu0 %v4515
        %4614 = vmatpush.xpose.msra.mxu0 %v4512
        %4615 = vmatpush.xpose.msra.mxu0 %v4509
        %4616 = vmatpush.xpose.msra.mxu0 %v4506
        %4617 = vmatpush.xpose.msra.mxu0 %v4503
        %4618 = vmatpush.xpose.msra.mxu0 %v4500
        %4619 = vmatpush.xpose.msra.mxu0 %v4497
        %4620 = vmatpush.xpose.msra.mxu0 %v4494
        %4621 = vmatpush.xpose.msra.mxu0 %v4491
        %4622 = vmatpush.xpose.msra.mxu0 %v4488
        %4623 = vmatpush.xpose.msra.mxu0 %v4485
        %4624 = vmatpush.xpose.msra.mxu0 %v4482
        %4625 = vmatpush.xpose.msra.mxu0 %v4479
        %4626 = vmatpush.xpose.msra.mxu0 %v4476
        %4627 = vmatmul.f32.gmra.mxu0 %v4377
        %v4628 = vpop.f32.mrf.mxu0
        %v4629 = vadd.f32 %v4373, %v4628
        %4630 = vdwg.mxu0
        %4631 = vmatpush.xpose.msra.mxu0 %v4569
        %4632 = vmatpush.xpose.msra.mxu0 %v4566
        %4633 = vmatpush.xpose.msra.mxu0 %v4563
        %4634 = vmatpush.xpose.msra.mxu0 %v4560
        %4635 = vmatpush.xpose.msra.mxu0 %v4557
        %4636 = vmatpush.xpose.msra.mxu0 %v4554
        %4637 = vmatpush.xpose.msra.mxu0 %v4551
        %4638 = vmatpush.xpose.msra.mxu0 %v4548
        %4639 = vmatpush.xpose.msra.mxu0 %v4545
        %4640 = vmatpush.xpose.msra.mxu0 %v4542
        %4641 = vmatpush.xpose.msra.mxu0 %v4539
        %4642 = vmatpush.xpose.msra.mxu0 %v4536
        %4643 = vmatpush.xpose.msra.mxu0 %v4533
        %4644 = vmatpush.xpose.msra.mxu0 %v4530
        %4645 = vmatpush.xpose.msra.mxu0 %v4527
        %4646 = vmatpush.xpose.msra.mxu0 %v4524
        %4647 = vmatmul.f32.gmra.mxu0 %v4377
        %v4648 = vpop.f32.mrf.mxu0
        %v4649 = vadd.f32 %v4373, %v4648
        %4650 = vdwg.mxu0
        %v4655 = vrot.slane %v4609, 4
        %v4656 = vrot.slane %v4649, 4
        %vm4657 = vcmask 1043456
        %v4658 = vsel %vm4657, %v4589, %v4655
        %v4659 = vsel %vm4657, %v4629, %v4656
        %4662 = vst [vmem:[%s326] sm:$0xff] %v4658
        %4663 = vst [vmem:[%s326 + $0x8] sm:$0xff] %v4659
        %s4664 = sand.u32 %s225, 1
        %s4665 = scalar_lea.sflag [#allocation3], %s4664
        %s4666 = sand.u32 %s225, 1
        %s4667 = smul.addr %s4666, 16
        %s4668 = scalar_lea.vmem [#allocation2], %s4667
        // Predicated region
        $region57: #{deepant_forward.1} parent=55 // pred_check
          %p4669 = pneg %p235
        $region58: #{deepant_forward.1} parent=55 // pred_check_branch
          %4671 = sbr.rel (%p4669) target = $region60
        $region59: #{deepant_forward.1} parent=55 // pred_region
          %s4672 = smul.u32 4, %s23
          %4674 = vsyncadd %s4665, 0
          %s4675 = smul.addr %s4672, 4
          %s4676 = scalar_lea.hbm %s9, %s4675
          %s4678 = sshll.u32 %s4668, 4
          %s4679 = int_to_ptr.vmem [resolvable:$true] %s4678
          %s4680 = sshll.u32 %s4676, 4
          %s4681 = int_to_ptr.hbm [resolvable:$true] %s4680
          %4683 = dma.vmem_to_hbm [thread:$0]  %s4679, 256, %s4681, %s4665
        $region60: #{deepant_forward.1} parent=55 // pred_fallthru
          _
      $region56: #{deepant_forward.1} parent=5 // pred_fallthru
        _
      %p4684 = scmp.le.s32.totalorder 2, %s18
      // Predicated region
      $region61: #{deepant_forward.1} parent=5 // pred_check
        %p4685 = pneg %p4684
      $region62: #{deepant_forward.1} parent=5 // pred_check_branch
        %4687 = sbr.rel (%p4685) target = $region64
      $region63: #{deepant_forward.1} parent=5 // pred_region
        %s4688 = ssub.s32 %s18, 2
        // Predicated region
        $region65: #{deepant_forward.1} parent=63 // pred_check
          %p4689 = pneg %p241
        $region66: #{deepant_forward.1} parent=63 // pred_check_branch
          %4691 = sbr.rel (%p4689) target = $region68
        $region67: #{deepant_forward.1} parent=63 // pred_region
          %s4692 = sand.u32 %s226, 1
          %s4693 = scalar_lea.sflag [#allocation3], %s4692
          %s4694 = sand.u32 %s226, 1
          %s4695 = smul.addr %s4694, 16
          %s4696 = scalar_lea.vmem [#allocation2], %s4695
          %4698 = dma.done %s4693, 256
        $region68: #{deepant_forward.1} parent=63 // pred_fallthru
          _
      $region64: #{deepant_forward.1} parent=5 // pred_fallthru
        _
    $region6: #{deepant_forward.1} parent=1 // loop_footer
      %s22 = sadd.s32 1, %s18
    $region7: #{deepant_forward.1} parent=1 // loop_footer_branch
      %17 = sbr.rel target = $region3
    $region8: #{deepant_forward.1} parent=1 // loop_exit
      _
    %4699 = vsyncpa [#allocation3], 1
    %s4700 = scalar_lea.sflag [#allocation3], 1
    %4701 = vsyncpa %s4700, 1

</llo_original>
